<compile_context>
chip_gen: v7x
topology: tpu7x:2x2x1
jax: 0.10.0
libtpu: 0.0.40
codegen_flags: <defaults>
</compile_context>

<pallas_src>
import math
import jax
import jax.numpy as jnp
from jax.experimental import pallas as pl
from jax.experimental.pallas import tpu as pltpu  # noqa: F401  (TPU backend assumed)

# -------- config (stands in for the `args` namespace of the PyTorch module) --------
B = 2            # batch size
W = 8            # args.window_size (sequence length)
M = 16           # modality embedding size (IMAGE/TEXT_EMBEDDING_SIZES[...])
E = 32           # args.final_encoder_args['embedding_size']
H = 4            # args.final_encoder_args['n_heads']
L = 2            # args.final_encoder_args['n_layers']
FF = 4 * E       # dim_feedforward = 4 * embedding_size
LN_EPS = 1e-5
THRESH = 0.0     # MambaModel state_selection_threshold (default)
NEG_INF = -1e30  # additive mask value blocking cross-sequence attention


# ------------------------- in-kernel math helpers -------------------------
def _layernorm(x, w, b):
    mu = jnp.mean(x, axis=-1, keepdims=True)
    var = jnp.mean(jnp.square(x - mu), axis=-1, keepdims=True)
    return (x - mu) * jax.lax.rsqrt(var + LN_EPS) * w + b


def _softmax(x):
    m = jnp.max(x, axis=-1, keepdims=True)
    e = jnp.exp(x - m)
    # approx reciprocal runs on the EUP slot (otherwise idle here) instead of the VALU.
    return e * pl.reciprocal(jnp.sum(e, axis=-1, keepdims=True), approx=True)


def _erf(x):
    # Abramowitz & Stegun 7.1.26 rational approximation, |err| < 1.5e-7 (fp32-exact).
    # Kept instead of lax.erf for guaranteed Mosaic lowering; cost is negligible at
    # a (B*W, FF) = (16, 128) activation.
    a1, a2, a3, a4, a5 = 0.254829592, -0.284496736, 1.421413741, -1.453152027, 1.061405429
    p = 0.3275911
    sgn = jnp.where(x >= 0.0, 1.0, -1.0)
    ax = jnp.abs(x)
    t = 1.0 / (1.0 + p * ax)
    poly = ((((a5 * t + a4) * t + a3) * t + a2) * t + a1) * t
    return sgn * (1.0 - poly * jnp.exp(-ax * ax))


def _gelu_exact(x):
    # PyTorch activation='gelu' (exact, erf-based)
    return 0.5 * x * (1.0 + _erf(x * (1.0 / math.sqrt(2.0))))


def _sigmoid(x):
    return 1.0 / (1.0 + jnp.exp(-x))


# ----------------------- single fused forward kernel -----------------------
def make_fused_kernel(n_layers, n_heads, batch, window, emb):
    """Builds the fused kernel; everything (weights + activations) lives in VMEM."""
    n_layer_refs = 12 * n_layers

    def kernel(*refs):
        # ---- unpack refs (inputs..., outputs) ----
        x_ref, pos_ref, mask_ref, pw_ref, pb_ref = refs[:5]
        layer_refs = refs[5:5 + n_layer_refs]
        (h0_ref, mwx_ref, mwh_ref, mbi_ref, mwho_ref, mbho_ref,
         clsw_ref, clsb_ref) = refs[5 + n_layer_refs:5 + n_layer_refs + 8]
        logit_ref, proba_ref = refs[5 + n_layer_refs + 8:]

        bw = batch * window
        dh = emb // n_heads
        scale = 1.0 / math.sqrt(dh)

        # ---- 1) modality projection + learned position embeddings ----
        # x: (B*W, M) @ (M, E) -> (B*W, E); pos (W, E) broadcast over batch in-kernel.
        x = jnp.dot(x_ref[...], pw_ref[...], preferred_element_type=jnp.float32) + pb_ref[...]
        x = (x.reshape(batch, window, emb) + pos_ref[...][None]).reshape(bw, emb)

        attn_mask = mask_ref[...]          # (B*W, B*W) block-diagonal 0 / -1e30

        # ---- 2) n_layers pre-norm TransformerEncoder layers (batch folded in rows) ----
        for l in range(n_layers):
            (ln1w, ln1b, wqkv, bqkv, wo, bo,
             ln2w, ln2b, w1, b1, w2, b2) = layer_refs[12 * l:12 * (l + 1)]

            # self-attention block (norm_first)
            h = _layernorm(x, ln1w[...], ln1b[...])
            qkv = jnp.dot(h, wqkv[...], preferred_element_type=jnp.float32) + bqkv[...]
            q = qkv[:, 0 * emb:1 * emb]
            k = qkv[:, 1 * emb:2 * emb]
            v = qkv[:, 2 * emb:3 * emb]

            ctx_parts = []
            for hh in range(n_heads):       # static, tiny head count; batch handled by mask
                sl = slice(hh * dh, (hh + 1) * dh)
                s = (jnp.dot(q[:, sl], k[:, sl].T, preferred_element_type=jnp.float32)
                     * scale + attn_mask)
                p = _softmax(s)
                ctx_parts.append(jnp.dot(p, v[:, sl], preferred_element_type=jnp.float32))
            ctx = jnp.concatenate(ctx_parts, axis=-1)                     # (B*W, E)
            x = x + jnp.dot(ctx, wo[...], preferred_element_type=jnp.float32) + bo[...]

            # feed-forward block (norm_first), exact-erf GELU
            h2 = _layernorm(x, ln2w[...], ln2b[...])
            ff = jnp.dot(h2, w1[...], preferred_element_type=jnp.float32) + b1[...]
            ff = _gelu_exact(ff)
            x = x + jnp.dot(ff, w2[...], preferred_element_type=jnp.float32) + b2[...]

        # ---- 3) Mamba recurrence over the sequence ----
        # Precompute the x-part of i2h for every timestep in one wide matmul.
        xproj = jnp.dot(x, mwx_ref[...], preferred_element_type=jnp.float32) + mbi_ref[...]
        xproj = xproj.reshape(batch, window, emb)
        hidden = h0_ref[...]                                              # (B, E)
        for t in range(window):             # static unrolled serial recurrence
            pre = xproj[:, t, :] + jnp.dot(hidden, mwh_ref[...],
                                           preferred_element_type=jnp.float32)
            hidden = jnp.tanh(pre)
            hidden = hidden * (hidden > THRESH).astype(hidden.dtype)      # state selection

        # h2o hoisted out of the loop: only the final step's output is consumed
        # (matches the PyTorch loop overwriting `output` every iteration).
        out = jnp.dot(hidden, mwho_ref[...], preferred_element_type=jnp.float32) + mbho_ref[...]

        # ---- 4) classification head + sigmoid (single full-tile f32 stores) ----
        logits = jnp.dot(out, clsw_ref[...], preferred_element_type=jnp.float32) + clsb_ref[...]
        logit_ref[...] = logits
        proba_ref[...] = _sigmoid(logits)

    return kernel


# ----------------------------- parameters -----------------------------
def init_params(key):
    keys = iter(jax.random.split(key, 64))

    def nrm(shape, scale=0.1):
        return scale * jax.random.normal(next(keys), shape, dtype=jnp.float32)

    params = {
        # modality_projection: Linear(M, E), stored pre-transposed (M, E)
        'proj_w_t': nrm((M, E)),
        'proj_b': nrm((1, E)),
        # learned position embeddings: Parameter(1, W, E) stored squeezed as (W, E)
        'pos': nrm((W, E), scale=1.0),
        # mamba i2h Linear(2E, E) split into x / h column blocks; h2o Linear(E, E)
        'm_wx_t': nrm((E, E)),
        'm_wh_t': nrm((E, E)),
        'm_bi': nrm((1, E)),
        'm_who_t': nrm((E, E)),
        'm_bho': nrm((1, E)),
        # output_classification Linear(E, 1)
        'cls_w_t': nrm((E, 1)),
        'cls_b': nrm((1, 1)),
    }
    layers = []
    for _ in range(L):
        layers.append(dict(
            ln1_w=jnp.ones((1, E), jnp.float32), ln1_b=jnp.zeros((1, E), jnp.float32),
            # fused in_proj weight, order [Q | K | V] (matches PyTorch packed in_proj)
            wqkv_t=nrm((E, 3 * E)), bqkv=nrm((1, 3 * E)),
            wo_t=nrm((E, E)), bo=nrm((1, E)),
            ln2_w=jnp.ones((1, E), jnp.float32), ln2_b=jnp.zeros((1, E), jnp.float32),
            w1_t=nrm((E, FF)), b1=nrm((1, FF)),
            w2_t=nrm((FF, E)), b2=nrm((1, E)),
        ))
    params['layers'] = layers
    return params


# ----------------------------- forward wrapper -----------------------------
def singlemodal_forward(modality, h0, params):
    Bx, Wx, Mx = modality.shape
    Ex = params['proj_w_t'].shape[1]
    n_layers = len(params['layers'])
    n_heads = H
    assert Ex % n_heads == 0
    bw = Bx * Wx

    x2d = modality.reshape(bw, Mx)

    # Block-diagonal additive mask: after folding batch into rows, attention must not
    # cross sequences.  Constant w.r.t. the data (constant-folded by XLA).
    seq_id = jnp.repeat(jnp.arange(Bx, dtype=jnp.int32), Wx)
    attn_mask = jnp.where(seq_id[:, None] == seq_id[None, :], 0.0, NEG_INF).astype(jnp.float32)

    args = [x2d, params['pos'], attn_mask, params['proj_w_t'], params['proj_b']]
    for lp in params['layers']:
        args += [lp['ln1_w'], lp['ln1_b'], lp['wqkv_t'], lp['bqkv'], lp['wo_t'], lp['bo'],
                 lp['ln2_w'], lp['ln2_b'], lp['w1_t'], lp['b1'], lp['w2_t'], lp['b2']]
    args += [h0, params['m_wx_t'], params['m_wh_t'], params['m_bi'],
             params['m_who_t'], params['m_bho'], params['cls_w_t'], params['cls_b']]

    # Advisory cost hint for XLA scheduling around the single custom call.
    dh = Ex // n_heads
    flops_proj = 2 * bw * Mx * Ex
    flops_layer = (2 * bw * Ex * (3 * Ex)              # fused QKV
                   + n_heads * 2 * (2 * bw * bw * dh)  # scores + context
                   + 2 * bw * Ex * Ex                  # output projection
                   + 2 * 2 * bw * Ex * (4 * Ex))       # FFN (two matmuls)
    flops_mamba = (2 * bw * Ex * Ex                    # precomputed x-part of i2h
                   + Wx * 2 * Bx * Ex * Ex             # serial hidden @ W_h
                   + 2 * Bx * Ex * Ex + 2 * Bx * Ex)   # h2o + classifier
    flops = int(flops_proj + n_layers * flops_layer + flops_mamba)
    transcendentals = int(n_layers * (n_heads * bw * bw + bw * 4 * Ex) + Bx * Wx * Ex + 2 * Bx)
    bytes_accessed = int(sum(a.size for a in args) * 4 + 2 * Bx * 4)

    kernel = make_fused_kernel(n_layers, n_heads, Bx, Wx, Ex)

    # No grid / BlockSpecs: every operand is mapped whole into VMEM exactly once
    # (resident weights, no double-buffering, no per-step DMA) — nothing to tile at
    # these shapes, and the single invocation keeps the work on one TensorCore,
    # which is the right call for B=2 on v7x as well.
    logits, probas = pl.pallas_call(
        kernel,
        out_shape=(jax.ShapeDtypeStruct((Bx, 1), jnp.float32),
                   jax.ShapeDtypeStruct((Bx, 1), jnp.float32)),
        cost_estimate=pl.CostEstimate(flops=flops,
                                      transcendentals=transcendentals,
                                      bytes_accessed=bytes_accessed),
    )(*args)
    return {'logits': logits, 'probas': probas}


if __name__ == "__main__":
    key = jax.random.PRNGKey(0)
    k_param, k_mod, k_hid = jax.random.split(key, 3)

    params = init_params(k_param)
    batch_modality = jax.random.normal(k_mod, (B, W, M), dtype=jnp.float32)
    # MambaModel.init_hidden -> torch.rand(batch, hidden_size)
    h0 = jax.random.uniform(k_hid, (B, E), dtype=jnp.float32)

    fwd = jax.jit(singlemodal_forward)
    out = fwd(batch_modality, h0, params)
    jax.block_until_ready(out)
    assert out['logits'].shape == (B, 1) and out['probas'].shape == (B, 1)
    assert bool(jnp.all(jnp.isfinite(out['logits'])))
    assert bool(jnp.all((out['probas'] >= 0.0) & (out['probas'] <= 1.0)))
    print("KERNEL_OK")
</pallas_src>

<mosaic_0001>
module attributes {stable_mosaic.version = 11 : i64} {
  func.func @kernel(%arg0: memref<16x16xf32, #tpu.memory_space<vmem>>, %arg1: memref<8x32xf32, #tpu.memory_space<vmem>>, %arg2: memref<16x16xf32, #tpu.memory_space<vmem>>, %arg3: memref<16x32xf32, #tpu.memory_space<vmem>>, %arg4: memref<1x32xf32, #tpu.memory_space<vmem>>, %arg5: memref<1x32xf32, #tpu.memory_space<vmem>>, %arg6: memref<1x32xf32, #tpu.memory_space<vmem>>, %arg7: memref<32x96xf32, #tpu.memory_space<vmem>>, %arg8: memref<1x96xf32, #tpu.memory_space<vmem>>, %arg9: memref<32x32xf32, #tpu.memory_space<vmem>>, %arg10: memref<1x32xf32, #tpu.memory_space<vmem>>, %arg11: memref<1x32xf32, #tpu.memory_space<vmem>>, %arg12: memref<1x32xf32, #tpu.memory_space<vmem>>, %arg13: memref<32x128xf32, #tpu.memory_space<vmem>>, %arg14: memref<1x128xf32, #tpu.memory_space<vmem>>, %arg15: memref<128x32xf32, #tpu.memory_space<vmem>>, %arg16: memref<1x32xf32, #tpu.memory_space<vmem>>, %arg17: memref<1x32xf32, #tpu.memory_space<vmem>>, %arg18: memref<1x32xf32, #tpu.memory_space<vmem>>, %arg19: memref<32x96xf32, #tpu.memory_space<vmem>>, %arg20: memref<1x96xf32, #tpu.memory_space<vmem>>, %arg21: memref<32x32xf32, #tpu.memory_space<vmem>>, %arg22: memref<1x32xf32, #tpu.memory_space<vmem>>, %arg23: memref<1x32xf32, #tpu.memory_space<vmem>>, %arg24: memref<1x32xf32, #tpu.memory_space<vmem>>, %arg25: memref<32x128xf32, #tpu.memory_space<vmem>>, %arg26: memref<1x128xf32, #tpu.memory_space<vmem>>, %arg27: memref<128x32xf32, #tpu.memory_space<vmem>>, %arg28: memref<1x32xf32, #tpu.memory_space<vmem>>, %arg29: memref<2x32xf32, #tpu.memory_space<vmem>>, %arg30: memref<32x32xf32, #tpu.memory_space<vmem>>, %arg31: memref<32x32xf32, #tpu.memory_space<vmem>>, %arg32: memref<1x32xf32, #tpu.memory_space<vmem>>, %arg33: memref<32x32xf32, #tpu.memory_space<vmem>>, %arg34: memref<1x32xf32, #tpu.memory_space<vmem>>, %arg35: memref<32x1xf32, #tpu.memory_space<vmem>>, %arg36: memref<1x1xf32, #tpu.memory_space<vmem>>, %arg37: memref<2x1xf32, #tpu.memory_space<vmem>>, %arg38: memref<2x1xf32, #tpu.memory_space<vmem>>) attributes {dimension_semantics = [], scalar_prefetch = 0 : i64, scratch_operands = 0 : i64, tpu.core_type = #tpu.core_type<tc>} {
    %c0 = arith.constant 0 : index
    %c0_0 = arith.constant 0 : index
    %0 = vector.load %arg0[%c0, %c0_0] : memref<16x16xf32, #tpu.memory_space<vmem>>, vector<16x16xf32>
    %c0_1 = arith.constant 0 : index
    %c0_2 = arith.constant 0 : index
    %1 = vector.load %arg3[%c0_1, %c0_2] : memref<16x32xf32, #tpu.memory_space<vmem>>, vector<16x32xf32>
    %cst = arith.constant dense<0.000000e+00> : vector<16x32xf32>
    %2 = tpu.matmul %0, %1, %cst {dimension_numbers = #tpu.dot_dimension_numbers<[1], [0], [0], [1], [0, 0, 1, 1], [], []>} : vector<16x16xf32>, vector<16x32xf32>, vector<16x32xf32> -> vector<16x32xf32>
    %c0_3 = arith.constant 0 : index
    %c0_4 = arith.constant 0 : index
    %3 = vector.load %arg4[%c0_3, %c0_4] : memref<1x32xf32, #tpu.memory_space<vmem>>, vector<1x32xf32>
    %4 = vector.broadcast %3 : vector<1x32xf32> to vector<16x32xf32>
    %5 = arith.addf %2, %4 : vector<16x32xf32>
    %6 = vector.shape_cast %5 : vector<16x32xf32> to vector<2x8x32xf32>
    %c0_5 = arith.constant 0 : index
    %c0_6 = arith.constant 0 : index
    %7 = vector.load %arg1[%c0_5, %c0_6] : memref<8x32xf32, #tpu.memory_space<vmem>>, vector<8x32xf32>
    %8 = vector.shape_cast %7 : vector<8x32xf32> to vector<1x8x32xf32>
    %9 = vector.broadcast %8 : vector<1x8x32xf32> to vector<2x8x32xf32>
    %10 = arith.addf %6, %9 : vector<2x8x32xf32>
    %11 = vector.shape_cast %10 : vector<2x8x32xf32> to vector<16x32xf32>
    %c0_7 = arith.constant 0 : index
    %c0_8 = arith.constant 0 : index
    %12 = vector.load %arg2[%c0_7, %c0_8] : memref<16x16xf32, #tpu.memory_space<vmem>>, vector<16x16xf32>
    %c0_9 = arith.constant 0 : index
    %c0_10 = arith.constant 0 : index
    %13 = vector.load %arg5[%c0_9, %c0_10] : memref<1x32xf32, #tpu.memory_space<vmem>>, vector<1x32xf32>
    %c0_11 = arith.constant 0 : index
    %c0_12 = arith.constant 0 : index
    %14 = vector.load %arg6[%c0_11, %c0_12] : memref<1x32xf32, #tpu.memory_space<vmem>>, vector<1x32xf32>
    %cst_13 = arith.constant dense<0.000000e+00> : vector<16xf32>
    %15 = vector.multi_reduction <add>, %11, %cst_13 [1] : vector<16x32xf32> to vector<16xf32>
    %16 = vector.shape_cast %15 : vector<16xf32> to vector<16x1xf32>
    %cst_14 = arith.constant 3.200000e+01 : f32
    %17 = vector.broadcast %cst_14 : f32 to vector<16x1xf32>
    %18 = arith.divf %16, %17 : vector<16x1xf32>
    %19 = vector.broadcast %18 : vector<16x1xf32> to vector<16x32xf32>
    %20 = arith.subf %11, %19 : vector<16x32xf32>
    %21 = arith.mulf %20, %20 : vector<16x32xf32>
    %cst_15 = arith.constant dense<0.000000e+00> : vector<16xf32>
    %22 = vector.multi_reduction <add>, %21, %cst_15 [1] : vector<16x32xf32> to vector<16xf32>
    %23 = vector.shape_cast %22 : vector<16xf32> to vector<16x1xf32>
    %cst_16 = arith.constant 3.200000e+01 : f32
    %24 = vector.broadcast %cst_16 : f32 to vector<16x1xf32>
    %25 = arith.divf %23, %24 : vector<16x1xf32>
    %26 = vector.broadcast %18 : vector<16x1xf32> to vector<16x32xf32>
    %27 = arith.subf %11, %26 : vector<16x32xf32>
    %cst_17 = arith.constant 9.99999974E-6 : f32
    %28 = vector.broadcast %cst_17 : f32 to vector<16x1xf32>
    %29 = arith.addf %25, %28 : vector<16x1xf32>
    %30 = math.rsqrt %29 : vector<16x1xf32>
    %31 = vector.broadcast %30 : vector<16x1xf32> to vector<16x32xf32>
    %32 = arith.mulf %27, %31 : vector<16x32xf32>
    %33 = vector.broadcast %13 : vector<1x32xf32> to vector<16x32xf32>
    %34 = arith.mulf %32, %33 : vector<16x32xf32>
    %35 = vector.broadcast %14 : vector<1x32xf32> to vector<16x32xf32>
    %36 = arith.addf %34, %35 : vector<16x32xf32>
    %c0_18 = arith.constant 0 : index
    %c0_19 = arith.constant 0 : index
    %37 = vector.load %arg7[%c0_18, %c0_19] : memref<32x96xf32, #tpu.memory_space<vmem>>, vector<32x96xf32>
    %cst_20 = arith.constant dense<0.000000e+00> : vector<16x96xf32>
    %38 = tpu.matmul %36, %37, %cst_20 {dimension_numbers = #tpu.dot_dimension_numbers<[1], [0], [0], [1], [0, 0, 1, 1], [], []>} : vector<16x32xf32>, vector<32x96xf32>, vector<16x96xf32> -> vector<16x96xf32>
    %c0_21 = arith.constant 0 : index
    %c0_22 = arith.constant 0 : index
    %39 = vector.load %arg8[%c0_21, %c0_22] : memref<1x96xf32, #tpu.memory_space<vmem>>, vector<1x96xf32>
    %40 = vector.broadcast %39 : vector<1x96xf32> to vector<16x96xf32>
    %41 = arith.addf %38, %40 : vector<16x96xf32>
    %42 = vector.extract_strided_slice %41 {offsets = [0, 0], sizes = [16, 32], strides = [1, 1]} : vector<16x96xf32> to vector<16x32xf32>
    %43 = vector.extract_strided_slice %41 {offsets = [0, 32], sizes = [16, 32], strides = [1, 1]} : vector<16x96xf32> to vector<16x32xf32>
    %44 = vector.extract_strided_slice %41 {offsets = [0, 64], sizes = [16, 32], strides = [1, 1]} : vector<16x96xf32> to vector<16x32xf32>
    %45 = vector.extract_strided_slice %42 {offsets = [0, 0], sizes = [16, 8], strides = [1, 1]} : vector<16x32xf32> to vector<16x8xf32>
    %46 = vector.extract_strided_slice %43 {offsets = [0, 0], sizes = [16, 8], strides = [1, 1]} : vector<16x32xf32> to vector<16x8xf32>
    %47 = tpu.transpose %46, [1, 0] : vector<16x8xf32> -> vector<8x16xf32>
    %cst_23 = arith.constant dense<0.000000e+00> : vector<16x16xf32>
    %48 = tpu.matmul %45, %47, %cst_23 {dimension_numbers = #tpu.dot_dimension_numbers<[1], [0], [0], [1], [0, 0, 1, 1], [], []>} : vector<16x8xf32>, vector<8x16xf32>, vector<16x16xf32> -> vector<16x16xf32>
    %cst_24 = arith.constant 0.353553385 : f32
    %49 = vector.broadcast %cst_24 : f32 to vector<16x16xf32>
    %50 = arith.mulf %48, %49 : vector<16x16xf32>
    %51 = arith.addf %50, %12 : vector<16x16xf32>
    %cst_25 = arith.constant dense<0xFF800000> : vector<16xf32>
    %52 = vector.multi_reduction <maximumf>, %51, %cst_25 [1] : vector<16x16xf32> to vector<16xf32>
    %53 = vector.shape_cast %52 : vector<16xf32> to vector<16x1xf32>
    %54 = vector.broadcast %53 : vector<16x1xf32> to vector<16x16xf32>
    %55 = arith.subf %51, %54 : vector<16x16xf32>
    %56 = math.exp %55 : vector<16x16xf32>
    %cst_26 = arith.constant dense<0.000000e+00> : vector<16xf32>
    %57 = vector.multi_reduction <add>, %56, %cst_26 [1] : vector<16x16xf32> to vector<16xf32>
    %58 = vector.shape_cast %57 : vector<16xf32> to vector<16x1xf32>
    %59 = tpu.reciprocal %58 {approx = true} : vector<16x1xf32> -> vector<16x1xf32>
    %60 = vector.broadcast %59 : vector<16x1xf32> to vector<16x16xf32>
    %61 = arith.mulf %56, %60 : vector<16x16xf32>
    %62 = vector.extract_strided_slice %44 {offsets = [0, 0], sizes = [16, 8], strides = [1, 1]} : vector<16x32xf32> to vector<16x8xf32>
    %cst_27 = arith.constant dense<0.000000e+00> : vector<16x8xf32>
    %63 = tpu.matmul %61, %62, %cst_27 {dimension_numbers = #tpu.dot_dimension_numbers<[1], [0], [0], [1], [0, 0, 1, 1], [], []>} : vector<16x16xf32>, vector<16x8xf32>, vector<16x8xf32> -> vector<16x8xf32>
    %64 = vector.extract_strided_slice %42 {offsets = [0, 8], sizes = [16, 8], strides = [1, 1]} : vector<16x32xf32> to vector<16x8xf32>
    %65 = vector.extract_strided_slice %43 {offsets = [0, 8], sizes = [16, 8], strides = [1, 1]} : vector<16x32xf32> to vector<16x8xf32>
    %66 = tpu.transpose %65, [1, 0] : vector<16x8xf32> -> vector<8x16xf32>
    %cst_28 = arith.constant dense<0.000000e+00> : vector<16x16xf32>
    %67 = tpu.matmul %64, %66, %cst_28 {dimension_numbers = #tpu.dot_dimension_numbers<[1], [0], [0], [1], [0, 0, 1, 1], [], []>} : vector<16x8xf32>, vector<8x16xf32>, vector<16x16xf32> -> vector<16x16xf32>
    %cst_29 = arith.constant 0.353553385 : f32
    %68 = vector.broadcast %cst_29 : f32 to vector<16x16xf32>
    %69 = arith.mulf %67, %68 : vector<16x16xf32>
    %70 = arith.addf %69, %12 : vector<16x16xf32>
    %cst_30 = arith.constant dense<0xFF800000> : vector<16xf32>
    %71 = vector.multi_reduction <maximumf>, %70, %cst_30 [1] : vector<16x16xf32> to vector<16xf32>
    %72 = vector.shape_cast %71 : vector<16xf32> to vector<16x1xf32>
    %73 = vector.broadcast %72 : vector<16x1xf32> to vector<16x16xf32>
    %74 = arith.subf %70, %73 : vector<16x16xf32>
    %75 = math.exp %74 : vector<16x16xf32>
    %cst_31 = arith.constant dense<0.000000e+00> : vector<16xf32>
    %76 = vector.multi_reduction <add>, %75, %cst_31 [1] : vector<16x16xf32> to vector<16xf32>
    %77 = vector.shape_cast %76 : vector<16xf32> to vector<16x1xf32>
    %78 = tpu.reciprocal %77 {approx = true} : vector<16x1xf32> -> vector<16x1xf32>
    %79 = vector.broadcast %78 : vector<16x1xf32> to vector<16x16xf32>
    %80 = arith.mulf %75, %79 : vector<16x16xf32>
    %81 = vector.extract_strided_slice %44 {offsets = [0, 8], sizes = [16, 8], strides = [1, 1]} : vector<16x32xf32> to vector<16x8xf32>
    %cst_32 = arith.constant dense<0.000000e+00> : vector<16x8xf32>
    %82 = tpu.matmul %80, %81, %cst_32 {dimension_numbers = #tpu.dot_dimension_numbers<[1], [0], [0], [1], [0, 0, 1, 1], [], []>} : vector<16x16xf32>, vector<16x8xf32>, vector<16x8xf32> -> vector<16x8xf32>
    %83 = vector.extract_strided_slice %42 {offsets = [0, 16], sizes = [16, 8], strides = [1, 1]} : vector<16x32xf32> to vector<16x8xf32>
    %84 = vector.extract_strided_slice %43 {offsets = [0, 16], sizes = [16, 8], strides = [1, 1]} : vector<16x32xf32> to vector<16x8xf32>
    %85 = tpu.transpose %84, [1, 0] : vector<16x8xf32> -> vector<8x16xf32>
    %cst_33 = arith.constant dense<0.000000e+00> : vector<16x16xf32>
    %86 = tpu.matmul %83, %85, %cst_33 {dimension_numbers = #tpu.dot_dimension_numbers<[1], [0], [0], [1], [0, 0, 1, 1], [], []>} : vector<16x8xf32>, vector<8x16xf32>, vector<16x16xf32> -> vector<16x16xf32>
    %cst_34 = arith.constant 0.353553385 : f32
    %87 = vector.broadcast %cst_34 : f32 to vector<16x16xf32>
    %88 = arith.mulf %86, %87 : vector<16x16xf32>
    %89 = arith.addf %88, %12 : vector<16x16xf32>
    %cst_35 = arith.constant dense<0xFF800000> : vector<16xf32>
    %90 = vector.multi_reduction <maximumf>, %89, %cst_35 [1] : vector<16x16xf32> to vector<16xf32>
    %91 = vector.shape_cast %90 : vector<16xf32> to vector<16x1xf32>
    %92 = vector.broadcast %91 : vector<16x1xf32> to vector<16x16xf32>
    %93 = arith.subf %89, %92 : vector<16x16xf32>
    %94 = math.exp %93 : vector<16x16xf32>
    %cst_36 = arith.constant dense<0.000000e+00> : vector<16xf32>
    %95 = vector.multi_reduction <add>, %94, %cst_36 [1] : vector<16x16xf32> to vector<16xf32>
    %96 = vector.shape_cast %95 : vector<16xf32> to vector<16x1xf32>
    %97 = tpu.reciprocal %96 {approx = true} : vector<16x1xf32> -> vector<16x1xf32>
    %98 = vector.broadcast %97 : vector<16x1xf32> to vector<16x16xf32>
    %99 = arith.mulf %94, %98 : vector<16x16xf32>
    %100 = vector.extract_strided_slice %44 {offsets = [0, 16], sizes = [16, 8], strides = [1, 1]} : vector<16x32xf32> to vector<16x8xf32>
    %cst_37 = arith.constant dense<0.000000e+00> : vector<16x8xf32>
    %101 = tpu.matmul %99, %100, %cst_37 {dimension_numbers = #tpu.dot_dimension_numbers<[1], [0], [0], [1], [0, 0, 1, 1], [], []>} : vector<16x16xf32>, vector<16x8xf32>, vector<16x8xf32> -> vector<16x8xf32>
    %102 = vector.extract_strided_slice %42 {offsets = [0, 24], sizes = [16, 8], strides = [1, 1]} : vector<16x32xf32> to vector<16x8xf32>
    %103 = vector.extract_strided_slice %43 {offsets = [0, 24], sizes = [16, 8], strides = [1, 1]} : vector<16x32xf32> to vector<16x8xf32>
    %104 = tpu.transpose %103, [1, 0] : vector<16x8xf32> -> vector<8x16xf32>
    %cst_38 = arith.constant dense<0.000000e+00> : vector<16x16xf32>
    %105 = tpu.matmul %102, %104, %cst_38 {dimension_numbers = #tpu.dot_dimension_numbers<[1], [0], [0], [1], [0, 0, 1, 1], [], []>} : vector<16x8xf32>, vector<8x16xf32>, vector<16x16xf32> -> vector<16x16xf32>
    %cst_39 = arith.constant 0.353553385 : f32
    %106 = vector.broadcast %cst_39 : f32 to vector<16x16xf32>
    %107 = arith.mulf %105, %106 : vector<16x16xf32>
    %108 = arith.addf %107, %12 : vector<16x16xf32>
    %cst_40 = arith.constant dense<0xFF800000> : vector<16xf32>
    %109 = vector.multi_reduction <maximumf>, %108, %cst_40 [1] : vector<16x16xf32> to vector<16xf32>
    %110 = vector.shape_cast %109 : vector<16xf32> to vector<16x1xf32>
    %111 = vector.broadcast %110 : vector<16x1xf32> to vector<16x16xf32>
    %112 = arith.subf %108, %111 : vector<16x16xf32>
    %113 = math.exp %112 : vector<16x16xf32>
    %cst_41 = arith.constant dense<0.000000e+00> : vector<16xf32>
    %114 = vector.multi_reduction <add>, %113, %cst_41 [1] : vector<16x16xf32> to vector<16xf32>
    %115 = vector.shape_cast %114 : vector<16xf32> to vector<16x1xf32>
    %116 = tpu.reciprocal %115 {approx = true} : vector<16x1xf32> -> vector<16x1xf32>
    %117 = vector.broadcast %116 : vector<16x1xf32> to vector<16x16xf32>
    %118 = arith.mulf %113, %117 : vector<16x16xf32>
    %119 = vector.extract_strided_slice %44 {offsets = [0, 24], sizes = [16, 8], strides = [1, 1]} : vector<16x32xf32> to vector<16x8xf32>
    %cst_42 = arith.constant dense<0.000000e+00> : vector<16x8xf32>
    %120 = tpu.matmul %118, %119, %cst_42 {dimension_numbers = #tpu.dot_dimension_numbers<[1], [0], [0], [1], [0, 0, 1, 1], [], []>} : vector<16x16xf32>, vector<16x8xf32>, vector<16x8xf32> -> vector<16x8xf32>
    %121 = tpu.concatenate %63, %82, %101, %120 in 1 : vector<16x8xf32>, vector<16x8xf32>, vector<16x8xf32>, vector<16x8xf32> -> vector<16x32xf32>
    %c0_43 = arith.constant 0 : index
    %c0_44 = arith.constant 0 : index
    %122 = vector.load %arg9[%c0_43, %c0_44] : memref<32x32xf32, #tpu.memory_space<vmem>>, vector<32x32xf32>
    %cst_45 = arith.constant dense<0.000000e+00> : vector<16x32xf32>
    %123 = tpu.matmul %121, %122, %cst_45 {dimension_numbers = #tpu.dot_dimension_numbers<[1], [0], [0], [1], [0, 0, 1, 1], [], []>} : vector<16x32xf32>, vector<32x32xf32>, vector<16x32xf32> -> vector<16x32xf32>
    %124 = arith.addf %11, %123 : vector<16x32xf32>
    %c0_46 = arith.constant 0 : index
    %c0_47 = arith.constant 0 : index
    %125 = vector.load %arg10[%c0_46, %c0_47] : memref<1x32xf32, #tpu.memory_space<vmem>>, vector<1x32xf32>
    %126 = vector.broadcast %125 : vector<1x32xf32> to vector<16x32xf32>
    %127 = arith.addf %124, %126 : vector<16x32xf32>
    %c0_48 = arith.constant 0 : index
    %c0_49 = arith.constant 0 : index
    %128 = vector.load %arg11[%c0_48, %c0_49] : memref<1x32xf32, #tpu.memory_space<vmem>>, vector<1x32xf32>
    %c0_50 = arith.constant 0 : index
    %c0_51 = arith.constant 0 : index
    %129 = vector.load %arg12[%c0_50, %c0_51] : memref<1x32xf32, #tpu.memory_space<vmem>>, vector<1x32xf32>
    %cst_52 = arith.constant dense<0.000000e+00> : vector<16xf32>
    %130 = vector.multi_reduction <add>, %127, %cst_52 [1] : vector<16x32xf32> to vector<16xf32>
    %131 = vector.shape_cast %130 : vector<16xf32> to vector<16x1xf32>
    %cst_53 = arith.constant 3.200000e+01 : f32
    %132 = vector.broadcast %cst_53 : f32 to vector<16x1xf32>
    %133 = arith.divf %131, %132 : vector<16x1xf32>
    %134 = vector.broadcast %133 : vector<16x1xf32> to vector<16x32xf32>
    %135 = arith.subf %127, %134 : vector<16x32xf32>
    %136 = arith.mulf %135, %135 : vector<16x32xf32>
    %cst_54 = arith.constant dense<0.000000e+00> : vector<16xf32>
    %137 = vector.multi_reduction <add>, %136, %cst_54 [1] : vector<16x32xf32> to vector<16xf32>
    %138 = vector.shape_cast %137 : vector<16xf32> to vector<16x1xf32>
    %cst_55 = arith.constant 3.200000e+01 : f32
    %139 = vector.broadcast %cst_55 : f32 to vector<16x1xf32>
    %140 = arith.divf %138, %139 : vector<16x1xf32>
    %141 = vector.broadcast %133 : vector<16x1xf32> to vector<16x32xf32>
    %142 = arith.subf %127, %141 : vector<16x32xf32>
    %cst_56 = arith.constant 9.99999974E-6 : f32
    %143 = vector.broadcast %cst_56 : f32 to vector<16x1xf32>
    %144 = arith.addf %140, %143 : vector<16x1xf32>
    %145 = math.rsqrt %144 : vector<16x1xf32>
    %146 = vector.broadcast %145 : vector<16x1xf32> to vector<16x32xf32>
    %147 = arith.mulf %142, %146 : vector<16x32xf32>
    %148 = vector.broadcast %128 : vector<1x32xf32> to vector<16x32xf32>
    %149 = arith.mulf %147, %148 : vector<16x32xf32>
    %150 = vector.broadcast %129 : vector<1x32xf32> to vector<16x32xf32>
    %151 = arith.addf %149, %150 : vector<16x32xf32>
    %c0_57 = arith.constant 0 : index
    %c0_58 = arith.constant 0 : index
    %152 = vector.load %arg13[%c0_57, %c0_58] : memref<32x128xf32, #tpu.memory_space<vmem>>, vector<32x128xf32>
    %cst_59 = arith.constant dense<0.000000e+00> : vector<16x128xf32>
    %153 = tpu.matmul %151, %152, %cst_59 {dimension_numbers = #tpu.dot_dimension_numbers<[1], [0], [0], [1], [0, 0, 1, 1], [], []>} : vector<16x32xf32>, vector<32x128xf32>, vector<16x128xf32> -> vector<16x128xf32>
    %c0_60 = arith.constant 0 : index
    %c0_61 = arith.constant 0 : index
    %154 = vector.load %arg14[%c0_60, %c0_61] : memref<1x128xf32, #tpu.memory_space<vmem>>, vector<1x128xf32>
    %155 = vector.broadcast %154 : vector<1x128xf32> to vector<16x128xf32>
    %156 = arith.addf %153, %155 : vector<16x128xf32>
    %cst_62 = arith.constant 5.000000e-01 : f32
    %157 = vector.broadcast %cst_62 : f32 to vector<16x128xf32>
    %158 = arith.mulf %157, %156 : vector<16x128xf32>
    %cst_63 = arith.constant 0.707106769 : f32
    %159 = vector.broadcast %cst_63 : f32 to vector<16x128xf32>
    %160 = arith.mulf %156, %159 : vector<16x128xf32>
    %cst_64 = arith.constant 0.000000e+00 : f32
    %161 = vector.broadcast %cst_64 : f32 to vector<16x128xf32>
    %162 = arith.cmpf oge, %160, %161 : vector<16x128xf32>
    %cst_65 = arith.constant 1.000000e+00 : f32
    %cst_66 = arith.constant -1.000000e+00 : f32
    %163 = vector.broadcast %cst_65 : f32 to vector<16x128xf32>
    %164 = vector.broadcast %cst_66 : f32 to vector<16x128xf32>
    %165 = arith.select %162, %163, %164 : vector<16x128xi1>, vector<16x128xf32>
    %166 = math.absf %160 : vector<16x128xf32>
    %cst_67 = arith.constant 0.327591091 : f32
    %167 = vector.broadcast %cst_67 : f32 to vector<16x128xf32>
    %168 = arith.mulf %167, %166 : vector<16x128xf32>
    %cst_68 = arith.constant 1.000000e+00 : f32
    %169 = vector.broadcast %cst_68 : f32 to vector<16x128xf32>
    %170 = arith.addf %169, %168 : vector<16x128xf32>
    %cst_69 = arith.constant 1.000000e+00 : f32
    %171 = vector.broadcast %cst_69 : f32 to vector<16x128xf32>
    %172 = arith.divf %171, %170 : vector<16x128xf32>
    %cst_70 = arith.constant 1.06140542 : f32
    %173 = vector.broadcast %cst_70 : f32 to vector<16x128xf32>
    %174 = arith.mulf %173, %172 : vector<16x128xf32>
    %cst_71 = arith.constant -1.45315206 : f32
    %175 = vector.broadcast %cst_71 : f32 to vector<16x128xf32>
    %176 = arith.addf %174, %175 : vector<16x128xf32>
    %177 = arith.mulf %176, %172 : vector<16x128xf32>
    %cst_72 = arith.constant 1.42141378 : f32
    %178 = vector.broadcast %cst_72 : f32 to vector<16x128xf32>
    %179 = arith.addf %177, %178 : vector<16x128xf32>
    %180 = arith.mulf %179, %172 : vector<16x128xf32>
    %cst_73 = arith.constant -0.284496725 : f32
    %181 = vector.broadcast %cst_73 : f32 to vector<16x128xf32>
    %182 = arith.addf %180, %181 : vector<16x128xf32>
    %183 = arith.mulf %182, %172 : vector<16x128xf32>
    %cst_74 = arith.constant 0.254829586 : f32
    %184 = vector.broadcast %cst_74 : f32 to vector<16x128xf32>
    %185 = arith.addf %183, %184 : vector<16x128xf32>
    %186 = arith.mulf %185, %172 : vector<16x128xf32>
    %cst_75 = arith.constant 0.000000e+00 : f32
    %187 = vector.broadcast %cst_75 : f32 to vector<16x128xf32>
    %188 = arith.subf %187, %166 : vector<16x128xf32>
    %189 = arith.mulf %188, %166 : vector<16x128xf32>
    %190 = math.exp %189 : vector<16x128xf32>
    %191 = arith.mulf %186, %190 : vector<16x128xf32>
    %cst_76 = arith.constant 1.000000e+00 : f32
    %192 = vector.broadcast %cst_76 : f32 to vector<16x128xf32>
    %193 = arith.subf %192, %191 : vector<16x128xf32>
    %194 = arith.mulf %165, %193 : vector<16x128xf32>
    %cst_77 = arith.constant 1.000000e+00 : f32
    %195 = vector.broadcast %cst_77 : f32 to vector<16x128xf32>
    %196 = arith.addf %195, %194 : vector<16x128xf32>
    %197 = arith.mulf %158, %196 : vector<16x128xf32>
    %c0_78 = arith.constant 0 : index
    %c0_79 = arith.constant 0 : index
    %198 = vector.load %arg15[%c0_78, %c0_79] : memref<128x32xf32, #tpu.memory_space<vmem>>, vector<128x32xf32>
    %cst_80 = arith.constant dense<0.000000e+00> : vector<16x32xf32>
    %199 = tpu.matmul %197, %198, %cst_80 {dimension_numbers = #tpu.dot_dimension_numbers<[1], [0], [0], [1], [0, 0, 1, 1], [], []>} : vector<16x128xf32>, vector<128x32xf32>, vector<16x32xf32> -> vector<16x32xf32>
    %200 = arith.addf %127, %199 : vector<16x32xf32>
    %c0_81 = arith.constant 0 : index
    %c0_82 = arith.constant 0 : index
    %201 = vector.load %arg16[%c0_81, %c0_82] : memref<1x32xf32, #tpu.memory_space<vmem>>, vector<1x32xf32>
    %202 = vector.broadcast %201 : vector<1x32xf32> to vector<16x32xf32>
    %203 = arith.addf %200, %202 : vector<16x32xf32>
    %c0_83 = arith.constant 0 : index
    %c0_84 = arith.constant 0 : index
    %204 = vector.load %arg17[%c0_83, %c0_84] : memref<1x32xf32, #tpu.memory_space<vmem>>, vector<1x32xf32>
    %c0_85 = arith.constant 0 : index
    %c0_86 = arith.constant 0 : index
    %205 = vector.load %arg18[%c0_85, %c0_86] : memref<1x32xf32, #tpu.memory_space<vmem>>, vector<1x32xf32>
    %cst_87 = arith.constant dense<0.000000e+00> : vector<16xf32>
    %206 = vector.multi_reduction <add>, %203, %cst_87 [1] : vector<16x32xf32> to vector<16xf32>
    %207 = vector.shape_cast %206 : vector<16xf32> to vector<16x1xf32>
    %cst_88 = arith.constant 3.200000e+01 : f32
    %208 = vector.broadcast %cst_88 : f32 to vector<16x1xf32>
    %209 = arith.divf %207, %208 : vector<16x1xf32>
    %210 = vector.broadcast %209 : vector<16x1xf32> to vector<16x32xf32>
    %211 = arith.subf %203, %210 : vector<16x32xf32>
    %212 = arith.mulf %211, %211 : vector<16x32xf32>
    %cst_89 = arith.constant dense<0.000000e+00> : vector<16xf32>
    %213 = vector.multi_reduction <add>, %212, %cst_89 [1] : vector<16x32xf32> to vector<16xf32>
    %214 = vector.shape_cast %213 : vector<16xf32> to vector<16x1xf32>
    %cst_90 = arith.constant 3.200000e+01 : f32
    %215 = vector.broadcast %cst_90 : f32 to vector<16x1xf32>
    %216 = arith.divf %214, %215 : vector<16x1xf32>
    %217 = vector.broadcast %209 : vector<16x1xf32> to vector<16x32xf32>
    %218 = arith.subf %203, %217 : vector<16x32xf32>
    %cst_91 = arith.constant 9.99999974E-6 : f32
    %219 = vector.broadcast %cst_91 : f32 to vector<16x1xf32>
    %220 = arith.addf %216, %219 : vector<16x1xf32>
    %221 = math.rsqrt %220 : vector<16x1xf32>
    %222 = vector.broadcast %221 : vector<16x1xf32> to vector<16x32xf32>
    %223 = arith.mulf %218, %222 : vector<16x32xf32>
    %224 = vector.broadcast %204 : vector<1x32xf32> to vector<16x32xf32>
    %225 = arith.mulf %223, %224 : vector<16x32xf32>
    %226 = vector.broadcast %205 : vector<1x32xf32> to vector<16x32xf32>
    %227 = arith.addf %225, %226 : vector<16x32xf32>
    %c0_92 = arith.constant 0 : index
    %c0_93 = arith.constant 0 : index
    %228 = vector.load %arg19[%c0_92, %c0_93] : memref<32x96xf32, #tpu.memory_space<vmem>>, vector<32x96xf32>
    %cst_94 = arith.constant dense<0.000000e+00> : vector<16x96xf32>
    %229 = tpu.matmul %227, %228, %cst_94 {dimension_numbers = #tpu.dot_dimension_numbers<[1], [0], [0], [1], [0, 0, 1, 1], [], []>} : vector<16x32xf32>, vector<32x96xf32>, vector<16x96xf32> -> vector<16x96xf32>
    %c0_95 = arith.constant 0 : index
    %c0_96 = arith.constant 0 : index
    %230 = vector.load %arg20[%c0_95, %c0_96] : memref<1x96xf32, #tpu.memory_space<vmem>>, vector<1x96xf32>
    %231 = vector.broadcast %230 : vector<1x96xf32> to vector<16x96xf32>
    %232 = arith.addf %229, %231 : vector<16x96xf32>
    %233 = vector.extract_strided_slice %232 {offsets = [0, 0], sizes = [16, 32], strides = [1, 1]} : vector<16x96xf32> to vector<16x32xf32>
    %234 = vector.extract_strided_slice %232 {offsets = [0, 32], sizes = [16, 32], strides = [1, 1]} : vector<16x96xf32> to vector<16x32xf32>
    %235 = vector.extract_strided_slice %232 {offsets = [0, 64], sizes = [16, 32], strides = [1, 1]} : vector<16x96xf32> to vector<16x32xf32>
    %236 = vector.extract_strided_slice %233 {offsets = [0, 0], sizes = [16, 8], strides = [1, 1]} : vector<16x32xf32> to vector<16x8xf32>
    %237 = vector.extract_strided_slice %234 {offsets = [0, 0], sizes = [16, 8], strides = [1, 1]} : vector<16x32xf32> to vector<16x8xf32>
    %238 = tpu.transpose %237, [1, 0] : vector<16x8xf32> -> vector<8x16xf32>
    %cst_97 = arith.constant dense<0.000000e+00> : vector<16x16xf32>
    %239 = tpu.matmul %236, %238, %cst_97 {dimension_numbers = #tpu.dot_dimension_numbers<[1], [0], [0], [1], [0, 0, 1, 1], [], []>} : vector<16x8xf32>, vector<8x16xf32>, vector<16x16xf32> -> vector<16x16xf32>
    %cst_98 = arith.constant 0.353553385 : f32
    %240 = vector.broadcast %cst_98 : f32 to vector<16x16xf32>
    %241 = arith.mulf %239, %240 : vector<16x16xf32>
    %242 = arith.addf %241, %12 : vector<16x16xf32>
    %cst_99 = arith.constant dense<0xFF800000> : vector<16xf32>
    %243 = vector.multi_reduction <maximumf>, %242, %cst_99 [1] : vector<16x16xf32> to vector<16xf32>
    %244 = vector.shape_cast %243 : vector<16xf32> to vector<16x1xf32>
    %245 = vector.broadcast %244 : vector<16x1xf32> to vector<16x16xf32>
    %246 = arith.subf %242, %245 : vector<16x16xf32>
    %247 = math.exp %246 : vector<16x16xf32>
    %cst_100 = arith.constant dense<0.000000e+00> : vector<16xf32>
    %248 = vector.multi_reduction <add>, %247, %cst_100 [1] : vector<16x16xf32> to vector<16xf32>
    %249 = vector.shape_cast %248 : vector<16xf32> to vector<16x1xf32>
    %250 = tpu.reciprocal %249 {approx = true} : vector<16x1xf32> -> vector<16x1xf32>
    %251 = vector.broadcast %250 : vector<16x1xf32> to vector<16x16xf32>
    %252 = arith.mulf %247, %251 : vector<16x16xf32>
    %253 = vector.extract_strided_slice %235 {offsets = [0, 0], sizes = [16, 8], strides = [1, 1]} : vector<16x32xf32> to vector<16x8xf32>
    %cst_101 = arith.constant dense<0.000000e+00> : vector<16x8xf32>
    %254 = tpu.matmul %252, %253, %cst_101 {dimension_numbers = #tpu.dot_dimension_numbers<[1], [0], [0], [1], [0, 0, 1, 1], [], []>} : vector<16x16xf32>, vector<16x8xf32>, vector<16x8xf32> -> vector<16x8xf32>
    %255 = vector.extract_strided_slice %233 {offsets = [0, 8], sizes = [16, 8], strides = [1, 1]} : vector<16x32xf32> to vector<16x8xf32>
    %256 = vector.extract_strided_slice %234 {offsets = [0, 8], sizes = [16, 8], strides = [1, 1]} : vector<16x32xf32> to vector<16x8xf32>
    %257 = tpu.transpose %256, [1, 0] : vector<16x8xf32> -> vector<8x16xf32>
    %cst_102 = arith.constant dense<0.000000e+00> : vector<16x16xf32>
    %258 = tpu.matmul %255, %257, %cst_102 {dimension_numbers = #tpu.dot_dimension_numbers<[1], [0], [0], [1], [0, 0, 1, 1], [], []>} : vector<16x8xf32>, vector<8x16xf32>, vector<16x16xf32> -> vector<16x16xf32>
    %cst_103 = arith.constant 0.353553385 : f32
    %259 = vector.broadcast %cst_103 : f32 to vector<16x16xf32>
    %260 = arith.mulf %258, %259 : vector<16x16xf32>
    %261 = arith.addf %260, %12 : vector<16x16xf32>
    %cst_104 = arith.constant dense<0xFF800000> : vector<16xf32>
    %262 = vector.multi_reduction <maximumf>, %261, %cst_104 [1] : vector<16x16xf32> to vector<16xf32>
    %263 = vector.shape_cast %262 : vector<16xf32> to vector<16x1xf32>
    %264 = vector.broadcast %263 : vector<16x1xf32> to vector<16x16xf32>
    %265 = arith.subf %261, %264 : vector<16x16xf32>
    %266 = math.exp %265 : vector<16x16xf32>
    %cst_105 = arith.constant dense<0.000000e+00> : vector<16xf32>
    %267 = vector.multi_reduction <add>, %266, %cst_105 [1] : vector<16x16xf32> to vector<16xf32>
    %268 = vector.shape_cast %267 : vector<16xf32> to vector<16x1xf32>
    %269 = tpu.reciprocal %268 {approx = true} : vector<16x1xf32> -> vector<16x1xf32>
    %270 = vector.broadcast %269 : vector<16x1xf32> to vector<16x16xf32>
    %271 = arith.mulf %266, %270 : vector<16x16xf32>
    %272 = vector.extract_strided_slice %235 {offsets = [0, 8], sizes = [16, 8], strides = [1, 1]} : vector<16x32xf32> to vector<16x8xf32>
    %cst_106 = arith.constant dense<0.000000e+00> : vector<16x8xf32>
    %273 = tpu.matmul %271, %272, %cst_106 {dimension_numbers = #tpu.dot_dimension_numbers<[1], [0], [0], [1], [0, 0, 1, 1], [], []>} : vector<16x16xf32>, vector<16x8xf32>, vector<16x8xf32> -> vector<16x8xf32>
    %274 = vector.extract_strided_slice %233 {offsets = [0, 16], sizes = [16, 8], strides = [1, 1]} : vector<16x32xf32> to vector<16x8xf32>
    %275 = vector.extract_strided_slice %234 {offsets = [0, 16], sizes = [16, 8], strides = [1, 1]} : vector<16x32xf32> to vector<16x8xf32>
    %276 = tpu.transpose %275, [1, 0] : vector<16x8xf32> -> vector<8x16xf32>
    %cst_107 = arith.constant dense<0.000000e+00> : vector<16x16xf32>
    %277 = tpu.matmul %274, %276, %cst_107 {dimension_numbers = #tpu.dot_dimension_numbers<[1], [0], [0], [1], [0, 0, 1, 1], [], []>} : vector<16x8xf32>, vector<8x16xf32>, vector<16x16xf32> -> vector<16x16xf32>
    %cst_108 = arith.constant 0.353553385 : f32
    %278 = vector.broadcast %cst_108 : f32 to vector<16x16xf32>
    %279 = arith.mulf %277, %278 : vector<16x16xf32>
    %280 = arith.addf %279, %12 : vector<16x16xf32>
    %cst_109 = arith.constant dense<0xFF800000> : vector<16xf32>
    %281 = vector.multi_reduction <maximumf>, %280, %cst_109 [1] : vector<16x16xf32> to vector<16xf32>
    %282 = vector.shape_cast %281 : vector<16xf32> to vector<16x1xf32>
    %283 = vector.broadcast %282 : vector<16x1xf32> to vector<16x16xf32>
    %284 = arith.subf %280, %283 : vector<16x16xf32>
    %285 = math.exp %284 : vector<16x16xf32>
    %cst_110 = arith.constant dense<0.000000e+00> : vector<16xf32>
    %286 = vector.multi_reduction <add>, %285, %cst_110 [1] : vector<16x16xf32> to vector<16xf32>
    %287 = vector.shape_cast %286 : vector<16xf32> to vector<16x1xf32>
    %288 = tpu.reciprocal %287 {approx = true} : vector<16x1xf32> -> vector<16x1xf32>
    %289 = vector.broadcast %288 : vector<16x1xf32> to vector<16x16xf32>
    %290 = arith.mulf %285, %289 : vector<16x16xf32>
    %291 = vector.extract_strided_slice %235 {offsets = [0, 16], sizes = [16, 8], strides = [1, 1]} : vector<16x32xf32> to vector<16x8xf32>
    %cst_111 = arith.constant dense<0.000000e+00> : vector<16x8xf32>
    %292 = tpu.matmul %290, %291, %cst_111 {dimension_numbers = #tpu.dot_dimension_numbers<[1], [0], [0], [1], [0, 0, 1, 1], [], []>} : vector<16x16xf32>, vector<16x8xf32>, vector<16x8xf32> -> vector<16x8xf32>
    %293 = vector.extract_strided_slice %233 {offsets = [0, 24], sizes = [16, 8], strides = [1, 1]} : vector<16x32xf32> to vector<16x8xf32>
    %294 = vector.extract_strided_slice %234 {offsets = [0, 24], sizes = [16, 8], strides = [1, 1]} : vector<16x32xf32> to vector<16x8xf32>
    %295 = tpu.transpose %294, [1, 0] : vector<16x8xf32> -> vector<8x16xf32>
    %cst_112 = arith.constant dense<0.000000e+00> : vector<16x16xf32>
    %296 = tpu.matmul %293, %295, %cst_112 {dimension_numbers = #tpu.dot_dimension_numbers<[1], [0], [0], [1], [0, 0, 1, 1], [], []>} : vector<16x8xf32>, vector<8x16xf32>, vector<16x16xf32> -> vector<16x16xf32>
    %cst_113 = arith.constant 0.353553385 : f32
    %297 = vector.broadcast %cst_113 : f32 to vector<16x16xf32>
    %298 = arith.mulf %296, %297 : vector<16x16xf32>
    %299 = arith.addf %298, %12 : vector<16x16xf32>
    %cst_114 = arith.constant dense<0xFF800000> : vector<16xf32>
    %300 = vector.multi_reduction <maximumf>, %299, %cst_114 [1] : vector<16x16xf32> to vector<16xf32>
    %301 = vector.shape_cast %300 : vector<16xf32> to vector<16x1xf32>
    %302 = vector.broadcast %301 : vector<16x1xf32> to vector<16x16xf32>
    %303 = arith.subf %299, %302 : vector<16x16xf32>
    %304 = math.exp %303 : vector<16x16xf32>
    %cst_115 = arith.constant dense<0.000000e+00> : vector<16xf32>
    %305 = vector.multi_reduction <add>, %304, %cst_115 [1] : vector<16x16xf32> to vector<16xf32>
    %306 = vector.shape_cast %305 : vector<16xf32> to vector<16x1xf32>
    %307 = tpu.reciprocal %306 {approx = true} : vector<16x1xf32> -> vector<16x1xf32>
    %308 = vector.broadcast %307 : vector<16x1xf32> to vector<16x16xf32>
    %309 = arith.mulf %304, %308 : vector<16x16xf32>
    %310 = vector.extract_strided_slice %235 {offsets = [0, 24], sizes = [16, 8], strides = [1, 1]} : vector<16x32xf32> to vector<16x8xf32>
    %cst_116 = arith.constant dense<0.000000e+00> : vector<16x8xf32>
    %311 = tpu.matmul %309, %310, %cst_116 {dimension_numbers = #tpu.dot_dimension_numbers<[1], [0], [0], [1], [0, 0, 1, 1], [], []>} : vector<16x16xf32>, vector<16x8xf32>, vector<16x8xf32> -> vector<16x8xf32>
    %312 = tpu.concatenate %254, %273, %292, %311 in 1 : vector<16x8xf32>, vector<16x8xf32>, vector<16x8xf32>, vector<16x8xf32> -> vector<16x32xf32>
    %c0_117 = arith.constant 0 : index
    %c0_118 = arith.constant 0 : index
    %313 = vector.load %arg21[%c0_117, %c0_118] : memref<32x32xf32, #tpu.memory_space<vmem>>, vector<32x32xf32>
    %cst_119 = arith.constant dense<0.000000e+00> : vector<16x32xf32>
    %314 = tpu.matmul %312, %313, %cst_119 {dimension_numbers = #tpu.dot_dimension_numbers<[1], [0], [0], [1], [0, 0, 1, 1], [], []>} : vector<16x32xf32>, vector<32x32xf32>, vector<16x32xf32> -> vector<16x32xf32>
    %315 = arith.addf %203, %314 : vector<16x32xf32>
    %c0_120 = arith.constant 0 : index
    %c0_121 = arith.constant 0 : index
    %316 = vector.load %arg22[%c0_120, %c0_121] : memref<1x32xf32, #tpu.memory_space<vmem>>, vector<1x32xf32>
    %317 = vector.broadcast %316 : vector<1x32xf32> to vector<16x32xf32>
    %318 = arith.addf %315, %317 : vector<16x32xf32>
    %c0_122 = arith.constant 0 : index
    %c0_123 = arith.constant 0 : index
    %319 = vector.load %arg23[%c0_122, %c0_123] : memref<1x32xf32, #tpu.memory_space<vmem>>, vector<1x32xf32>
    %c0_124 = arith.constant 0 : index
    %c0_125 = arith.constant 0 : index
    %320 = vector.load %arg24[%c0_124, %c0_125] : memref<1x32xf32, #tpu.memory_space<vmem>>, vector<1x32xf32>
    %cst_126 = arith.constant dense<0.000000e+00> : vector<16xf32>
    %321 = vector.multi_reduction <add>, %318, %cst_126 [1] : vector<16x32xf32> to vector<16xf32>
    %322 = vector.shape_cast %321 : vector<16xf32> to vector<16x1xf32>
    %cst_127 = arith.constant 3.200000e+01 : f32
    %323 = vector.broadcast %cst_127 : f32 to vector<16x1xf32>
    %324 = arith.divf %322, %323 : vector<16x1xf32>
    %325 = vector.broadcast %324 : vector<16x1xf32> to vector<16x32xf32>
    %326 = arith.subf %318, %325 : vector<16x32xf32>
    %327 = arith.mulf %326, %326 : vector<16x32xf32>
    %cst_128 = arith.constant dense<0.000000e+00> : vector<16xf32>
    %328 = vector.multi_reduction <add>, %327, %cst_128 [1] : vector<16x32xf32> to vector<16xf32>
    %329 = vector.shape_cast %328 : vector<16xf32> to vector<16x1xf32>
    %cst_129 = arith.constant 3.200000e+01 : f32
    %330 = vector.broadcast %cst_129 : f32 to vector<16x1xf32>
    %331 = arith.divf %329, %330 : vector<16x1xf32>
    %332 = vector.broadcast %324 : vector<16x1xf32> to vector<16x32xf32>
    %333 = arith.subf %318, %332 : vector<16x32xf32>
    %cst_130 = arith.constant 9.99999974E-6 : f32
    %334 = vector.broadcast %cst_130 : f32 to vector<16x1xf32>
    %335 = arith.addf %331, %334 : vector<16x1xf32>
    %336 = math.rsqrt %335 : vector<16x1xf32>
    %337 = vector.broadcast %336 : vector<16x1xf32> to vector<16x32xf32>
    %338 = arith.mulf %333, %337 : vector<16x32xf32>
    %339 = vector.broadcast %319 : vector<1x32xf32> to vector<16x32xf32>
    %340 = arith.mulf %338, %339 : vector<16x32xf32>
    %341 = vector.broadcast %320 : vector<1x32xf32> to vector<16x32xf32>
    %342 = arith.addf %340, %341 : vector<16x32xf32>
    %c0_131 = arith.constant 0 : index
    %c0_132 = arith.constant 0 : index
    %343 = vector.load %arg25[%c0_131, %c0_132] : memref<32x128xf32, #tpu.memory_space<vmem>>, vector<32x128xf32>
    %cst_133 = arith.constant dense<0.000000e+00> : vector<16x128xf32>
    %344 = tpu.matmul %342, %343, %cst_133 {dimension_numbers = #tpu.dot_dimension_numbers<[1], [0], [0], [1], [0, 0, 1, 1], [], []>} : vector<16x32xf32>, vector<32x128xf32>, vector<16x128xf32> -> vector<16x128xf32>
    %c0_134 = arith.constant 0 : index
    %c0_135 = arith.constant 0 : index
    %345 = vector.load %arg26[%c0_134, %c0_135] : memref<1x128xf32, #tpu.memory_space<vmem>>, vector<1x128xf32>
    %346 = vector.broadcast %345 : vector<1x128xf32> to vector<16x128xf32>
    %347 = arith.addf %344, %346 : vector<16x128xf32>
    %cst_136 = arith.constant 5.000000e-01 : f32
    %348 = vector.broadcast %cst_136 : f32 to vector<16x128xf32>
    %349 = arith.mulf %348, %347 : vector<16x128xf32>
    %cst_137 = arith.constant 0.707106769 : f32
    %350 = vector.broadcast %cst_137 : f32 to vector<16x128xf32>
    %351 = arith.mulf %347, %350 : vector<16x128xf32>
    %cst_138 = arith.constant 0.000000e+00 : f32
    %352 = vector.broadcast %cst_138 : f32 to vector<16x128xf32>
    %353 = arith.cmpf oge, %351, %352 : vector<16x128xf32>
    %cst_139 = arith.constant 1.000000e+00 : f32
    %cst_140 = arith.constant -1.000000e+00 : f32
    %354 = vector.broadcast %cst_139 : f32 to vector<16x128xf32>
    %355 = vector.broadcast %cst_140 : f32 to vector<16x128xf32>
    %356 = arith.select %353, %354, %355 : vector<16x128xi1>, vector<16x128xf32>
    %357 = math.absf %351 : vector<16x128xf32>
    %cst_141 = arith.constant 0.327591091 : f32
    %358 = vector.broadcast %cst_141 : f32 to vector<16x128xf32>
    %359 = arith.mulf %358, %357 : vector<16x128xf32>
    %cst_142 = arith.constant 1.000000e+00 : f32
    %360 = vector.broadcast %cst_142 : f32 to vector<16x128xf32>
    %361 = arith.addf %360, %359 : vector<16x128xf32>
    %cst_143 = arith.constant 1.000000e+00 : f32
    %362 = vector.broadcast %cst_143 : f32 to vector<16x128xf32>
    %363 = arith.divf %362, %361 : vector<16x128xf32>
    %cst_144 = arith.constant 1.06140542 : f32
    %364 = vector.broadcast %cst_144 : f32 to vector<16x128xf32>
    %365 = arith.mulf %364, %363 : vector<16x128xf32>
    %cst_145 = arith.constant -1.45315206 : f32
    %366 = vector.broadcast %cst_145 : f32 to vector<16x128xf32>
    %367 = arith.addf %365, %366 : vector<16x128xf32>
    %368 = arith.mulf %367, %363 : vector<16x128xf32>
    %cst_146 = arith.constant 1.42141378 : f32
    %369 = vector.broadcast %cst_146 : f32 to vector<16x128xf32>
    %370 = arith.addf %368, %369 : vector<16x128xf32>
    %371 = arith.mulf %370, %363 : vector<16x128xf32>
    %cst_147 = arith.constant -0.284496725 : f32
    %372 = vector.broadcast %cst_147 : f32 to vector<16x128xf32>
    %373 = arith.addf %371, %372 : vector<16x128xf32>
    %374 = arith.mulf %373, %363 : vector<16x128xf32>
    %cst_148 = arith.constant 0.254829586 : f32
    %375 = vector.broadcast %cst_148 : f32 to vector<16x128xf32>
    %376 = arith.addf %374, %375 : vector<16x128xf32>
    %377 = arith.mulf %376, %363 : vector<16x128xf32>
    %cst_149 = arith.constant 0.000000e+00 : f32
    %378 = vector.broadcast %cst_149 : f32 to vector<16x128xf32>
    %379 = arith.subf %378, %357 : vector<16x128xf32>
    %380 = arith.mulf %379, %357 : vector<16x128xf32>
    %381 = math.exp %380 : vector<16x128xf32>
    %382 = arith.mulf %377, %381 : vector<16x128xf32>
    %cst_150 = arith.constant 1.000000e+00 : f32
    %383 = vector.broadcast %cst_150 : f32 to vector<16x128xf32>
    %384 = arith.subf %383, %382 : vector<16x128xf32>
    %385 = arith.mulf %356, %384 : vector<16x128xf32>
    %cst_151 = arith.constant 1.000000e+00 : f32
    %386 = vector.broadcast %cst_151 : f32 to vector<16x128xf32>
    %387 = arith.addf %386, %385 : vector<16x128xf32>
    %388 = arith.mulf %349, %387 : vector<16x128xf32>
    %c0_152 = arith.constant 0 : index
    %c0_153 = arith.constant 0 : index
    %389 = vector.load %arg27[%c0_152, %c0_153] : memref<128x32xf32, #tpu.memory_space<vmem>>, vector<128x32xf32>
    %cst_154 = arith.constant dense<0.000000e+00> : vector<16x32xf32>
    %390 = tpu.matmul %388, %389, %cst_154 {dimension_numbers = #tpu.dot_dimension_numbers<[1], [0], [0], [1], [0, 0, 1, 1], [], []>} : vector<16x128xf32>, vector<128x32xf32>, vector<16x32xf32> -> vector<16x32xf32>
    %391 = arith.addf %318, %390 : vector<16x32xf32>
    %c0_155 = arith.constant 0 : index
    %c0_156 = arith.constant 0 : index
    %392 = vector.load %arg28[%c0_155, %c0_156] : memref<1x32xf32, #tpu.memory_space<vmem>>, vector<1x32xf32>
    %393 = vector.broadcast %392 : vector<1x32xf32> to vector<16x32xf32>
    %394 = arith.addf %391, %393 : vector<16x32xf32>
    %c0_157 = arith.constant 0 : index
    %c0_158 = arith.constant 0 : index
    %395 = vector.load %arg30[%c0_157, %c0_158] : memref<32x32xf32, #tpu.memory_space<vmem>>, vector<32x32xf32>
    %cst_159 = arith.constant dense<0.000000e+00> : vector<16x32xf32>
    %396 = tpu.matmul %394, %395, %cst_159 {dimension_numbers = #tpu.dot_dimension_numbers<[1], [0], [0], [1], [0, 0, 1, 1], [], []>} : vector<16x32xf32>, vector<32x32xf32>, vector<16x32xf32> -> vector<16x32xf32>
    %c0_160 = arith.constant 0 : index
    %c0_161 = arith.constant 0 : index
    %397 = vector.load %arg32[%c0_160, %c0_161] : memref<1x32xf32, #tpu.memory_space<vmem>>, vector<1x32xf32>
    %398 = vector.broadcast %397 : vector<1x32xf32> to vector<16x32xf32>
    %399 = arith.addf %396, %398 : vector<16x32xf32>
    %400 = vector.shape_cast %399 : vector<16x32xf32> to vector<2x8x32xf32>
    %c0_162 = arith.constant 0 : index
    %c0_163 = arith.constant 0 : index
    %401 = vector.load %arg29[%c0_162, %c0_163] : memref<2x32xf32, #tpu.memory_space<vmem>>, vector<2x32xf32>
    %402 = vector.extract_strided_slice %400 {offsets = [0, 0, 0], sizes = [2, 1, 32], strides = [1, 1, 1]} : vector<2x8x32xf32> to vector<2x1x32xf32>
    %403 = vector.shape_cast %402 : vector<2x1x32xf32> to vector<2x32xf32>
    %c0_164 = arith.constant 0 : index
    %c0_165 = arith.constant 0 : index
    %404 = vector.load %arg31[%c0_164, %c0_165] : memref<32x32xf32, #tpu.memory_space<vmem>>, vector<32x32xf32>
    %cst_166 = arith.constant dense<0.000000e+00> : vector<2x32xf32>
    %405 = tpu.matmul %401, %404, %cst_166 {dimension_numbers = #tpu.dot_dimension_numbers<[1], [0], [0], [1], [0, 0, 1, 1], [], []>} : vector<2x32xf32>, vector<32x32xf32>, vector<2x32xf32> -> vector<2x32xf32>
    %406 = arith.addf %403, %405 : vector<2x32xf32>
    %407 = math.tanh %406 : vector<2x32xf32>
    %cst_167 = arith.constant 0.000000e+00 : f32
    %408 = vector.broadcast %cst_167 : f32 to vector<2x32xf32>
    %409 = arith.cmpf ogt, %407, %408 : vector<2x32xf32>
    %410 = arith.extui %409 : vector<2x32xi1> to vector<2x32xi32>
    %411 = arith.sitofp %410 : vector<2x32xi32> to vector<2x32xf32>
    %412 = arith.mulf %407, %411 : vector<2x32xf32>
    %413 = vector.extract_strided_slice %400 {offsets = [0, 1, 0], sizes = [2, 1, 32], strides = [1, 1, 1]} : vector<2x8x32xf32> to vector<2x1x32xf32>
    %414 = vector.shape_cast %413 : vector<2x1x32xf32> to vector<2x32xf32>
    %c0_168 = arith.constant 0 : index
    %c0_169 = arith.constant 0 : index
    %415 = vector.load %arg31[%c0_168, %c0_169] : memref<32x32xf32, #tpu.memory_space<vmem>>, vector<32x32xf32>
    %cst_170 = arith.constant dense<0.000000e+00> : vector<2x32xf32>
    %416 = tpu.matmul %412, %415, %cst_170 {dimension_numbers = #tpu.dot_dimension_numbers<[1], [0], [0], [1], [0, 0, 1, 1], [], []>} : vector<2x32xf32>, vector<32x32xf32>, vector<2x32xf32> -> vector<2x32xf32>
    %417 = arith.addf %414, %416 : vector<2x32xf32>
    %418 = math.tanh %417 : vector<2x32xf32>
    %cst_171 = arith.constant 0.000000e+00 : f32
    %419 = vector.broadcast %cst_171 : f32 to vector<2x32xf32>
    %420 = arith.cmpf ogt, %418, %419 : vector<2x32xf32>
    %421 = arith.extui %420 : vector<2x32xi1> to vector<2x32xi32>
    %422 = arith.sitofp %421 : vector<2x32xi32> to vector<2x32xf32>
    %423 = arith.mulf %418, %422 : vector<2x32xf32>
    %424 = vector.extract_strided_slice %400 {offsets = [0, 2, 0], sizes = [2, 1, 32], strides = [1, 1, 1]} : vector<2x8x32xf32> to vector<2x1x32xf32>
    %425 = vector.shape_cast %424 : vector<2x1x32xf32> to vector<2x32xf32>
    %c0_172 = arith.constant 0 : index
    %c0_173 = arith.constant 0 : index
    %426 = vector.load %arg31[%c0_172, %c0_173] : memref<32x32xf32, #tpu.memory_space<vmem>>, vector<32x32xf32>
    %cst_174 = arith.constant dense<0.000000e+00> : vector<2x32xf32>
    %427 = tpu.matmul %423, %426, %cst_174 {dimension_numbers = #tpu.dot_dimension_numbers<[1], [0], [0], [1], [0, 0, 1, 1], [], []>} : vector<2x32xf32>, vector<32x32xf32>, vector<2x32xf32> -> vector<2x32xf32>
    %428 = arith.addf %425, %427 : vector<2x32xf32>
    %429 = math.tanh %428 : vector<2x32xf32>
    %cst_175 = arith.constant 0.000000e+00 : f32
    %430 = vector.broadcast %cst_175 : f32 to vector<2x32xf32>
    %431 = arith.cmpf ogt, %429, %430 : vector<2x32xf32>
    %432 = arith.extui %431 : vector<2x32xi1> to vector<2x32xi32>
    %433 = arith.sitofp %432 : vector<2x32xi32> to vector<2x32xf32>
    %434 = arith.mulf %429, %433 : vector<2x32xf32>
    %435 = vector.extract_strided_slice %400 {offsets = [0, 3, 0], sizes = [2, 1, 32], strides = [1, 1, 1]} : vector<2x8x32xf32> to vector<2x1x32xf32>
    %436 = vector.shape_cast %435 : vector<2x1x32xf32> to vector<2x32xf32>
    %c0_176 = arith.constant 0 : index
    %c0_177 = arith.constant 0 : index
    %437 = vector.load %arg31[%c0_176, %c0_177] : memref<32x32xf32, #tpu.memory_space<vmem>>, vector<32x32xf32>
    %cst_178 = arith.constant dense<0.000000e+00> : vector<2x32xf32>
    %438 = tpu.matmul %434, %437, %cst_178 {dimension_numbers = #tpu.dot_dimension_numbers<[1], [0], [0], [1], [0, 0, 1, 1], [], []>} : vector<2x32xf32>, vector<32x32xf32>, vector<2x32xf32> -> vector<2x32xf32>
    %439 = arith.addf %436, %438 : vector<2x32xf32>
    %440 = math.tanh %439 : vector<2x32xf32>
    %cst_179 = arith.constant 0.000000e+00 : f32
    %441 = vector.broadcast %cst_179 : f32 to vector<2x32xf32>
    %442 = arith.cmpf ogt, %440, %441 : vector<2x32xf32>
    %443 = arith.extui %442 : vector<2x32xi1> to vector<2x32xi32>
    %444 = arith.sitofp %443 : vector<2x32xi32> to vector<2x32xf32>
    %445 = arith.mulf %440, %444 : vector<2x32xf32>
    %446 = vector.extract_strided_slice %400 {offsets = [0, 4, 0], sizes = [2, 1, 32], strides = [1, 1, 1]} : vector<2x8x32xf32> to vector<2x1x32xf32>
    %447 = vector.shape_cast %446 : vector<2x1x32xf32> to vector<2x32xf32>
    %c0_180 = arith.constant 0 : index
    %c0_181 = arith.constant 0 : index
    %448 = vector.load %arg31[%c0_180, %c0_181] : memref<32x32xf32, #tpu.memory_space<vmem>>, vector<32x32xf32>
    %cst_182 = arith.constant dense<0.000000e+00> : vector<2x32xf32>
    %449 = tpu.matmul %445, %448, %cst_182 {dimension_numbers = #tpu.dot_dimension_numbers<[1], [0], [0], [1], [0, 0, 1, 1], [], []>} : vector<2x32xf32>, vector<32x32xf32>, vector<2x32xf32> -> vector<2x32xf32>
    %450 = arith.addf %447, %449 : vector<2x32xf32>
    %451 = math.tanh %450 : vector<2x32xf32>
    %cst_183 = arith.constant 0.000000e+00 : f32
    %452 = vector.broadcast %cst_183 : f32 to vector<2x32xf32>
    %453 = arith.cmpf ogt, %451, %452 : vector<2x32xf32>
    %454 = arith.extui %453 : vector<2x32xi1> to vector<2x32xi32>
    %455 = arith.sitofp %454 : vector<2x32xi32> to vector<2x32xf32>
    %456 = arith.mulf %451, %455 : vector<2x32xf32>
    %457 = vector.extract_strided_slice %400 {offsets = [0, 5, 0], sizes = [2, 1, 32], strides = [1, 1, 1]} : vector<2x8x32xf32> to vector<2x1x32xf32>
    %458 = vector.shape_cast %457 : vector<2x1x32xf32> to vector<2x32xf32>
    %c0_184 = arith.constant 0 : index
    %c0_185 = arith.constant 0 : index
    %459 = vector.load %arg31[%c0_184, %c0_185] : memref<32x32xf32, #tpu.memory_space<vmem>>, vector<32x32xf32>
    %cst_186 = arith.constant dense<0.000000e+00> : vector<2x32xf32>
    %460 = tpu.matmul %456, %459, %cst_186 {dimension_numbers = #tpu.dot_dimension_numbers<[1], [0], [0], [1], [0, 0, 1, 1], [], []>} : vector<2x32xf32>, vector<32x32xf32>, vector<2x32xf32> -> vector<2x32xf32>
    %461 = arith.addf %458, %460 : vector<2x32xf32>
    %462 = math.tanh %461 : vector<2x32xf32>
    %cst_187 = arith.constant 0.000000e+00 : f32
    %463 = vector.broadcast %cst_187 : f32 to vector<2x32xf32>
    %464 = arith.cmpf ogt, %462, %463 : vector<2x32xf32>
    %465 = arith.extui %464 : vector<2x32xi1> to vector<2x32xi32>
    %466 = arith.sitofp %465 : vector<2x32xi32> to vector<2x32xf32>
    %467 = arith.mulf %462, %466 : vector<2x32xf32>
    %468 = vector.extract_strided_slice %400 {offsets = [0, 6, 0], sizes = [2, 1, 32], strides = [1, 1, 1]} : vector<2x8x32xf32> to vector<2x1x32xf32>
    %469 = vector.shape_cast %468 : vector<2x1x32xf32> to vector<2x32xf32>
    %c0_188 = arith.constant 0 : index
    %c0_189 = arith.constant 0 : index
    %470 = vector.load %arg31[%c0_188, %c0_189] : memref<32x32xf32, #tpu.memory_space<vmem>>, vector<32x32xf32>
    %cst_190 = arith.constant dense<0.000000e+00> : vector<2x32xf32>
    %471 = tpu.matmul %467, %470, %cst_190 {dimension_numbers = #tpu.dot_dimension_numbers<[1], [0], [0], [1], [0, 0, 1, 1], [], []>} : vector<2x32xf32>, vector<32x32xf32>, vector<2x32xf32> -> vector<2x32xf32>
    %472 = arith.addf %469, %471 : vector<2x32xf32>
    %473 = math.tanh %472 : vector<2x32xf32>
    %cst_191 = arith.constant 0.000000e+00 : f32
    %474 = vector.broadcast %cst_191 : f32 to vector<2x32xf32>
    %475 = arith.cmpf ogt, %473, %474 : vector<2x32xf32>
    %476 = arith.extui %475 : vector<2x32xi1> to vector<2x32xi32>
    %477 = arith.sitofp %476 : vector<2x32xi32> to vector<2x32xf32>
    %478 = arith.mulf %473, %477 : vector<2x32xf32>
    %479 = vector.extract_strided_slice %400 {offsets = [0, 7, 0], sizes = [2, 1, 32], strides = [1, 1, 1]} : vector<2x8x32xf32> to vector<2x1x32xf32>
    %480 = vector.shape_cast %479 : vector<2x1x32xf32> to vector<2x32xf32>
    %c0_192 = arith.constant 0 : index
    %c0_193 = arith.constant 0 : index
    %481 = vector.load %arg31[%c0_192, %c0_193] : memref<32x32xf32, #tpu.memory_space<vmem>>, vector<32x32xf32>
    %cst_194 = arith.constant dense<0.000000e+00> : vector<2x32xf32>
    %482 = tpu.matmul %478, %481, %cst_194 {dimension_numbers = #tpu.dot_dimension_numbers<[1], [0], [0], [1], [0, 0, 1, 1], [], []>} : vector<2x32xf32>, vector<32x32xf32>, vector<2x32xf32> -> vector<2x32xf32>
    %483 = arith.addf %480, %482 : vector<2x32xf32>
    %484 = math.tanh %483 : vector<2x32xf32>
    %cst_195 = arith.constant 0.000000e+00 : f32
    %485 = vector.broadcast %cst_195 : f32 to vector<2x32xf32>
    %486 = arith.cmpf ogt, %484, %485 : vector<2x32xf32>
    %487 = arith.extui %486 : vector<2x32xi1> to vector<2x32xi32>
    %488 = arith.sitofp %487 : vector<2x32xi32> to vector<2x32xf32>
    %489 = arith.mulf %484, %488 : vector<2x32xf32>
    %c0_196 = arith.constant 0 : index
    %c0_197 = arith.constant 0 : index
    %490 = vector.load %arg33[%c0_196, %c0_197] : memref<32x32xf32, #tpu.memory_space<vmem>>, vector<32x32xf32>
    %cst_198 = arith.constant dense<0.000000e+00> : vector<2x32xf32>
    %491 = tpu.matmul %489, %490, %cst_198 {dimension_numbers = #tpu.dot_dimension_numbers<[1], [0], [0], [1], [0, 0, 1, 1], [], []>} : vector<2x32xf32>, vector<32x32xf32>, vector<2x32xf32> -> vector<2x32xf32>
    %c0_199 = arith.constant 0 : index
    %c0_200 = arith.constant 0 : index
    %492 = vector.load %arg34[%c0_199, %c0_200] : memref<1x32xf32, #tpu.memory_space<vmem>>, vector<1x32xf32>
    %493 = vector.broadcast %492 : vector<1x32xf32> to vector<2x32xf32>
    %494 = arith.addf %491, %493 : vector<2x32xf32>
    %c0_201 = arith.constant 0 : index
    %c0_202 = arith.constant 0 : index
    %495 = vector.load %arg35[%c0_201, %c0_202] : memref<32x1xf32, #tpu.memory_space<vmem>>, vector<32x1xf32>
    %cst_203 = arith.constant dense<0.000000e+00> : vector<2x1xf32>
    %496 = tpu.matmul %494, %495, %cst_203 {dimension_numbers = #tpu.dot_dimension_numbers<[1], [0], [0], [1], [0, 0, 1, 1], [], []>} : vector<2x32xf32>, vector<32x1xf32>, vector<2x1xf32> -> vector<2x1xf32>
    %c0_204 = arith.constant 0 : index
    %c0_205 = arith.constant 0 : index
    %497 = vector.load %arg36[%c0_204, %c0_205] : memref<1x1xf32, #tpu.memory_space<vmem>>, vector<1x1xf32>
    %498 = vector.broadcast %497 : vector<1x1xf32> to vector<2x1xf32>
    %499 = arith.addf %496, %498 : vector<2x1xf32>
    %c0_206 = arith.constant 0 : index
    %c0_207 = arith.constant 0 : index
    %500 = vector.load %arg37[%c0_206, %c0_207] : memref<2x1xf32, #tpu.memory_space<vmem>>, vector<2x1xf32>
    tpu.vector_store %arg37[%c0_206, %c0_207], %499 {strides = array<i32>} : memref<2x1xf32, #tpu.memory_space<vmem>>, vector<2x1xf32>,
    %cst_208 = arith.constant 0.000000e+00 : f32
    %501 = vector.broadcast %cst_208 : f32 to vector<2x1xf32>
    %502 = arith.subf %501, %499 : vector<2x1xf32>
    %503 = math.exp %502 : vector<2x1xf32>
    %cst_209 = arith.constant 1.000000e+00 : f32
    %504 = vector.broadcast %cst_209 : f32 to vector<2x1xf32>
    %505 = arith.addf %504, %503 : vector<2x1xf32>
    %cst_210 = arith.constant 1.000000e+00 : f32
    %506 = vector.broadcast %cst_210 : f32 to vector<2x1xf32>
    %507 = arith.divf %506, %505 : vector<2x1xf32>
    %c0_211 = arith.constant 0 : index
    %c0_212 = arith.constant 0 : index
    %508 = vector.load %arg38[%c0_211, %c0_212] : memref<2x1xf32, #tpu.memory_space<vmem>>, vector<2x1xf32>
    tpu.vector_store %arg38[%c0_211, %c0_212], %507 {strides = array<i32>} : memref<2x1xf32, #tpu.memory_space<vmem>>, vector<2x1xf32>,
    return
  }
}

</mosaic_0001>

<llo_original>
// kernel: eq.8
$region0: #{eq.8}
  %s0 = inlined_call_operand.vmem [shape: s32[2,8], index: 0, kind: input, shape index: {}]
  %s1 = inlined_call_operand.vmem [shape: s32[16], index: 1, kind: output, shape index: {}]
  $region1: #{eq.8} parent=0
    #allocation0 [shape = 'u8[4096]{0}', space=vmem, size = 0x1000, scoped, tag = 'scoped mem for output reshape']
    #allocation1 [shape = 'u8[4096]{0}', space=vmem, size = 0x1000, scoped, tag = 'scoped mem for input reshape']
    %s3 = sshllo.u32 0, 2
    %v4 = vld [vmem:[%s0] sm:%s3]
    %5 = vst [vmem:[#allocation1] sm:%s3] %v4
    %v6 = vld [vmem:[#allocation1] sm:$0x1]
    %vm7 = vcmask 64512
    %8 = vst.msk [vmem:[#allocation0] sm:$0x1] %vm7, %v6
    %s9 = scalar_lea.vmem [#allocation1], 1
    %v10 = vld [vmem:[%s9] sm:$0x1]
    %11 = vrot.lane.b32.xlu0 %v10, 8
    %v12 = vpop.permute.xlu0 %11
    %vm13 = vcmask 130112
    %14 = vst.msk [vmem:[#allocation0] sm:$0x1] %vm13, %v12
    %s16 = sshllo.u32 0, 1
    %v18 = vld [vmem:[#allocation0] sm:%s16]
    %s19 = sshllo.u32 0, 1
    %20 = vst [vmem:[%s1] sm:%s19] %v18

// kernel: singlemodal_forward.1
$region0: #{singlemodal_forward.1}
  #allocation0 [shape = 'u32[]', space=smem, size = 0x4, offset = 0x4, fixed_abs, tag = 'smem constant byte address 0x4 - core index']
  #allocation1 [shape = 'u32[144,128]{1,0:T(1,128)}', space=vmem, size = 0x12000, scoped, tag = 'internal scratch']
  #allocation2 [shape = 'f32[1,1]{1,0:T(1,128)S(1)}', space=vmem, size = 0x200, scoped, tag = 'scoped memory for singlemodal_forward.1']
  %s0 = inlined_call_operand.smem [shape: u32[39], index: -1, kind: input, shape index: {}]
  %s1 = sld [smem:[%s0]]
  %s2 = scalar_lea.smem %s0, 1
  %s3 = sld [smem:[%s2]]
  %s4 = scalar_lea.smem %s0, 2
  %s5 = sld [smem:[%s4]]
  %s6 = scalar_lea.smem %s0, 3
  %s7 = sld [smem:[%s6]]
  %s8 = scalar_lea.smem %s0, 4
  %s9 = sld [smem:[%s8]]
  %s10 = scalar_lea.smem %s0, 5
  %s11 = sld [smem:[%s10]]
  %s12 = scalar_lea.smem %s0, 6
  %s13 = sld [smem:[%s12]]
  %s14 = scalar_lea.smem %s0, 7
  %s15 = sld [smem:[%s14]]
  %s16 = scalar_lea.smem %s0, 8
  %s17 = sld [smem:[%s16]]
  %s18 = scalar_lea.smem %s0, 9
  %s19 = sld [smem:[%s18]]
  %s20 = scalar_lea.smem %s0, 10
  %s21 = sld [smem:[%s20]]
  %s22 = scalar_lea.smem %s0, 11
  %s23 = sld [smem:[%s22]]
  %s24 = scalar_lea.smem %s0, 12
  %s25 = sld [smem:[%s24]]
  %s26 = scalar_lea.smem %s0, 13
  %s27 = sld [smem:[%s26]]
  %s28 = scalar_lea.smem %s0, 14
  %s29 = sld [smem:[%s28]]
  %s30 = scalar_lea.smem %s0, 15
  %s31 = sld [smem:[%s30]]
  %s32 = scalar_lea.smem %s0, 16
  %s33 = sld [smem:[%s32]]
  %s34 = scalar_lea.smem %s0, 17
  %s35 = sld [smem:[%s34]]
  %s36 = scalar_lea.smem %s0, 18
  %s37 = sld [smem:[%s36]]
  %s38 = scalar_lea.smem %s0, 19
  %s39 = sld [smem:[%s38]]
  %s40 = scalar_lea.smem %s0, 20
  %s41 = sld [smem:[%s40]]
  %s42 = scalar_lea.smem %s0, 21
  %s43 = sld [smem:[%s42]]
  %s44 = scalar_lea.smem %s0, 22
  %s45 = sld [smem:[%s44]]
  %s46 = scalar_lea.smem %s0, 23
  %s47 = sld [smem:[%s46]]
  %s48 = scalar_lea.smem %s0, 24
  %s49 = sld [smem:[%s48]]
  %s50 = scalar_lea.smem %s0, 25
  %s51 = sld [smem:[%s50]]
  %s52 = scalar_lea.smem %s0, 26
  %s53 = sld [smem:[%s52]]
  %s54 = scalar_lea.smem %s0, 27
  %s55 = sld [smem:[%s54]]
  %s56 = scalar_lea.smem %s0, 28
  %s57 = sld [smem:[%s56]]
  %s58 = scalar_lea.smem %s0, 29
  %s59 = sld [smem:[%s58]]
  %s60 = scalar_lea.smem %s0, 30
  %s61 = sld [smem:[%s60]]
  %s62 = scalar_lea.smem %s0, 31
  %s63 = sld [smem:[%s62]]
  %s64 = scalar_lea.smem %s0, 32
  %s65 = sld [smem:[%s64]]
  %s66 = scalar_lea.smem %s0, 33
  %s67 = sld [smem:[%s66]]
  %s68 = scalar_lea.smem %s0, 34
  %s69 = sld [smem:[%s68]]
  %s70 = scalar_lea.smem %s0, 35
  %s71 = sld [smem:[%s70]]
  %s72 = scalar_lea.smem %s0, 36
  %s73 = sld [smem:[%s72]]
  %s74 = scalar_lea.smem %s0, 37
  %s75 = sld [smem:[%s74]]
  %s76 = scalar_lea.smem %s0, 38
  %s77 = sld [smem:[%s76]]
  %78 = xla_tuple %s75, %s77
  %s79 = sld [smem:[#allocation0]]
  $region174: #{singlemodal_forward.1} parent=0
    _
  %s81 = ssub.s32 1, %s79
  %s82 = scalar_select 0, %s81, %s79
  %v83 = vstv %s73
  %84 = vst [vmem:[#allocation2] sm:$0x1] %v83
  $region1: #{singlemodal_forward.1} parent=0
    #allocation3 [shape = 'u8[512]{0}', space=vmem, size = 0x400, scoped, tag = 'input window, operand 14, single buffered']
    #allocation4 [shape = 's32[1]{0}', space=sflag, size = 0x4, scoped, tag = 'scoped memory for singlemodal_forward.1']
    #allocation5 [shape = 'u8[1024]{0}', space=vmem, size = 0x400, scoped, tag = 'input window, operand 29, single buffered']
    #allocation6 [shape = 's32[1]{0}', space=sflag, size = 0x4, scoped, tag = 'scoped memory for singlemodal_forward.1']
    %85 = vsyncpa [#allocation4], 0
    %86 = vsyncpa [#allocation6], 0
    // Predicated region
    $region2: #{singlemodal_forward.1} parent=1 // pred_check
      _
    $region3: #{singlemodal_forward.1} parent=1 // pred_check_branch
      %88 = sbr.rel (0) target = $region5
    $region4: #{singlemodal_forward.1} parent=1 // pred_region
      _
    $region5: #{singlemodal_forward.1} parent=1 // pred_fallthru
      _
    // Predicated region
    $region6: #{singlemodal_forward.1} parent=1 // pred_check
      _
    $region7: #{singlemodal_forward.1} parent=1 // pred_check_branch
      %90 = sbr.rel (0) target = $region9
    $region8: #{singlemodal_forward.1} parent=1 // pred_region
      _
    $region9: #{singlemodal_forward.1} parent=1 // pred_fallthru
      _
    // Predicated region
    $region10: #{singlemodal_forward.1} parent=1 // pred_check
      _
    $region11: #{singlemodal_forward.1} parent=1 // pred_check_branch
      %92 = sbr.rel (0) target = $region13
    $region12: #{singlemodal_forward.1} parent=1 // pred_region
      _
    $region13: #{singlemodal_forward.1} parent=1 // pred_fallthru
      _
    // Predicated region
    $region14: #{singlemodal_forward.1} parent=1 // pred_check
      _
    $region15: #{singlemodal_forward.1} parent=1 // pred_check_branch
      %94 = sbr.rel (0) target = $region17
    $region16: #{singlemodal_forward.1} parent=1 // pred_region
      _
    $region17: #{singlemodal_forward.1} parent=1 // pred_fallthru
      _
    // Predicated region
    $region18: #{singlemodal_forward.1} parent=1 // pred_check
      _
    $region19: #{singlemodal_forward.1} parent=1 // pred_check_branch
      %96 = sbr.rel (0) target = $region21
    $region20: #{singlemodal_forward.1} parent=1 // pred_region
      _
    $region21: #{singlemodal_forward.1} parent=1 // pred_fallthru
      _
    // Predicated region
    $region22: #{singlemodal_forward.1} parent=1 // pred_check
      _
    $region23: #{singlemodal_forward.1} parent=1 // pred_check_branch
      %98 = sbr.rel (0) target = $region25
    $region24: #{singlemodal_forward.1} parent=1 // pred_region
      _
    $region25: #{singlemodal_forward.1} parent=1 // pred_fallthru
      _
    // Predicated region
    $region26: #{singlemodal_forward.1} parent=1 // pred_check
      _
    $region27: #{singlemodal_forward.1} parent=1 // pred_check_branch
      %100 = sbr.rel (0) target = $region29
    $region28: #{singlemodal_forward.1} parent=1 // pred_region
      _
    $region29: #{singlemodal_forward.1} parent=1 // pred_fallthru
      _
    // Predicated region
    $region30: #{singlemodal_forward.1} parent=1 // pred_check
      _
    $region31: #{singlemodal_forward.1} parent=1 // pred_check_branch
      %102 = sbr.rel (0) target = $region33
    $region32: #{singlemodal_forward.1} parent=1 // pred_region
      _
    $region33: #{singlemodal_forward.1} parent=1 // pred_fallthru
      _
    // Predicated region
    $region34: #{singlemodal_forward.1} parent=1 // pred_check
      _
    $region35: #{singlemodal_forward.1} parent=1 // pred_check_branch
      %104 = sbr.rel (0) target = $region37
    $region36: #{singlemodal_forward.1} parent=1 // pred_region
      _
    $region37: #{singlemodal_forward.1} parent=1 // pred_fallthru
      _
    // Predicated region
    $region38: #{singlemodal_forward.1} parent=1 // pred_check
      _
    $region39: #{singlemodal_forward.1} parent=1 // pred_check_branch
      %106 = sbr.rel (0) target = $region41
    $region40: #{singlemodal_forward.1} parent=1 // pred_region
      _
    $region41: #{singlemodal_forward.1} parent=1 // pred_fallthru
      _
    // Predicated region
    $region42: #{singlemodal_forward.1} parent=1 // pred_check
      _
    $region43: #{singlemodal_forward.1} parent=1 // pred_check_branch
      %108 = sbr.rel (0) target = $region45
    $region44: #{singlemodal_forward.1} parent=1 // pred_region
      _
    $region45: #{singlemodal_forward.1} parent=1 // pred_fallthru
      _
    // Predicated region
    $region46: #{singlemodal_forward.1} parent=1 // pred_check
      _
    $region47: #{singlemodal_forward.1} parent=1 // pred_check_branch
      %110 = sbr.rel (0) target = $region49
    $region48: #{singlemodal_forward.1} parent=1 // pred_region
      _
    $region49: #{singlemodal_forward.1} parent=1 // pred_fallthru
      _
    // Predicated region
    $region50: #{singlemodal_forward.1} parent=1 // pred_check
      _
    $region51: #{singlemodal_forward.1} parent=1 // pred_check_branch
      %112 = sbr.rel (0) target = $region53
    $region52: #{singlemodal_forward.1} parent=1 // pred_region
      _
    $region53: #{singlemodal_forward.1} parent=1 // pred_fallthru
      _
    // Predicated region
    $region54: #{singlemodal_forward.1} parent=1 // pred_check
      _
    $region55: #{singlemodal_forward.1} parent=1 // pred_check_branch
      %114 = sbr.rel (0) target = $region57
    $region56: #{singlemodal_forward.1} parent=1 // pred_region
      _
    $region57: #{singlemodal_forward.1} parent=1 // pred_fallthru
      _
    // Predicated region
    $region58: #{singlemodal_forward.1} parent=1 // pred_check
      _
    $region59: #{singlemodal_forward.1} parent=1 // pred_check_branch
      %116 = sbr.rel (0) target = $region61
    $region60: #{singlemodal_forward.1} parent=1 // pred_region
      %s118 = ssub.s32 16, 16
      %119 = vsyncadd [#allocation4], %s118
      %s121 = sshll.u32 [#allocation3], 4
      %s122 = int_to_ptr.vmem [resolvable:$true] %s121
      %124 = dma.hbm_to_vmem [thread:$0]  %s29, 16, %s122, [#allocation4]
    $region61: #{singlemodal_forward.1} parent=1 // pred_fallthru
      _
    // Predicated region
    $region62: #{singlemodal_forward.1} parent=1 // pred_check
      _
    $region63: #{singlemodal_forward.1} parent=1 // pred_check_branch
      %126 = sbr.rel (0) target = $region65
    $region64: #{singlemodal_forward.1} parent=1 // pred_region
      _
    $region65: #{singlemodal_forward.1} parent=1 // pred_fallthru
      _
    // Predicated region
    $region66: #{singlemodal_forward.1} parent=1 // pred_check
      _
    $region67: #{singlemodal_forward.1} parent=1 // pred_check_branch
      %128 = sbr.rel (0) target = $region69
    $region68: #{singlemodal_forward.1} parent=1 // pred_region
      _
    $region69: #{singlemodal_forward.1} parent=1 // pred_fallthru
      _
    // Predicated region
    $region70: #{singlemodal_forward.1} parent=1 // pred_check
      _
    $region71: #{singlemodal_forward.1} parent=1 // pred_check_branch
      %130 = sbr.rel (0) target = $region73
    $region72: #{singlemodal_forward.1} parent=1 // pred_region
      _
    $region73: #{singlemodal_forward.1} parent=1 // pred_fallthru
      _
    // Predicated region
    $region74: #{singlemodal_forward.1} parent=1 // pred_check
      _
    $region75: #{singlemodal_forward.1} parent=1 // pred_check_branch
      %132 = sbr.rel (0) target = $region77
    $region76: #{singlemodal_forward.1} parent=1 // pred_region
      _
    $region77: #{singlemodal_forward.1} parent=1 // pred_fallthru
      _
    // Predicated region
    $region78: #{singlemodal_forward.1} parent=1 // pred_check
      _
    $region79: #{singlemodal_forward.1} parent=1 // pred_check_branch
      %134 = sbr.rel (0) target = $region81
    $region80: #{singlemodal_forward.1} parent=1 // pred_region
      _
    $region81: #{singlemodal_forward.1} parent=1 // pred_fallthru
      _
    // Predicated region
    $region82: #{singlemodal_forward.1} parent=1 // pred_check
      _
    $region83: #{singlemodal_forward.1} parent=1 // pred_check_branch
      %136 = sbr.rel (0) target = $region85
    $region84: #{singlemodal_forward.1} parent=1 // pred_region
      _
    $region85: #{singlemodal_forward.1} parent=1 // pred_fallthru
      _
    // Predicated region
    $region86: #{singlemodal_forward.1} parent=1 // pred_check
      _
    $region87: #{singlemodal_forward.1} parent=1 // pred_check_branch
      %138 = sbr.rel (0) target = $region89
    $region88: #{singlemodal_forward.1} parent=1 // pred_region
      _
    $region89: #{singlemodal_forward.1} parent=1 // pred_fallthru
      _
    // Predicated region
    $region90: #{singlemodal_forward.1} parent=1 // pred_check
      _
    $region91: #{singlemodal_forward.1} parent=1 // pred_check_branch
      %140 = sbr.rel (0) target = $region93
    $region92: #{singlemodal_forward.1} parent=1 // pred_region
      _
    $region93: #{singlemodal_forward.1} parent=1 // pred_fallthru
      _
    // Predicated region
    $region94: #{singlemodal_forward.1} parent=1 // pred_check
      _
    $region95: #{singlemodal_forward.1} parent=1 // pred_check_branch
      %142 = sbr.rel (0) target = $region97
    $region96: #{singlemodal_forward.1} parent=1 // pred_region
      _
    $region97: #{singlemodal_forward.1} parent=1 // pred_fallthru
      _
    // Predicated region
    $region98: #{singlemodal_forward.1} parent=1 // pred_check
      _
    $region99: #{singlemodal_forward.1} parent=1 // pred_check_branch
      %144 = sbr.rel (0) target = $region101
    $region100: #{singlemodal_forward.1} parent=1 // pred_region
      _
    $region101: #{singlemodal_forward.1} parent=1 // pred_fallthru
      _
    // Predicated region
    $region102: #{singlemodal_forward.1} parent=1 // pred_check
      _
    $region103: #{singlemodal_forward.1} parent=1 // pred_check_branch
      %146 = sbr.rel (0) target = $region105
    $region104: #{singlemodal_forward.1} parent=1 // pred_region
      _
    $region105: #{singlemodal_forward.1} parent=1 // pred_fallthru
      _
    // Predicated region
    $region106: #{singlemodal_forward.1} parent=1 // pred_check
      _
    $region107: #{singlemodal_forward.1} parent=1 // pred_check_branch
      %148 = sbr.rel (0) target = $region109
    $region108: #{singlemodal_forward.1} parent=1 // pred_region
      _
    $region109: #{singlemodal_forward.1} parent=1 // pred_fallthru
      _
    // Predicated region
    $region110: #{singlemodal_forward.1} parent=1 // pred_check
      _
    $region111: #{singlemodal_forward.1} parent=1 // pred_check_branch
      %150 = sbr.rel (0) target = $region113
    $region112: #{singlemodal_forward.1} parent=1 // pred_region
      _
    $region113: #{singlemodal_forward.1} parent=1 // pred_fallthru
      _
    // Predicated region
    $region114: #{singlemodal_forward.1} parent=1 // pred_check
      _
    $region115: #{singlemodal_forward.1} parent=1 // pred_check_branch
      %152 = sbr.rel (0) target = $region117
    $region116: #{singlemodal_forward.1} parent=1 // pred_region
      _
    $region117: #{singlemodal_forward.1} parent=1 // pred_fallthru
      _
    // Predicated region
    $region118: #{singlemodal_forward.1} parent=1 // pred_check
      _
    $region119: #{singlemodal_forward.1} parent=1 // pred_check_branch
      %154 = sbr.rel (0) target = $region121
    $region120: #{singlemodal_forward.1} parent=1 // pred_region
      %s156 = ssub.s32 32, 32
      %157 = vsyncadd [#allocation6], %s156
      %s159 = sshll.u32 [#allocation5], 4
      %s160 = int_to_ptr.vmem [resolvable:$true] %s159
      %162 = dma.hbm_to_vmem [thread:$0]  %s59, 32, %s160, [#allocation6]
    $region121: #{singlemodal_forward.1} parent=1 // pred_fallthru
      _
    // Predicated region
    $region122: #{singlemodal_forward.1} parent=1 // pred_check
      _
    $region123: #{singlemodal_forward.1} parent=1 // pred_check_branch
      %164 = sbr.rel (0) target = $region125
    $region124: #{singlemodal_forward.1} parent=1 // pred_region
      _
    $region125: #{singlemodal_forward.1} parent=1 // pred_fallthru
      _
    // Predicated region
    $region126: #{singlemodal_forward.1} parent=1 // pred_check
      _
    $region127: #{singlemodal_forward.1} parent=1 // pred_check_branch
      %166 = sbr.rel (0) target = $region129
    $region128: #{singlemodal_forward.1} parent=1 // pred_region
      _
    $region129: #{singlemodal_forward.1} parent=1 // pred_fallthru
      _
    // Predicated region
    $region130: #{singlemodal_forward.1} parent=1 // pred_check
      _
    $region131: #{singlemodal_forward.1} parent=1 // pred_check_branch
      %168 = sbr.rel (0) target = $region133
    $region132: #{singlemodal_forward.1} parent=1 // pred_region
      _
    $region133: #{singlemodal_forward.1} parent=1 // pred_fallthru
      _
    // Predicated region
    $region134: #{singlemodal_forward.1} parent=1 // pred_check
      _
    $region135: #{singlemodal_forward.1} parent=1 // pred_check_branch
      %170 = sbr.rel (0) target = $region137
    $region136: #{singlemodal_forward.1} parent=1 // pred_region
      _
    $region137: #{singlemodal_forward.1} parent=1 // pred_fallthru
      _
    // Predicated region
    $region138: #{singlemodal_forward.1} parent=1 // pred_check
      _
    $region139: #{singlemodal_forward.1} parent=1 // pred_check_branch
      %172 = sbr.rel (0) target = $region141
    $region140: #{singlemodal_forward.1} parent=1 // pred_region
      _
    $region141: #{singlemodal_forward.1} parent=1 // pred_fallthru
      _
    // Predicated region
    $region142: #{singlemodal_forward.1} parent=1 // pred_check
      _
    $region143: #{singlemodal_forward.1} parent=1 // pred_check_branch
      %174 = sbr.rel (0) target = $region145
    $region144: #{singlemodal_forward.1} parent=1 // pred_region
      _
    $region145: #{singlemodal_forward.1} parent=1 // pred_fallthru
      _
    // Predicated region
    $region146: #{singlemodal_forward.1} parent=1 // pred_check
      _
    $region147: #{singlemodal_forward.1} parent=1 // pred_check_branch
      %176 = sbr.rel (0) target = $region149
    $region148: #{singlemodal_forward.1} parent=1 // pred_region
      _
    $region149: #{singlemodal_forward.1} parent=1 // pred_fallthru
      _
    // Predicated region
    $region150: #{singlemodal_forward.1} parent=1 // pred_check
      _
    $region151: #{singlemodal_forward.1} parent=1 // pred_check_branch
      %178 = sbr.rel (0) target = $region153
    $region152: #{singlemodal_forward.1} parent=1 // pred_region
      %179 = dma.done [#allocation4], 16
    $region153: #{singlemodal_forward.1} parent=1 // pred_fallthru
      _
    // Predicated region
    $region154: #{singlemodal_forward.1} parent=1 // pred_check
      _
    $region155: #{singlemodal_forward.1} parent=1 // pred_check_branch
      %181 = sbr.rel (0) target = $region157
    $region156: #{singlemodal_forward.1} parent=1 // pred_region
      %182 = dma.done [#allocation6], 32
    $region157: #{singlemodal_forward.1} parent=1 // pred_fallthru
      _
    %v183 = vld [vmem:[%s1] sm:$0xff]
    %v184 = vld [vmem:[%s1 + $0x8] sm:$0xff]
    %v185 = vld [vmem:[%s7] sm:$0xff]
    %v186 = vld [vmem:[%s7 + $0x8] sm:$0xff]
    %v187 = vld [vmem:[%s9] sm:$0x1]
    %v189 = vlaneseq
    %v190 = vshrl.u32 %v189, 7
    %v191 = vsub.s32 0, %v190
    %v192 = vrot.slane %v187, %v191
    %vm194 = vcmask 130048
    %v196 = vsel %vm194, %v183, 0
    %v199 = vsel %vm194, %v184, 0
    %201 = vmatprep.subr.mxu0 0.0
    %202 = vmatpush1.msra.mxu0 %v185
    %203 = vmatprep.subr.mxu0 0.0
    %204 = vmatpush1.msra.mxu0 %v186
    %205 = vmatprep.subr.mxu0 0.0
    %206 = vmatpush1.msra.mxu0 0.0
    %207 = vmatprep.subr.mxu0 0.0
    %208 = vmatpush1.msra.mxu0 0.0
    %209 = vmatprep.subr.mxu0 0.0
    %210 = vmatpush1.msra.mxu0 0.0
    %211 = vmatprep.subr.mxu0 0.0
    %212 = vmatpush1.msra.mxu0 0.0
    %213 = vmatprep.subr.mxu0 0.0
    %214 = vmatpush1.msra.mxu0 0.0
    %215 = vmatprep.subr.mxu0 0.0
    %216 = vmatpush1.msra.mxu0 0.0
    %217 = vmatprep.subr.mxu0 0.0
    %218 = vmatpush1.msra.mxu0 0.0
    %219 = vmatprep.subr.mxu0 0.0
    %220 = vmatpush1.msra.mxu0 0.0
    %221 = vmatprep.subr.mxu0 0.0
    %222 = vmatpush1.msra.mxu0 0.0
    %223 = vmatprep.subr.mxu0 0.0
    %224 = vmatpush1.msra.mxu0 0.0
    %225 = vmatprep.subr.mxu0 0.0
    %226 = vmatpush1.msra.mxu0 0.0
    %227 = vmatprep.subr.mxu0 0.0
    %228 = vmatpush1.msra.mxu0 0.0
    %229 = vmatprep.subr.mxu0 0.0
    %230 = vmatpush1.msra.mxu0 0.0
    %231 = vmatprep.subr.mxu0 0.0
    %232 = vmatpush1.msra.mxu0 0.0
    %233 = vmatprep.subr.mxu0 0.0
    %234 = vmatpush1.msra.mxu0 0.0
    %235 = vmatprep.subr.mxu0 0.0
    %236 = vmatpush1.msra.mxu0 0.0
    %237 = vmatprep.subr.mxu0 0.0
    %238 = vmatpush1.msra.mxu0 0.0
    %239 = vmatprep.subr.mxu0 0.0
    %240 = vmatpush1.msra.mxu0 0.0
    %241 = vmatprep.subr.mxu0 0.0
    %242 = vmatpush1.msra.mxu0 0.0
    %243 = vmatprep.subr.mxu0 0.0
    %244 = vmatpush1.msra.mxu0 0.0
    %245 = vmatprep.subr.mxu0 0.0
    %246 = vmatpush1.msra.mxu0 0.0
    %247 = vmatprep.subr.mxu0 0.0
    %248 = vmatpush1.msra.mxu0 0.0
    %249 = vmatprep.subr.mxu0 0.0
    %250 = vmatpush1.msra.mxu0 0.0
    %251 = vmatprep.subr.mxu0 0.0
    %252 = vmatpush1.msra.mxu0 0.0
    %253 = vmatprep.subr.mxu0 0.0
    %254 = vmatpush1.msra.mxu0 0.0
    %255 = vmatprep.subr.mxu0 0.0
    %256 = vmatpush1.msra.mxu0 0.0
    %257 = vmatprep.subr.mxu0 0.0
    %258 = vmatpush1.msra.mxu0 0.0
    %259 = vmatprep.subr.mxu0 0.0
    %260 = vmatpush1.msra.mxu0 0.0
    %261 = vmatprep.subr.mxu0 0.0
    %262 = vmatpush1.msra.mxu0 0.0
    %263 = vmatprep.subr.mxu0 0.0
    %264 = vmatpush1.msra.mxu0 0.0
    %265 = vmatprep.mubr.f32.mxu0 0.0
    %266 = vmatmul.mubr.f32.gmra.mrb[0].mxu0 %v196
    %v267 = vpop.f32.mrb[0].mxu0
    %v268 = vadd.f32 %v192, %v267
    %v269 = vpop.f32.mrb[0].mxu0
    %270 = vmatprep.mubr.f32.mxu0 0.0
    %271 = vmatmul.mubr.f32.gmra.mrb[0].mxu0 %v199
    %v272 = vpop.f32.mrb[0].mxu0
    %v273 = vadd.f32 %v192, %v272
    %v274 = vpop.f32.mrb[0].mxu0
    %275 = vdwg.mxu0
    %v276 = vld [vmem:[%s3] sm:$0xff]
    %v277 = vadd.f32 %v268, %v276
    %v278 = vadd.f32 %v273, %v276
    %v279 = vld [vmem:[%s5] sm:$0xff]
    %v280 = vld [vmem:[%s5 + $0x8] sm:$0xff]
    %v281 = vld [vmem:[%s11] sm:$0x1]
    %v282 = vld [vmem:[%s13] sm:$0x1]
    %vm283 = vcmask 261120
    %v284 = vsel %vm283, %v277, 0.0
    %285 = vadd.xlane.f32.xlu0 %v284
    %v286 = vpop.xlane.xlu0 %285
    %v287 = vsel %vm283, %v278, 0.0
    %288 = vadd.xlane.f32.xlu0 %v287
    %v289 = vpop.xlane.xlu0 %288
    %v290 = vrcp.pop 32.0
    %v291 = vmul.f32 %v286, %v290
    %v292 = vmul.f32 %v289, %v290
    %v293 = vsub.f32 %v277, %v291
    %v294 = vsub.f32 %v278, %v292
    %v295 = vmul.f32 %v293, %v293
    %v296 = vmul.f32 %v294, %v294
    %v297 = vsel %vm283, %v295, 0.0
    %298 = vadd.xlane.f32.xlu0 %v297
    %v299 = vpop.xlane.xlu0 %298
    %v300 = vsel %vm283, %v296, 0.0
    %301 = vadd.xlane.f32.xlu0 %v300
    %v302 = vpop.xlane.xlu0 %301
    %v303 = vmul.f32 %v299, %v290
    %v304 = vmul.f32 %v302, %v290
    %v305 = vadd.f32 %v303, 1e-05
    %v306 = vadd.f32 %v304, 1e-05
    %v307 = vrsqrt.pop %v305
    %v308 = vrsqrt.pop %v306
    %v309 = vmul.f32 %v293, %v307
    %v310 = vmul.f32 %v294, %v308
    %v312 = vlaneseq
    %v313 = vshrl.u32 %v312, 7
    %v314 = vsub.s32 0, %v313
    %v315 = vrot.slane %v281, %v314
    %v317 = vmul.f32 %v309, %v315
    %v318 = vmul.f32 %v310, %v315
    %v320 = vlaneseq
    %v321 = vshrl.u32 %v320, 7
    %v322 = vsub.s32 0, %v321
    %v323 = vrot.slane %v282, %v322
    %v325 = vadd.f32 %v317, %v323
    %v326 = vadd.f32 %v318, %v323
    %v327 = vld [vmem:[%s15] sm:$0xff]
    %v328 = vld [vmem:[%s15 + $0x8] sm:$0xff]
    %v329 = vld [vmem:[%s15 + $0x10] sm:$0xff]
    %v330 = vld [vmem:[%s15 + $0x18] sm:$0xff]
    %v331 = vld [vmem:[%s17] sm:$0x1]
    %v333 = vlaneseq
    %v334 = vshrl.u32 %v333, 7
    %v335 = vsub.s32 0, %v334
    %v336 = vrot.slane %v331, %v335
    %v339 = vsel %vm283, %v325, 0
    %v342 = vsel %vm283, %v326, 0
    %344 = vmatprep.subr.mxu0 0.0
    %345 = vmatpush1.msra.mxu0 %v327
    %346 = vmatprep.subr.mxu0 0.0
    %347 = vmatpush1.msra.mxu0 %v328
    %348 = vmatprep.subr.mxu0 0.0
    %349 = vmatpush1.msra.mxu0 %v329
    %350 = vmatprep.subr.mxu0 0.0
    %351 = vmatpush1.msra.mxu0 %v330
    %352 = vmatprep.subr.mxu0 0.0
    %353 = vmatpush1.msra.mxu0 0.0
    %354 = vmatprep.subr.mxu0 0.0
    %355 = vmatpush1.msra.mxu0 0.0
    %356 = vmatprep.subr.mxu0 0.0
    %357 = vmatpush1.msra.mxu0 0.0
    %358 = vmatprep.subr.mxu0 0.0
    %359 = vmatpush1.msra.mxu0 0.0
    %360 = vmatprep.subr.mxu0 0.0
    %361 = vmatpush1.msra.mxu0 0.0
    %362 = vmatprep.subr.mxu0 0.0
    %363 = vmatpush1.msra.mxu0 0.0
    %364 = vmatprep.subr.mxu0 0.0
    %365 = vmatpush1.msra.mxu0 0.0
    %366 = vmatprep.subr.mxu0 0.0
    %367 = vmatpush1.msra.mxu0 0.0
    %368 = vmatprep.subr.mxu0 0.0
    %369 = vmatpush1.msra.mxu0 0.0
    %370 = vmatprep.subr.mxu0 0.0
    %371 = vmatpush1.msra.mxu0 0.0
    %372 = vmatprep.subr.mxu0 0.0
    %373 = vmatpush1.msra.mxu0 0.0
    %374 = vmatprep.subr.mxu0 0.0
    %375 = vmatpush1.msra.mxu0 0.0
    %376 = vmatprep.subr.mxu0 0.0
    %377 = vmatpush1.msra.mxu0 0.0
    %378 = vmatprep.subr.mxu0 0.0
    %379 = vmatpush1.msra.mxu0 0.0
    %380 = vmatprep.subr.mxu0 0.0
    %381 = vmatpush1.msra.mxu0 0.0
    %382 = vmatprep.subr.mxu0 0.0
    %383 = vmatpush1.msra.mxu0 0.0
    %384 = vmatprep.subr.mxu0 0.0
    %385 = vmatpush1.msra.mxu0 0.0
    %386 = vmatprep.subr.mxu0 0.0
    %387 = vmatpush1.msra.mxu0 0.0
    %388 = vmatprep.subr.mxu0 0.0
    %389 = vmatpush1.msra.mxu0 0.0
    %390 = vmatprep.subr.mxu0 0.0
    %391 = vmatpush1.msra.mxu0 0.0
    %392 = vmatprep.subr.mxu0 0.0
    %393 = vmatpush1.msra.mxu0 0.0
    %394 = vmatprep.subr.mxu0 0.0
    %395 = vmatpush1.msra.mxu0 0.0
    %396 = vmatprep.subr.mxu0 0.0
    %397 = vmatpush1.msra.mxu0 0.0
    %398 = vmatprep.subr.mxu0 0.0
    %399 = vmatpush1.msra.mxu0 0.0
    %400 = vmatprep.subr.mxu0 0.0
    %401 = vmatpush1.msra.mxu0 0.0
    %402 = vmatprep.subr.mxu0 0.0
    %403 = vmatpush1.msra.mxu0 0.0
    %404 = vmatprep.subr.mxu0 0.0
    %405 = vmatpush1.msra.mxu0 0.0
    %406 = vmatprep.subr.mxu0 0.0
    %407 = vmatpush1.msra.mxu0 0.0
    %408 = vmatprep.mubr.f32.mxu0 0.0
    %409 = vmatmul.mubr.f32.gmra.mrb[0].mxu0 %v339
    %v410 = vpop.f32.mrb[0].mxu0
    %v411 = vadd.f32 %v336, %v410
    %v412 = vpop.f32.mrb[0].mxu0
    %413 = vmatprep.mubr.f32.mxu0 0.0
    %414 = vmatmul.mubr.f32.gmra.mrb[0].mxu0 %v342
    %v415 = vpop.f32.mrb[0].mxu0
    %v416 = vadd.f32 %v336, %v415
    %v417 = vpop.f32.mrb[0].mxu0
    %418 = vdwg.mxu0
    %421 = vrot.lane.b32.xlu0 %v411, 96
    %v422 = vpop.permute.xlu0 %421
    %423 = vrot.lane.b32.xlu0 %v416, 96
    %v424 = vpop.permute.xlu0 %423
    %vm425 = vcmask 64512
    %v426 = vsel %vm425, %v411, 0
    %v428 = vsel %vm425, %v416, 0
    %v430 = vsel %vm425, %v422, 0
    %v432 = vsel %vm425, %v424, 0
    %434 = vmatprep.subr.mxu0 0.0
    %435 = vmatpush1.xpose.msra.mxu0 %v430
    %436 = vmatprep.subr.mxu0 0.0
    %437 = vmatpush1.xpose.msra.mxu0 %v432
    %438 = vmatprep.subr.mxu0 0.0
    %439 = vmatpush1.xpose.msra.mxu0 0.0
    %440 = vmatprep.subr.mxu0 0.0
    %441 = vmatpush1.xpose.msra.mxu0 0.0
    %442 = vmatprep.subr.mxu0 0.0
    %443 = vmatpush1.xpose.msra.mxu0 0.0
    %444 = vmatprep.subr.mxu0 0.0
    %445 = vmatpush1.xpose.msra.mxu0 0.0
    %446 = vmatprep.subr.mxu0 0.0
    %447 = vmatpush1.xpose.msra.mxu0 0.0
    %448 = vmatprep.subr.mxu0 0.0
    %449 = vmatpush1.xpose.msra.mxu0 0.0
    %450 = vmatprep.subr.mxu0 0.0
    %451 = vmatpush1.xpose.msra.mxu0 0.0
    %452 = vmatprep.subr.mxu0 0.0
    %453 = vmatpush1.xpose.msra.mxu0 0.0
    %454 = vmatprep.subr.mxu0 0.0
    %455 = vmatpush1.xpose.msra.mxu0 0.0
    %456 = vmatprep.subr.mxu0 0.0
    %457 = vmatpush1.xpose.msra.mxu0 0.0
    %458 = vmatprep.subr.mxu0 0.0
    %459 = vmatpush1.xpose.msra.mxu0 0.0
    %460 = vmatprep.subr.mxu0 0.0
    %461 = vmatpush1.xpose.msra.mxu0 0.0
    %462 = vmatprep.subr.mxu0 0.0
    %463 = vmatpush1.xpose.msra.mxu0 0.0
    %464 = vmatprep.subr.mxu0 0.0
    %465 = vmatpush1.xpose.msra.mxu0 0.0
    %466 = vmatprep.subr.mxu0 0.0
    %467 = vmatpush1.xpose.msra.mxu0 0.0
    %468 = vmatprep.subr.mxu0 0.0
    %469 = vmatpush1.xpose.msra.mxu0 0.0
    %470 = vmatprep.subr.mxu0 0.0
    %471 = vmatpush1.xpose.msra.mxu0 0.0
    %472 = vmatprep.subr.mxu0 0.0
    %473 = vmatpush1.xpose.msra.mxu0 0.0
    %474 = vmatprep.subr.mxu0 0.0
    %475 = vmatpush1.xpose.msra.mxu0 0.0
    %476 = vmatprep.subr.mxu0 0.0
    %477 = vmatpush1.xpose.msra.mxu0 0.0
    %478 = vmatprep.subr.mxu0 0.0
    %479 = vmatpush1.xpose.msra.mxu0 0.0
    %480 = vmatprep.subr.mxu0 0.0
    %481 = vmatpush1.xpose.msra.mxu0 0.0
    %482 = vmatprep.subr.mxu0 0.0
    %483 = vmatpush1.xpose.msra.mxu0 0.0
    %484 = vmatprep.subr.mxu0 0.0
    %485 = vmatpush1.xpose.msra.mxu0 0.0
    %486 = vmatprep.subr.mxu0 0.0
    %487 = vmatpush1.xpose.msra.mxu0 0.0
    %488 = vmatprep.subr.mxu0 0.0
    %489 = vmatpush1.xpose.msra.mxu0 0.0
    %490 = vmatprep.subr.mxu0 0.0
    %491 = vmatpush1.xpose.msra.mxu0 0.0
    %492 = vmatprep.subr.mxu0 0.0
    %493 = vmatpush1.xpose.msra.mxu0 0.0
    %494 = vmatprep.subr.mxu0 0.0
    %495 = vmatpush1.xpose.msra.mxu0 0.0
    %496 = vmatprep.subr.mxu0 0.0
    %497 = vmatpush1.xpose.msra.mxu0 0.0
    %498 = vmatprep.mubr.f32.mxu0 0.0
    %499 = vmatmul.mubr.f32.gmra.mrb[0].mxu0 %v426
    %v500 = vpop.f32.mrb[0].mxu0
    %v501 = vadd.f32 0.0, %v500
    %v502 = vpop.f32.mrb[0].mxu0
    %503 = vmatprep.mubr.f32.mxu0 0.0
    %504 = vmatmul.mubr.f32.gmra.mrb[0].mxu0 %v428
    %v505 = vpop.f32.mrb[0].mxu0
    %v506 = vadd.f32 0.0, %v505
    %v507 = vpop.f32.mrb[0].mxu0
    %508 = vdwg.mxu0
    %v509 = vmul.f32 %v501, 0.35355338
    %v510 = vmul.f32 %v506, 0.35355338
    %v511 = vadd.f32 %v509, %v279
    %v512 = vadd.f32 %v510, %v280
    %v513 = vsel %vm194, %v511, -inf
    %514 = vmax.xlane.f32.xlu0 %v513
    %v515 = vpop.xlane.xlu0 %514
    %v516 = vsel %vm194, %v512, -inf
    %517 = vmax.xlane.f32.xlu0 %v516
    %v518 = vpop.xlane.xlu0 %517
    %v519 = vsub.f32 %v511, %v515
    %v520 = vsub.f32 %v512, %v518
    %v521 = vmul.f32 %v519, 1.442695
    %v522 = vpow.pop %v521
    %v523 = vmul.f32 %v520, 1.442695
    %v524 = vpow.pop %v523
    %v525 = vsel %vm194, %v522, 0.0
    %526 = vadd.xlane.f32.xlu0 %v525
    %v527 = vpop.xlane.xlu0 %526
    %v528 = vsel %vm194, %v524, 0.0
    %529 = vadd.xlane.f32.xlu0 %v528
    %v530 = vpop.xlane.xlu0 %529
    %v531 = vrcp.pop %v527
    %v532 = vrcp.pop %v530
    %v533 = vmul.f32 %v522, %v531
    %v534 = vmul.f32 %v524, %v532
    %535 = vrot.lane.b32.xlu0 %v411, 64
    %v536 = vpop.permute.xlu0 %535
    %537 = vrot.lane.b32.xlu0 %v416, 64
    %v538 = vpop.permute.xlu0 %537
    %v542 = vsel %vm194, %v533, 0
    %v545 = vsel %vm194, %v534, 0
    %547 = vmatprep.subr.mxu0 0.0
    %548 = vmatpush1.msra.mxu0 %v536
    %549 = vmatprep.subr.mxu0 0.0
    %550 = vmatpush1.msra.mxu0 %v538
    %551 = vmatprep.subr.mxu0 0.0
    %552 = vmatpush1.msra.mxu0 0.0
    %553 = vmatprep.subr.mxu0 0.0
    %554 = vmatpush1.msra.mxu0 0.0
    %555 = vmatprep.subr.mxu0 0.0
    %556 = vmatpush1.msra.mxu0 0.0
    %557 = vmatprep.subr.mxu0 0.0
    %558 = vmatpush1.msra.mxu0 0.0
    %559 = vmatprep.subr.mxu0 0.0
    %560 = vmatpush1.msra.mxu0 0.0
    %561 = vmatprep.subr.mxu0 0.0
    %562 = vmatpush1.msra.mxu0 0.0
    %563 = vmatprep.subr.mxu0 0.0
    %564 = vmatpush1.msra.mxu0 0.0
    %565 = vmatprep.subr.mxu0 0.0
    %566 = vmatpush1.msra.mxu0 0.0
    %567 = vmatprep.subr.mxu0 0.0
    %568 = vmatpush1.msra.mxu0 0.0
    %569 = vmatprep.subr.mxu0 0.0
    %570 = vmatpush1.msra.mxu0 0.0
    %571 = vmatprep.subr.mxu0 0.0
    %572 = vmatpush1.msra.mxu0 0.0
    %573 = vmatprep.subr.mxu0 0.0
    %574 = vmatpush1.msra.mxu0 0.0
    %575 = vmatprep.subr.mxu0 0.0
    %576 = vmatpush1.msra.mxu0 0.0
    %577 = vmatprep.subr.mxu0 0.0
    %578 = vmatpush1.msra.mxu0 0.0
    %579 = vmatprep.subr.mxu0 0.0
    %580 = vmatpush1.msra.mxu0 0.0
    %581 = vmatprep.subr.mxu0 0.0
    %582 = vmatpush1.msra.mxu0 0.0
    %583 = vmatprep.subr.mxu0 0.0
    %584 = vmatpush1.msra.mxu0 0.0
    %585 = vmatprep.subr.mxu0 0.0
    %586 = vmatpush1.msra.mxu0 0.0
    %587 = vmatprep.subr.mxu0 0.0
    %588 = vmatpush1.msra.mxu0 0.0
    %589 = vmatprep.subr.mxu0 0.0
    %590 = vmatpush1.msra.mxu0 0.0
    %591 = vmatprep.subr.mxu0 0.0
    %592 = vmatpush1.msra.mxu0 0.0
    %593 = vmatprep.subr.mxu0 0.0
    %594 = vmatpush1.msra.mxu0 0.0
    %595 = vmatprep.subr.mxu0 0.0
    %596 = vmatpush1.msra.mxu0 0.0
    %597 = vmatprep.subr.mxu0 0.0
    %598 = vmatpush1.msra.mxu0 0.0
    %599 = vmatprep.subr.mxu0 0.0
    %600 = vmatpush1.msra.mxu0 0.0
    %601 = vmatprep.subr.mxu0 0.0
    %602 = vmatpush1.msra.mxu0 0.0
    %603 = vmatprep.subr.mxu0 0.0
    %604 = vmatpush1.msra.mxu0 0.0
    %605 = vmatprep.subr.mxu0 0.0
    %606 = vmatpush1.msra.mxu0 0.0
    %607 = vmatprep.subr.mxu0 0.0
    %608 = vmatpush1.msra.mxu0 0.0
    %609 = vmatprep.subr.mxu0 0.0
    %610 = vmatpush1.msra.mxu0 0.0
    %611 = vmatprep.mubr.f32.mxu0 0.0
    %612 = vmatmul.mubr.f32.gmra.mrb[0].mxu0 %v542
    %v613 = vpop.f32.mrb[0].mxu0
    %v614 = vadd.f32 0.0, %v613
    %v615 = vpop.f32.mrb[0].mxu0
    %616 = vmatprep.mubr.f32.mxu0 0.0
    %617 = vmatmul.mubr.f32.gmra.mrb[0].mxu0 %v545
    %v618 = vpop.f32.mrb[0].mxu0
    %v619 = vadd.f32 0.0, %v618
    %v620 = vpop.f32.mrb[0].mxu0
    %621 = vdwg.mxu0
    %622 = vrot.lane.b32.xlu0 %v411, 120
    %v623 = vpop.permute.xlu0 %622
    %624 = vrot.lane.b32.xlu0 %v416, 120
    %v625 = vpop.permute.xlu0 %624
    %626 = vrot.lane.b32.xlu0 %v411, 88
    %v627 = vpop.permute.xlu0 %626
    %628 = vrot.lane.b32.xlu0 %v416, 88
    %v629 = vpop.permute.xlu0 %628
    %v630 = vsel %vm425, %v623, 0
    %v632 = vsel %vm425, %v625, 0
    %v634 = vsel %vm425, %v627, 0
    %v636 = vsel %vm425, %v629, 0
    %638 = vmatprep.subr.mxu0 0.0
    %639 = vmatpush1.xpose.msra.mxu0 %v634
    %640 = vmatprep.subr.mxu0 0.0
    %641 = vmatpush1.xpose.msra.mxu0 %v636
    %642 = vmatprep.subr.mxu0 0.0
    %643 = vmatpush1.xpose.msra.mxu0 0.0
    %644 = vmatprep.subr.mxu0 0.0
    %645 = vmatpush1.xpose.msra.mxu0 0.0
    %646 = vmatprep.subr.mxu0 0.0
    %647 = vmatpush1.xpose.msra.mxu0 0.0
    %648 = vmatprep.subr.mxu0 0.0
    %649 = vmatpush1.xpose.msra.mxu0 0.0
    %650 = vmatprep.subr.mxu0 0.0
    %651 = vmatpush1.xpose.msra.mxu0 0.0
    %652 = vmatprep.subr.mxu0 0.0
    %653 = vmatpush1.xpose.msra.mxu0 0.0
    %654 = vmatprep.subr.mxu0 0.0
    %655 = vmatpush1.xpose.msra.mxu0 0.0
    %656 = vmatprep.subr.mxu0 0.0
    %657 = vmatpush1.xpose.msra.mxu0 0.0
    %658 = vmatprep.subr.mxu0 0.0
    %659 = vmatpush1.xpose.msra.mxu0 0.0
    %660 = vmatprep.subr.mxu0 0.0
    %661 = vmatpush1.xpose.msra.mxu0 0.0
    %662 = vmatprep.subr.mxu0 0.0
    %663 = vmatpush1.xpose.msra.mxu0 0.0
    %664 = vmatprep.subr.mxu0 0.0
    %665 = vmatpush1.xpose.msra.mxu0 0.0
    %666 = vmatprep.subr.mxu0 0.0
    %667 = vmatpush1.xpose.msra.mxu0 0.0
    %668 = vmatprep.subr.mxu0 0.0
    %669 = vmatpush1.xpose.msra.mxu0 0.0
    %670 = vmatprep.subr.mxu0 0.0
    %671 = vmatpush1.xpose.msra.mxu0 0.0
    %672 = vmatprep.subr.mxu0 0.0
    %673 = vmatpush1.xpose.msra.mxu0 0.0
    %674 = vmatprep.subr.mxu0 0.0
    %675 = vmatpush1.xpose.msra.mxu0 0.0
    %676 = vmatprep.subr.mxu0 0.0
    %677 = vmatpush1.xpose.msra.mxu0 0.0
    %678 = vmatprep.subr.mxu0 0.0
    %679 = vmatpush1.xpose.msra.mxu0 0.0
    %680 = vmatprep.subr.mxu0 0.0
    %681 = vmatpush1.xpose.msra.mxu0 0.0
    %682 = vmatprep.subr.mxu0 0.0
    %683 = vmatpush1.xpose.msra.mxu0 0.0
    %684 = vmatprep.subr.mxu0 0.0
    %685 = vmatpush1.xpose.msra.mxu0 0.0
    %686 = vmatprep.subr.mxu0 0.0
    %687 = vmatpush1.xpose.msra.mxu0 0.0
    %688 = vmatprep.subr.mxu0 0.0
    %689 = vmatpush1.xpose.msra.mxu0 0.0
    %690 = vmatprep.subr.mxu0 0.0
    %691 = vmatpush1.xpose.msra.mxu0 0.0
    %692 = vmatprep.subr.mxu0 0.0
    %693 = vmatpush1.xpose.msra.mxu0 0.0
    %694 = vmatprep.subr.mxu0 0.0
    %695 = vmatpush1.xpose.msra.mxu0 0.0
    %696 = vmatprep.subr.mxu0 0.0
    %697 = vmatpush1.xpose.msra.mxu0 0.0
    %698 = vmatprep.subr.mxu0 0.0
    %699 = vmatpush1.xpose.msra.mxu0 0.0
    %700 = vmatprep.subr.mxu0 0.0
    %701 = vmatpush1.xpose.msra.mxu0 0.0
    %702 = vmatprep.mubr.f32.mxu0 0.0
    %703 = vmatmul.mubr.f32.gmra.mrb[0].mxu0 %v630
    %v704 = vpop.f32.mrb[0].mxu0
    %v705 = vadd.f32 0.0, %v704
    %v706 = vpop.f32.mrb[0].mxu0
    %707 = vmatprep.mubr.f32.mxu0 0.0
    %708 = vmatmul.mubr.f32.gmra.mrb[0].mxu0 %v632
    %v709 = vpop.f32.mrb[0].mxu0
    %v710 = vadd.f32 0.0, %v709
    %v711 = vpop.f32.mrb[0].mxu0
    %712 = vdwg.mxu0
    %v713 = vmul.f32 %v705, 0.35355338
    %v714 = vmul.f32 %v710, 0.35355338
    %v715 = vadd.f32 %v713, %v279
    %v716 = vadd.f32 %v714, %v280
    %v717 = vsel %vm194, %v715, -inf
    %718 = vmax.xlane.f32.xlu0 %v717
    %v719 = vpop.xlane.xlu0 %718
    %v720 = vsel %vm194, %v716, -inf
    %721 = vmax.xlane.f32.xlu0 %v720
    %v722 = vpop.xlane.xlu0 %721
    %v723 = vsub.f32 %v715, %v719
    %v724 = vsub.f32 %v716, %v722
    %v725 = vmul.f32 %v723, 1.442695
    %v726 = vpow.pop %v725
    %v727 = vmul.f32 %v724, 1.442695
    %v728 = vpow.pop %v727
    %v729 = vsel %vm194, %v726, 0.0
    %730 = vadd.xlane.f32.xlu0 %v729
    %v731 = vpop.xlane.xlu0 %730
    %v732 = vsel %vm194, %v728, 0.0
    %733 = vadd.xlane.f32.xlu0 %v732
    %v734 = vpop.xlane.xlu0 %733
    %v735 = vrcp.pop %v731
    %v736 = vrcp.pop %v734
    %v737 = vmul.f32 %v726, %v735
    %v738 = vmul.f32 %v728, %v736
    %739 = vrot.lane.b32.xlu0 %v411, 56
    %v740 = vpop.permute.xlu0 %739
    %741 = vrot.lane.b32.xlu0 %v416, 56
    %v742 = vpop.permute.xlu0 %741
    %v746 = vsel %vm194, %v737, 0
    %v749 = vsel %vm194, %v738, 0
    %751 = vmatprep.subr.mxu0 0.0
    %752 = vmatpush1.msra.mxu0 %v740
    %753 = vmatprep.subr.mxu0 0.0
    %754 = vmatpush1.msra.mxu0 %v742
    %755 = vmatprep.subr.mxu0 0.0
    %756 = vmatpush1.msra.mxu0 0.0
    %757 = vmatprep.subr.mxu0 0.0
    %758 = vmatpush1.msra.mxu0 0.0
    %759 = vmatprep.subr.mxu0 0.0
    %760 = vmatpush1.msra.mxu0 0.0
    %761 = vmatprep.subr.mxu0 0.0
    %762 = vmatpush1.msra.mxu0 0.0
    %763 = vmatprep.subr.mxu0 0.0
    %764 = vmatpush1.msra.mxu0 0.0
    %765 = vmatprep.subr.mxu0 0.0
    %766 = vmatpush1.msra.mxu0 0.0
    %767 = vmatprep.subr.mxu0 0.0
    %768 = vmatpush1.msra.mxu0 0.0
    %769 = vmatprep.subr.mxu0 0.0
    %770 = vmatpush1.msra.mxu0 0.0
    %771 = vmatprep.subr.mxu0 0.0
    %772 = vmatpush1.msra.mxu0 0.0
    %773 = vmatprep.subr.mxu0 0.0
    %774 = vmatpush1.msra.mxu0 0.0
    %775 = vmatprep.subr.mxu0 0.0
    %776 = vmatpush1.msra.mxu0 0.0
    %777 = vmatprep.subr.mxu0 0.0
    %778 = vmatpush1.msra.mxu0 0.0
    %779 = vmatprep.subr.mxu0 0.0
    %780 = vmatpush1.msra.mxu0 0.0
    %781 = vmatprep.subr.mxu0 0.0
    %782 = vmatpush1.msra.mxu0 0.0
    %783 = vmatprep.subr.mxu0 0.0
    %784 = vmatpush1.msra.mxu0 0.0
    %785 = vmatprep.subr.mxu0 0.0
    %786 = vmatpush1.msra.mxu0 0.0
    %787 = vmatprep.subr.mxu0 0.0
    %788 = vmatpush1.msra.mxu0 0.0
    %789 = vmatprep.subr.mxu0 0.0
    %790 = vmatpush1.msra.mxu0 0.0
    %791 = vmatprep.subr.mxu0 0.0
    %792 = vmatpush1.msra.mxu0 0.0
    %793 = vmatprep.subr.mxu0 0.0
    %794 = vmatpush1.msra.mxu0 0.0
    %795 = vmatprep.subr.mxu0 0.0
    %796 = vmatpush1.msra.mxu0 0.0
    %797 = vmatprep.subr.mxu0 0.0
    %798 = vmatpush1.msra.mxu0 0.0
    %799 = vmatprep.subr.mxu0 0.0
    %800 = vmatpush1.msra.mxu0 0.0
    %801 = vmatprep.subr.mxu0 0.0
    %802 = vmatpush1.msra.mxu0 0.0
    %803 = vmatprep.subr.mxu0 0.0
    %804 = vmatpush1.msra.mxu0 0.0
    %805 = vmatprep.subr.mxu0 0.0
    %806 = vmatpush1.msra.mxu0 0.0
    %807 = vmatprep.subr.mxu0 0.0
    %808 = vmatpush1.msra.mxu0 0.0
    %809 = vmatprep.subr.mxu0 0.0
    %810 = vmatpush1.msra.mxu0 0.0
    %811 = vmatprep.subr.mxu0 0.0
    %812 = vmatpush1.msra.mxu0 0.0
    %813 = vmatprep.subr.mxu0 0.0
    %814 = vmatpush1.msra.mxu0 0.0
    %815 = vmatprep.mubr.f32.mxu0 0.0
    %816 = vmatmul.mubr.f32.gmra.mrb[0].mxu0 %v746
    %v817 = vpop.f32.mrb[0].mxu0
    %v818 = vadd.f32 0.0, %v817
    %v819 = vpop.f32.mrb[0].mxu0
    %820 = vmatprep.mubr.f32.mxu0 0.0
    %821 = vmatmul.mubr.f32.gmra.mrb[0].mxu0 %v749
    %v822 = vpop.f32.mrb[0].mxu0
    %v823 = vadd.f32 0.0, %v822
    %v824 = vpop.f32.mrb[0].mxu0
    %825 = vdwg.mxu0
    %826 = vrot.lane.b32.xlu0 %v411, 112
    %v827 = vpop.permute.xlu0 %826
    %828 = vrot.lane.b32.xlu0 %v416, 112
    %v829 = vpop.permute.xlu0 %828
    %830 = vrot.lane.b32.xlu0 %v411, 80
    %v831 = vpop.permute.xlu0 %830
    %832 = vrot.lane.b32.xlu0 %v416, 80
    %v833 = vpop.permute.xlu0 %832
    %v834 = vsel %vm425, %v827, 0
    %v836 = vsel %vm425, %v829, 0
    %v838 = vsel %vm425, %v831, 0
    %v840 = vsel %vm425, %v833, 0
    %842 = vmatprep.subr.mxu0 0.0
    %843 = vmatpush1.xpose.msra.mxu0 %v838
    %844 = vmatprep.subr.mxu0 0.0
    %845 = vmatpush1.xpose.msra.mxu0 %v840
    %846 = vmatprep.subr.mxu0 0.0
    %847 = vmatpush1.xpose.msra.mxu0 0.0
    %848 = vmatprep.subr.mxu0 0.0
    %849 = vmatpush1.xpose.msra.mxu0 0.0
    %850 = vmatprep.subr.mxu0 0.0
    %851 = vmatpush1.xpose.msra.mxu0 0.0
    %852 = vmatprep.subr.mxu0 0.0
    %853 = vmatpush1.xpose.msra.mxu0 0.0
    %854 = vmatprep.subr.mxu0 0.0
    %855 = vmatpush1.xpose.msra.mxu0 0.0
    %856 = vmatprep.subr.mxu0 0.0
    %857 = vmatpush1.xpose.msra.mxu0 0.0
    %858 = vmatprep.subr.mxu0 0.0
    %859 = vmatpush1.xpose.msra.mxu0 0.0
    %860 = vmatprep.subr.mxu0 0.0
    %861 = vmatpush1.xpose.msra.mxu0 0.0
    %862 = vmatprep.subr.mxu0 0.0
    %863 = vmatpush1.xpose.msra.mxu0 0.0
    %864 = vmatprep.subr.mxu0 0.0
    %865 = vmatpush1.xpose.msra.mxu0 0.0
    %866 = vmatprep.subr.mxu0 0.0
    %867 = vmatpush1.xpose.msra.mxu0 0.0
    %868 = vmatprep.subr.mxu0 0.0
    %869 = vmatpush1.xpose.msra.mxu0 0.0
    %870 = vmatprep.subr.mxu0 0.0
    %871 = vmatpush1.xpose.msra.mxu0 0.0
    %872 = vmatprep.subr.mxu0 0.0
    %873 = vmatpush1.xpose.msra.mxu0 0.0
    %874 = vmatprep.subr.mxu0 0.0
    %875 = vmatpush1.xpose.msra.mxu0 0.0
    %876 = vmatprep.subr.mxu0 0.0
    %877 = vmatpush1.xpose.msra.mxu0 0.0
    %878 = vmatprep.subr.mxu0 0.0
    %879 = vmatpush1.xpose.msra.mxu0 0.0
    %880 = vmatprep.subr.mxu0 0.0
    %881 = vmatpush1.xpose.msra.mxu0 0.0
    %882 = vmatprep.subr.mxu0 0.0
    %883 = vmatpush1.xpose.msra.mxu0 0.0
    %884 = vmatprep.subr.mxu0 0.0
    %885 = vmatpush1.xpose.msra.mxu0 0.0
    %886 = vmatprep.subr.mxu0 0.0
    %887 = vmatpush1.xpose.msra.mxu0 0.0
    %888 = vmatprep.subr.mxu0 0.0
    %889 = vmatpush1.xpose.msra.mxu0 0.0
    %890 = vmatprep.subr.mxu0 0.0
    %891 = vmatpush1.xpose.msra.mxu0 0.0
    %892 = vmatprep.subr.mxu0 0.0
    %893 = vmatpush1.xpose.msra.mxu0 0.0
    %894 = vmatprep.subr.mxu0 0.0
    %895 = vmatpush1.xpose.msra.mxu0 0.0
    %896 = vmatprep.subr.mxu0 0.0
    %897 = vmatpush1.xpose.msra.mxu0 0.0
    %898 = vmatprep.subr.mxu0 0.0
    %899 = vmatpush1.xpose.msra.mxu0 0.0
    %900 = vmatprep.subr.mxu0 0.0
    %901 = vmatpush1.xpose.msra.mxu0 0.0
    %902 = vmatprep.subr.mxu0 0.0
    %903 = vmatpush1.xpose.msra.mxu0 0.0
    %904 = vmatprep.subr.mxu0 0.0
    %905 = vmatpush1.xpose.msra.mxu0 0.0
    %906 = vmatprep.mubr.f32.mxu0 0.0
    %907 = vmatmul.mubr.f32.gmra.mrb[0].mxu0 %v834
    %v908 = vpop.f32.mrb[0].mxu0
    %v909 = vadd.f32 0.0, %v908
    %v910 = vpop.f32.mrb[0].mxu0
    %911 = vmatprep.mubr.f32.mxu0 0.0
    %912 = vmatmul.mubr.f32.gmra.mrb[0].mxu0 %v836
    %v913 = vpop.f32.mrb[0].mxu0
    %v914 = vadd.f32 0.0, %v913
    %v915 = vpop.f32.mrb[0].mxu0
    %916 = vdwg.mxu0
    %v917 = vmul.f32 %v909, 0.35355338
    %v918 = vmul.f32 %v914, 0.35355338
    %v919 = vadd.f32 %v917, %v279
    %v920 = vadd.f32 %v918, %v280
    %v921 = vsel %vm194, %v919, -inf
    %922 = vmax.xlane.f32.xlu0 %v921
    %v923 = vpop.xlane.xlu0 %922
    %v924 = vsel %vm194, %v920, -inf
    %925 = vmax.xlane.f32.xlu0 %v924
    %v926 = vpop.xlane.xlu0 %925
    %v927 = vsub.f32 %v919, %v923
    %v928 = vsub.f32 %v920, %v926
    %v929 = vmul.f32 %v927, 1.442695
    %v930 = vpow.pop %v929
    %v931 = vmul.f32 %v928, 1.442695
    %v932 = vpow.pop %v931
    %v933 = vsel %vm194, %v930, 0.0
    %934 = vadd.xlane.f32.xlu0 %v933
    %v935 = vpop.xlane.xlu0 %934
    %v936 = vsel %vm194, %v932, 0.0
    %937 = vadd.xlane.f32.xlu0 %v936
    %v938 = vpop.xlane.xlu0 %937
    %v939 = vrcp.pop %v935
    %v940 = vrcp.pop %v938
    %v941 = vmul.f32 %v930, %v939
    %v942 = vmul.f32 %v932, %v940
    %943 = vrot.lane.b32.xlu0 %v411, 48
    %v944 = vpop.permute.xlu0 %943
    %945 = vrot.lane.b32.xlu0 %v416, 48
    %v946 = vpop.permute.xlu0 %945
    %v950 = vsel %vm194, %v941, 0
    %v953 = vsel %vm194, %v942, 0
    %955 = vmatprep.subr.mxu0 0.0
    %956 = vmatpush1.msra.mxu0 %v944
    %957 = vmatprep.subr.mxu0 0.0
    %958 = vmatpush1.msra.mxu0 %v946
    %959 = vmatprep.subr.mxu0 0.0
    %960 = vmatpush1.msra.mxu0 0.0
    %961 = vmatprep.subr.mxu0 0.0
    %962 = vmatpush1.msra.mxu0 0.0
    %963 = vmatprep.subr.mxu0 0.0
    %964 = vmatpush1.msra.mxu0 0.0
    %965 = vmatprep.subr.mxu0 0.0
    %966 = vmatpush1.msra.mxu0 0.0
    %967 = vmatprep.subr.mxu0 0.0
    %968 = vmatpush1.msra.mxu0 0.0
    %969 = vmatprep.subr.mxu0 0.0
    %970 = vmatpush1.msra.mxu0 0.0
    %971 = vmatprep.subr.mxu0 0.0
    %972 = vmatpush1.msra.mxu0 0.0
    %973 = vmatprep.subr.mxu0 0.0
    %974 = vmatpush1.msra.mxu0 0.0
    %975 = vmatprep.subr.mxu0 0.0
    %976 = vmatpush1.msra.mxu0 0.0
    %977 = vmatprep.subr.mxu0 0.0
    %978 = vmatpush1.msra.mxu0 0.0
    %979 = vmatprep.subr.mxu0 0.0
    %980 = vmatpush1.msra.mxu0 0.0
    %981 = vmatprep.subr.mxu0 0.0
    %982 = vmatpush1.msra.mxu0 0.0
    %983 = vmatprep.subr.mxu0 0.0
    %984 = vmatpush1.msra.mxu0 0.0
    %985 = vmatprep.subr.mxu0 0.0
    %986 = vmatpush1.msra.mxu0 0.0
    %987 = vmatprep.subr.mxu0 0.0
    %988 = vmatpush1.msra.mxu0 0.0
    %989 = vmatprep.subr.mxu0 0.0
    %990 = vmatpush1.msra.mxu0 0.0
    %991 = vmatprep.subr.mxu0 0.0
    %992 = vmatpush1.msra.mxu0 0.0
    %993 = vmatprep.subr.mxu0 0.0
    %994 = vmatpush1.msra.mxu0 0.0
    %995 = vmatprep.subr.mxu0 0.0
    %996 = vmatpush1.msra.mxu0 0.0
    %997 = vmatprep.subr.mxu0 0.0
    %998 = vmatpush1.msra.mxu0 0.0
    %999 = vmatprep.subr.mxu0 0.0
    %1000 = vmatpush1.msra.mxu0 0.0
    %1001 = vmatprep.subr.mxu0 0.0
    %1002 = vmatpush1.msra.mxu0 0.0
    %1003 = vmatprep.subr.mxu0 0.0
    %1004 = vmatpush1.msra.mxu0 0.0
    %1005 = vmatprep.subr.mxu0 0.0
    %1006 = vmatpush1.msra.mxu0 0.0
    %1007 = vmatprep.subr.mxu0 0.0
    %1008 = vmatpush1.msra.mxu0 0.0
    %1009 = vmatprep.subr.mxu0 0.0
    %1010 = vmatpush1.msra.mxu0 0.0
    %1011 = vmatprep.subr.mxu0 0.0
    %1012 = vmatpush1.msra.mxu0 0.0
    %1013 = vmatprep.subr.mxu0 0.0
    %1014 = vmatpush1.msra.mxu0 0.0
    %1015 = vmatprep.subr.mxu0 0.0
    %1016 = vmatpush1.msra.mxu0 0.0
    %1017 = vmatprep.subr.mxu0 0.0
    %1018 = vmatpush1.msra.mxu0 0.0
    %1019 = vmatprep.mubr.f32.mxu0 0.0
    %1020 = vmatmul.mubr.f32.gmra.mrb[0].mxu0 %v950
    %v1021 = vpop.f32.mrb[0].mxu0
    %v1022 = vadd.f32 0.0, %v1021
    %v1023 = vpop.f32.mrb[0].mxu0
    %1024 = vmatprep.mubr.f32.mxu0 0.0
    %1025 = vmatmul.mubr.f32.gmra.mrb[0].mxu0 %v953
    %v1026 = vpop.f32.mrb[0].mxu0
    %v1027 = vadd.f32 0.0, %v1026
    %v1028 = vpop.f32.mrb[0].mxu0
    %1029 = vdwg.mxu0
    %1030 = vrot.lane.b32.xlu0 %v411, 104
    %v1031 = vpop.permute.xlu0 %1030
    %1032 = vrot.lane.b32.xlu0 %v416, 104
    %v1033 = vpop.permute.xlu0 %1032
    %1034 = vrot.lane.b32.xlu0 %v411, 72
    %v1035 = vpop.permute.xlu0 %1034
    %1036 = vrot.lane.b32.xlu0 %v416, 72
    %v1037 = vpop.permute.xlu0 %1036
    %v1038 = vsel %vm425, %v1031, 0
    %v1040 = vsel %vm425, %v1033, 0
    %v1042 = vsel %vm425, %v1035, 0
    %v1044 = vsel %vm425, %v1037, 0
    %1046 = vmatprep.subr.mxu0 0.0
    %1047 = vmatpush1.xpose.msra.mxu0 %v1042
    %1048 = vmatprep.subr.mxu0 0.0
    %1049 = vmatpush1.xpose.msra.mxu0 %v1044
    %1050 = vmatprep.subr.mxu0 0.0
    %1051 = vmatpush1.xpose.msra.mxu0 0.0
    %1052 = vmatprep.subr.mxu0 0.0
    %1053 = vmatpush1.xpose.msra.mxu0 0.0
    %1054 = vmatprep.subr.mxu0 0.0
    %1055 = vmatpush1.xpose.msra.mxu0 0.0
    %1056 = vmatprep.subr.mxu0 0.0
    %1057 = vmatpush1.xpose.msra.mxu0 0.0
    %1058 = vmatprep.subr.mxu0 0.0
    %1059 = vmatpush1.xpose.msra.mxu0 0.0
    %1060 = vmatprep.subr.mxu0 0.0
    %1061 = vmatpush1.xpose.msra.mxu0 0.0
    %1062 = vmatprep.subr.mxu0 0.0
    %1063 = vmatpush1.xpose.msra.mxu0 0.0
    %1064 = vmatprep.subr.mxu0 0.0
    %1065 = vmatpush1.xpose.msra.mxu0 0.0
    %1066 = vmatprep.subr.mxu0 0.0
    %1067 = vmatpush1.xpose.msra.mxu0 0.0
    %1068 = vmatprep.subr.mxu0 0.0
    %1069 = vmatpush1.xpose.msra.mxu0 0.0
    %1070 = vmatprep.subr.mxu0 0.0
    %1071 = vmatpush1.xpose.msra.mxu0 0.0
    %1072 = vmatprep.subr.mxu0 0.0
    %1073 = vmatpush1.xpose.msra.mxu0 0.0
    %1074 = vmatprep.subr.mxu0 0.0
    %1075 = vmatpush1.xpose.msra.mxu0 0.0
    %1076 = vmatprep.subr.mxu0 0.0
    %1077 = vmatpush1.xpose.msra.mxu0 0.0
    %1078 = vmatprep.subr.mxu0 0.0
    %1079 = vmatpush1.xpose.msra.mxu0 0.0
    %1080 = vmatprep.subr.mxu0 0.0
    %1081 = vmatpush1.xpose.msra.mxu0 0.0
    %1082 = vmatprep.subr.mxu0 0.0
    %1083 = vmatpush1.xpose.msra.mxu0 0.0
    %1084 = vmatprep.subr.mxu0 0.0
    %1085 = vmatpush1.xpose.msra.mxu0 0.0
    %1086 = vmatprep.subr.mxu0 0.0
    %1087 = vmatpush1.xpose.msra.mxu0 0.0
    %1088 = vmatprep.subr.mxu0 0.0
    %1089 = vmatpush1.xpose.msra.mxu0 0.0
    %1090 = vmatprep.subr.mxu0 0.0
    %1091 = vmatpush1.xpose.msra.mxu0 0.0
    %1092 = vmatprep.subr.mxu0 0.0
    %1093 = vmatpush1.xpose.msra.mxu0 0.0
    %1094 = vmatprep.subr.mxu0 0.0
    %1095 = vmatpush1.xpose.msra.mxu0 0.0
    %1096 = vmatprep.subr.mxu0 0.0
    %1097 = vmatpush1.xpose.msra.mxu0 0.0
    %1098 = vmatprep.subr.mxu0 0.0
    %1099 = vmatpush1.xpose.msra.mxu0 0.0
    %1100 = vmatprep.subr.mxu0 0.0
    %1101 = vmatpush1.xpose.msra.mxu0 0.0
    %1102 = vmatprep.subr.mxu0 0.0
    %1103 = vmatpush1.xpose.msra.mxu0 0.0
    %1104 = vmatprep.subr.mxu0 0.0
    %1105 = vmatpush1.xpose.msra.mxu0 0.0
    %1106 = vmatprep.subr.mxu0 0.0
    %1107 = vmatpush1.xpose.msra.mxu0 0.0
    %1108 = vmatprep.subr.mxu0 0.0
    %1109 = vmatpush1.xpose.msra.mxu0 0.0
    %1110 = vmatprep.mubr.f32.mxu0 0.0
    %1111 = vmatmul.mubr.f32.gmra.mrb[0].mxu0 %v1038
    %v1112 = vpop.f32.mrb[0].mxu0
    %v1113 = vadd.f32 0.0, %v1112
    %v1114 = vpop.f32.mrb[0].mxu0
    %1115 = vmatprep.mubr.f32.mxu0 0.0
    %1116 = vmatmul.mubr.f32.gmra.mrb[0].mxu0 %v1040
    %v1117 = vpop.f32.mrb[0].mxu0
    %v1118 = vadd.f32 0.0, %v1117
    %v1119 = vpop.f32.mrb[0].mxu0
    %1120 = vdwg.mxu0
    %v1121 = vmul.f32 %v1113, 0.35355338
    %v1122 = vmul.f32 %v1118, 0.35355338
    %v1123 = vadd.f32 %v1121, %v279
    %v1124 = vadd.f32 %v1122, %v280
    %v1125 = vsel %vm194, %v1123, -inf
    %1126 = vmax.xlane.f32.xlu0 %v1125
    %v1127 = vpop.xlane.xlu0 %1126
    %v1128 = vsel %vm194, %v1124, -inf
    %1129 = vmax.xlane.f32.xlu0 %v1128
    %v1130 = vpop.xlane.xlu0 %1129
    %v1131 = vsub.f32 %v1123, %v1127
    %v1132 = vsub.f32 %v1124, %v1130
    %v1133 = vmul.f32 %v1131, 1.442695
    %v1134 = vpow.pop %v1133
    %v1135 = vmul.f32 %v1132, 1.442695
    %v1136 = vpow.pop %v1135
    %v1137 = vsel %vm194, %v1134, 0.0
    %1138 = vadd.xlane.f32.xlu0 %v1137
    %v1139 = vpop.xlane.xlu0 %1138
    %v1140 = vsel %vm194, %v1136, 0.0
    %1141 = vadd.xlane.f32.xlu0 %v1140
    %v1142 = vpop.xlane.xlu0 %1141
    %v1143 = vrcp.pop %v1139
    %v1144 = vrcp.pop %v1142
    %v1145 = vmul.f32 %v1134, %v1143
    %v1146 = vmul.f32 %v1136, %v1144
    %1147 = vrot.lane.b32.xlu0 %v411, 40
    %v1148 = vpop.permute.xlu0 %1147
    %1149 = vrot.lane.b32.xlu0 %v416, 40
    %v1150 = vpop.permute.xlu0 %1149
    %v1154 = vsel %vm194, %v1145, 0
    %v1157 = vsel %vm194, %v1146, 0
    %1159 = vmatprep.subr.mxu0 0.0
    %1160 = vmatpush1.msra.mxu0 %v1148
    %1161 = vmatprep.subr.mxu0 0.0
    %1162 = vmatpush1.msra.mxu0 %v1150
    %1163 = vmatprep.subr.mxu0 0.0
    %1164 = vmatpush1.msra.mxu0 0.0
    %1165 = vmatprep.subr.mxu0 0.0
    %1166 = vmatpush1.msra.mxu0 0.0
    %1167 = vmatprep.subr.mxu0 0.0
    %1168 = vmatpush1.msra.mxu0 0.0
    %1169 = vmatprep.subr.mxu0 0.0
    %1170 = vmatpush1.msra.mxu0 0.0
    %1171 = vmatprep.subr.mxu0 0.0
    %1172 = vmatpush1.msra.mxu0 0.0
    %1173 = vmatprep.subr.mxu0 0.0
    %1174 = vmatpush1.msra.mxu0 0.0
    %1175 = vmatprep.subr.mxu0 0.0
    %1176 = vmatpush1.msra.mxu0 0.0
    %1177 = vmatprep.subr.mxu0 0.0
    %1178 = vmatpush1.msra.mxu0 0.0
    %1179 = vmatprep.subr.mxu0 0.0
    %1180 = vmatpush1.msra.mxu0 0.0
    %1181 = vmatprep.subr.mxu0 0.0
    %1182 = vmatpush1.msra.mxu0 0.0
    %1183 = vmatprep.subr.mxu0 0.0
    %1184 = vmatpush1.msra.mxu0 0.0
    %1185 = vmatprep.subr.mxu0 0.0
    %1186 = vmatpush1.msra.mxu0 0.0
    %1187 = vmatprep.subr.mxu0 0.0
    %1188 = vmatpush1.msra.mxu0 0.0
    %1189 = vmatprep.subr.mxu0 0.0
    %1190 = vmatpush1.msra.mxu0 0.0
    %1191 = vmatprep.subr.mxu0 0.0
    %1192 = vmatpush1.msra.mxu0 0.0
    %1193 = vmatprep.subr.mxu0 0.0
    %1194 = vmatpush1.msra.mxu0 0.0
    %1195 = vmatprep.subr.mxu0 0.0
    %1196 = vmatpush1.msra.mxu0 0.0
    %1197 = vmatprep.subr.mxu0 0.0
    %1198 = vmatpush1.msra.mxu0 0.0
    %1199 = vmatprep.subr.mxu0 0.0
    %1200 = vmatpush1.msra.mxu0 0.0
    %1201 = vmatprep.subr.mxu0 0.0
    %1202 = vmatpush1.msra.mxu0 0.0
    %1203 = vmatprep.subr.mxu0 0.0
    %1204 = vmatpush1.msra.mxu0 0.0
    %1205 = vmatprep.subr.mxu0 0.0
    %1206 = vmatpush1.msra.mxu0 0.0
    %1207 = vmatprep.subr.mxu0 0.0
    %1208 = vmatpush1.msra.mxu0 0.0
    %1209 = vmatprep.subr.mxu0 0.0
    %1210 = vmatpush1.msra.mxu0 0.0
    %1211 = vmatprep.subr.mxu0 0.0
    %1212 = vmatpush1.msra.mxu0 0.0
    %1213 = vmatprep.subr.mxu0 0.0
    %1214 = vmatpush1.msra.mxu0 0.0
    %1215 = vmatprep.subr.mxu0 0.0
    %1216 = vmatpush1.msra.mxu0 0.0
    %1217 = vmatprep.subr.mxu0 0.0
    %1218 = vmatpush1.msra.mxu0 0.0
    %1219 = vmatprep.subr.mxu0 0.0
    %1220 = vmatpush1.msra.mxu0 0.0
    %1221 = vmatprep.subr.mxu0 0.0
    %1222 = vmatpush1.msra.mxu0 0.0
    %1223 = vmatprep.mubr.f32.mxu0 0.0
    %1224 = vmatmul.mubr.f32.gmra.mrb[0].mxu0 %v1154
    %v1225 = vpop.f32.mrb[0].mxu0
    %v1226 = vadd.f32 0.0, %v1225
    %v1227 = vpop.f32.mrb[0].mxu0
    %1228 = vmatprep.mubr.f32.mxu0 0.0
    %1229 = vmatmul.mubr.f32.gmra.mrb[0].mxu0 %v1157
    %v1230 = vpop.f32.mrb[0].mxu0
    %v1231 = vadd.f32 0.0, %v1230
    %v1232 = vpop.f32.mrb[0].mxu0
    %1233 = vdwg.mxu0
    %1236 = vrot.lane.b32.xlu0 %v818, 8
    %v1237 = vpop.permute.xlu0 %1236
    %1238 = vrot.lane.b32.xlu0 %v823, 8
    %v1239 = vpop.permute.xlu0 %1238
    %1244 = vrot.lane.b32.xlu0 %v1022, 16
    %v1245 = vpop.permute.xlu0 %1244
    %1246 = vrot.lane.b32.xlu0 %v1027, 16
    %v1247 = vpop.permute.xlu0 %1246
    %1252 = vrot.lane.b32.xlu0 %v1226, 24
    %v1253 = vpop.permute.xlu0 %1252
    %1254 = vrot.lane.b32.xlu0 %v1231, 24
    %v1255 = vpop.permute.xlu0 %1254
    %v1258 = vsel %vm425, %v614, %v1237
    %v1259 = vsel %vm425, %v619, %v1239
    %v1260 = vsel %vm194, %v1258, %v1245
    %v1261 = vsel %vm194, %v1259, %v1247
    %vm1262 = vcmask 195584
    %v1263 = vsel %vm1262, %v1260, %v1253
    %v1264 = vsel %vm1262, %v1261, %v1255
    %v1265 = vld [vmem:[%s19] sm:$0xff]
    %v1266 = vld [vmem:[%s19 + $0x8] sm:$0xff]
    %v1267 = vld [vmem:[%s19 + $0x10] sm:$0xff]
    %v1268 = vld [vmem:[%s19 + $0x18] sm:$0xff]
    %v1270 = vsel %vm283, %v1263, 0
    %v1273 = vsel %vm283, %v1264, 0
    %1275 = vmatprep.subr.mxu0 0.0
    %1276 = vmatpush1.msra.mxu0 %v1265
    %1277 = vmatprep.subr.mxu0 0.0
    %1278 = vmatpush1.msra.mxu0 %v1266
    %1279 = vmatprep.subr.mxu0 0.0
    %1280 = vmatpush1.msra.mxu0 %v1267
    %1281 = vmatprep.subr.mxu0 0.0
    %1282 = vmatpush1.msra.mxu0 %v1268
    %1283 = vmatprep.subr.mxu0 0.0
    %1284 = vmatpush1.msra.mxu0 0.0
    %1285 = vmatprep.subr.mxu0 0.0
    %1286 = vmatpush1.msra.mxu0 0.0
    %1287 = vmatprep.subr.mxu0 0.0
    %1288 = vmatpush1.msra.mxu0 0.0
    %1289 = vmatprep.subr.mxu0 0.0
    %1290 = vmatpush1.msra.mxu0 0.0
    %1291 = vmatprep.subr.mxu0 0.0
    %1292 = vmatpush1.msra.mxu0 0.0
    %1293 = vmatprep.subr.mxu0 0.0
    %1294 = vmatpush1.msra.mxu0 0.0
    %1295 = vmatprep.subr.mxu0 0.0
    %1296 = vmatpush1.msra.mxu0 0.0
    %1297 = vmatprep.subr.mxu0 0.0
    %1298 = vmatpush1.msra.mxu0 0.0
    %1299 = vmatprep.subr.mxu0 0.0
    %1300 = vmatpush1.msra.mxu0 0.0
    %1301 = vmatprep.subr.mxu0 0.0
    %1302 = vmatpush1.msra.mxu0 0.0
    %1303 = vmatprep.subr.mxu0 0.0
    %1304 = vmatpush1.msra.mxu0 0.0
    %1305 = vmatprep.subr.mxu0 0.0
    %1306 = vmatpush1.msra.mxu0 0.0
    %1307 = vmatprep.subr.mxu0 0.0
    %1308 = vmatpush1.msra.mxu0 0.0
    %1309 = vmatprep.subr.mxu0 0.0
    %1310 = vmatpush1.msra.mxu0 0.0
    %1311 = vmatprep.subr.mxu0 0.0
    %1312 = vmatpush1.msra.mxu0 0.0
    %1313 = vmatprep.subr.mxu0 0.0
    %1314 = vmatpush1.msra.mxu0 0.0
    %1315 = vmatprep.subr.mxu0 0.0
    %1316 = vmatpush1.msra.mxu0 0.0
    %1317 = vmatprep.subr.mxu0 0.0
    %1318 = vmatpush1.msra.mxu0 0.0
    %1319 = vmatprep.subr.mxu0 0.0
    %1320 = vmatpush1.msra.mxu0 0.0
    %1321 = vmatprep.subr.mxu0 0.0
    %1322 = vmatpush1.msra.mxu0 0.0
    %1323 = vmatprep.subr.mxu0 0.0
    %1324 = vmatpush1.msra.mxu0 0.0
    %1325 = vmatprep.subr.mxu0 0.0
    %1326 = vmatpush1.msra.mxu0 0.0
    %1327 = vmatprep.subr.mxu0 0.0
    %1328 = vmatpush1.msra.mxu0 0.0
    %1329 = vmatprep.subr.mxu0 0.0
    %1330 = vmatpush1.msra.mxu0 0.0
    %1331 = vmatprep.subr.mxu0 0.0
    %1332 = vmatpush1.msra.mxu0 0.0
    %1333 = vmatprep.subr.mxu0 0.0
    %1334 = vmatpush1.msra.mxu0 0.0
    %1335 = vmatprep.subr.mxu0 0.0
    %1336 = vmatpush1.msra.mxu0 0.0
    %1337 = vmatprep.subr.mxu0 0.0
    %1338 = vmatpush1.msra.mxu0 0.0
    %1339 = vmatprep.mubr.f32.mxu0 0.0
    %1340 = vmatmul.mubr.f32.gmra.mrb[0].mxu0 %v1270
    %v1341 = vpop.f32.mrb[0].mxu0
    %v1342 = vadd.f32 0.0, %v1341
    %v1343 = vpop.f32.mrb[0].mxu0
    %1344 = vmatprep.mubr.f32.mxu0 0.0
    %1345 = vmatmul.mubr.f32.gmra.mrb[0].mxu0 %v1273
    %v1346 = vpop.f32.mrb[0].mxu0
    %v1347 = vadd.f32 0.0, %v1346
    %v1348 = vpop.f32.mrb[0].mxu0
    %1349 = vdwg.mxu0
    %v1350 = vadd.f32 %v277, %v1342
    %v1351 = vadd.f32 %v278, %v1347
    %v1352 = vld [vmem:[%s21] sm:$0x1]
    %v1354 = vlaneseq
    %v1355 = vshrl.u32 %v1354, 7
    %v1356 = vsub.s32 0, %v1355
    %v1357 = vrot.slane %v1352, %v1356
    %v1359 = vadd.f32 %v1350, %v1357
    %v1360 = vadd.f32 %v1351, %v1357
    %v1361 = vld [vmem:[%s23] sm:$0x1]
    %v1362 = vld [vmem:[%s25] sm:$0x1]
    %v1363 = vsel %vm283, %v1359, 0.0
    %1364 = vadd.xlane.f32.xlu0 %v1363
    %v1365 = vpop.xlane.xlu0 %1364
    %v1366 = vsel %vm283, %v1360, 0.0
    %1367 = vadd.xlane.f32.xlu0 %v1366
    %v1368 = vpop.xlane.xlu0 %1367
    %v1369 = vmul.f32 %v1365, %v290
    %v1370 = vmul.f32 %v1368, %v290
    %v1371 = vsub.f32 %v1359, %v1369
    %v1372 = vsub.f32 %v1360, %v1370
    %v1373 = vmul.f32 %v1371, %v1371
    %v1374 = vmul.f32 %v1372, %v1372
    %v1375 = vsel %vm283, %v1373, 0.0
    %1376 = vadd.xlane.f32.xlu0 %v1375
    %v1377 = vpop.xlane.xlu0 %1376
    %v1378 = vsel %vm283, %v1374, 0.0
    %1379 = vadd.xlane.f32.xlu0 %v1378
    %v1380 = vpop.xlane.xlu0 %1379
    %v1381 = vmul.f32 %v1377, %v290
    %v1382 = vmul.f32 %v1380, %v290
    %v1383 = vadd.f32 %v1381, 1e-05
    %v1384 = vadd.f32 %v1382, 1e-05
    %v1385 = vrsqrt.pop %v1383
    %v1386 = vrsqrt.pop %v1384
    %v1387 = vmul.f32 %v1371, %v1385
    %v1388 = vmul.f32 %v1372, %v1386
    %v1390 = vlaneseq
    %v1391 = vshrl.u32 %v1390, 7
    %v1392 = vsub.s32 0, %v1391
    %v1393 = vrot.slane %v1361, %v1392
    %v1395 = vmul.f32 %v1387, %v1393
    %v1396 = vmul.f32 %v1388, %v1393
    %v1398 = vlaneseq
    %v1399 = vshrl.u32 %v1398, 7
    %v1400 = vsub.s32 0, %v1399
    %v1401 = vrot.slane %v1362, %v1400
    %v1403 = vadd.f32 %v1395, %v1401
    %v1404 = vadd.f32 %v1396, %v1401
    %v1405 = vld [vmem:[%s27] sm:$0xff]
    %v1406 = vld [vmem:[%s27 + $0x8] sm:$0xff]
    %v1407 = vld [vmem:[%s27 + $0x10] sm:$0xff]
    %v1408 = vld [vmem:[%s27 + $0x18] sm:$0xff]
    %v1409 = vld [vmem:[#allocation3] sm:$0x1]
    %v1411 = vlaneseq
    %v1412 = vshrl.u32 %v1411, 7
    %v1413 = vsub.s32 0, %v1412
    %v1414 = vrot.slane %v1409, %v1413
    %v1417 = vsel %vm283, %v1403, 0
    %v1420 = vsel %vm283, %v1404, 0
    %1422 = vmatprep.subr.mxu0 0.0
    %1423 = vmatpush1.msra.mxu0 %v1405
    %1424 = vmatprep.subr.mxu0 0.0
    %1425 = vmatpush1.msra.mxu0 %v1406
    %1426 = vmatprep.subr.mxu0 0.0
    %1427 = vmatpush1.msra.mxu0 %v1407
    %1428 = vmatprep.subr.mxu0 0.0
    %1429 = vmatpush1.msra.mxu0 %v1408
    %1430 = vmatprep.subr.mxu0 0.0
    %1431 = vmatpush1.msra.mxu0 0.0
    %1432 = vmatprep.subr.mxu0 0.0
    %1433 = vmatpush1.msra.mxu0 0.0
    %1434 = vmatprep.subr.mxu0 0.0
    %1435 = vmatpush1.msra.mxu0 0.0
    %1436 = vmatprep.subr.mxu0 0.0
    %1437 = vmatpush1.msra.mxu0 0.0
    %1438 = vmatprep.subr.mxu0 0.0
    %1439 = vmatpush1.msra.mxu0 0.0
    %1440 = vmatprep.subr.mxu0 0.0
    %1441 = vmatpush1.msra.mxu0 0.0
    %1442 = vmatprep.subr.mxu0 0.0
    %1443 = vmatpush1.msra.mxu0 0.0
    %1444 = vmatprep.subr.mxu0 0.0
    %1445 = vmatpush1.msra.mxu0 0.0
    %1446 = vmatprep.subr.mxu0 0.0
    %1447 = vmatpush1.msra.mxu0 0.0
    %1448 = vmatprep.subr.mxu0 0.0
    %1449 = vmatpush1.msra.mxu0 0.0
    %1450 = vmatprep.subr.mxu0 0.0
    %1451 = vmatpush1.msra.mxu0 0.0
    %1452 = vmatprep.subr.mxu0 0.0
    %1453 = vmatpush1.msra.mxu0 0.0
    %1454 = vmatprep.subr.mxu0 0.0
    %1455 = vmatpush1.msra.mxu0 0.0
    %1456 = vmatprep.subr.mxu0 0.0
    %1457 = vmatpush1.msra.mxu0 0.0
    %1458 = vmatprep.subr.mxu0 0.0
    %1459 = vmatpush1.msra.mxu0 0.0
    %1460 = vmatprep.subr.mxu0 0.0
    %1461 = vmatpush1.msra.mxu0 0.0
    %1462 = vmatprep.subr.mxu0 0.0
    %1463 = vmatpush1.msra.mxu0 0.0
    %1464 = vmatprep.subr.mxu0 0.0
    %1465 = vmatpush1.msra.mxu0 0.0
    %1466 = vmatprep.subr.mxu0 0.0
    %1467 = vmatpush1.msra.mxu0 0.0
    %1468 = vmatprep.subr.mxu0 0.0
    %1469 = vmatpush1.msra.mxu0 0.0
    %1470 = vmatprep.subr.mxu0 0.0
    %1471 = vmatpush1.msra.mxu0 0.0
    %1472 = vmatprep.subr.mxu0 0.0
    %1473 = vmatpush1.msra.mxu0 0.0
    %1474 = vmatprep.subr.mxu0 0.0
    %1475 = vmatpush1.msra.mxu0 0.0
    %1476 = vmatprep.subr.mxu0 0.0
    %1477 = vmatpush1.msra.mxu0 0.0
    %1478 = vmatprep.subr.mxu0 0.0
    %1479 = vmatpush1.msra.mxu0 0.0
    %1480 = vmatprep.subr.mxu0 0.0
    %1481 = vmatpush1.msra.mxu0 0.0
    %1482 = vmatprep.subr.mxu0 0.0
    %1483 = vmatpush1.msra.mxu0 0.0
    %1484 = vmatprep.subr.mxu0 0.0
    %1485 = vmatpush1.msra.mxu0 0.0
    %1486 = vmatprep.mubr.f32.mxu0 0.0
    %1487 = vmatmul.mubr.f32.gmra.mrb[0].mxu0 %v1417
    %v1488 = vpop.f32.mrb[0].mxu0
    %v1489 = vadd.f32 %v1414, %v1488
    %v1490 = vpop.f32.mrb[0].mxu0
    %1491 = vmatprep.mubr.f32.mxu0 0.0
    %1492 = vmatmul.mubr.f32.gmra.mrb[0].mxu0 %v1420
    %v1493 = vpop.f32.mrb[0].mxu0
    %v1494 = vadd.f32 %v1414, %v1493
    %v1495 = vpop.f32.mrb[0].mxu0
    %1496 = vdwg.mxu0
    %v1497 = vmul.f32 %v1489, 0.5
    %v1498 = vmul.f32 %v1494, 0.5
    %v1499 = vmul.f32 %v1489, 0.70710677
    %v1500 = vmul.f32 %v1494, 0.70710677
    %vm1501 = vcmp.ge.f32.partialorder %v1499, 0.0
    %vm1502 = vcmp.ge.f32.partialorder %v1500, 0.0
    %v1503 = vsel %vm1501, 1.0, -1.0
    %v1504 = vsel %vm1502, 1.0, -1.0
    %v1505 = vand.u32 2147483647, %v1499
    %v1506 = vand.u32 2147483647, %v1500
    %v1507 = vmul.f32 %v1505, 0.3275911
    %v1508 = vmul.f32 %v1506, 0.3275911
    %v1509 = vadd.f32 %v1507, 1.0
    %v1510 = vadd.f32 %v1508, 1.0
    %v1511 = vrcp.pop %v1509
    %v1512 = vmul.f32 1.0, %v1511
    %v1513 = vrcp.pop %v1510
    %v1514 = vmul.f32 1.0, %v1513
    %v1515 = vmul.f32 %v1512, 1.0614054
    %v1516 = vmul.f32 %v1514, 1.0614054
    %v1517 = vadd.f32 %v1515, -1.4531521
    %v1518 = vadd.f32 %v1516, -1.4531521
    %v1519 = vmul.f32 %v1517, %v1512
    %v1520 = vmul.f32 %v1518, %v1514
    %v1521 = vadd.f32 %v1519, 1.4214138
    %v1522 = vadd.f32 %v1520, 1.4214138
    %v1523 = vmul.f32 %v1521, %v1512
    %v1524 = vmul.f32 %v1522, %v1514
    %v1525 = vadd.f32 %v1523, -0.28449672
    %v1526 = vadd.f32 %v1524, -0.28449672
    %v1527 = vmul.f32 %v1525, %v1512
    %v1528 = vmul.f32 %v1526, %v1514
    %v1529 = vadd.f32 %v1527, 0.2548296
    %v1530 = vadd.f32 %v1528, 0.2548296
    %v1531 = vmul.f32 %v1529, %v1512
    %v1532 = vmul.f32 %v1530, %v1514
    %v1533 = vsub.f32 0.0, %v1505
    %v1534 = vsub.f32 0.0, %v1506
    %v1535 = vmul.f32 %v1533, %v1505
    %v1536 = vmul.f32 %v1534, %v1506
    %v1537 = vmul.f32 %v1535, 1.442695
    %v1538 = vpow.pop %v1537
    %v1539 = vmul.f32 %v1536, 1.442695
    %v1540 = vpow.pop %v1539
    %v1541 = vmul.f32 %v1531, %v1538
    %v1542 = vmul.f32 %v1532, %v1540
    %v1543 = vsub.f32 1.0, %v1541
    %v1544 = vsub.f32 1.0, %v1542
    %v1545 = vmul.f32 %v1503, %v1543
    %v1546 = vmul.f32 %v1504, %v1544
    %v1547 = vadd.f32 %v1545, 1.0
    %v1548 = vadd.f32 %v1546, 1.0
    %v1549 = vmul.f32 %v1497, %v1547
    %v1550 = vmul.f32 %v1498, %v1548
    %v1551 = vld [vmem:[%s31] sm:$0xff]
    %v1552 = vld [vmem:[%s31 + $0x8] sm:$0xff]
    %v1553 = vld [vmem:[%s31 + $0x10] sm:$0xff]
    %v1554 = vld [vmem:[%s31 + $0x18] sm:$0xff]
    %v1555 = vld [vmem:[%s31 + $0x20] sm:$0xff]
    %v1556 = vld [vmem:[%s31 + $0x28] sm:$0xff]
    %v1557 = vld [vmem:[%s31 + $0x30] sm:$0xff]
    %v1558 = vld [vmem:[%s31 + $0x38] sm:$0xff]
    %v1559 = vld [vmem:[%s31 + $0x40] sm:$0xff]
    %v1560 = vld [vmem:[%s31 + $0x48] sm:$0xff]
    %v1561 = vld [vmem:[%s31 + $0x50] sm:$0xff]
    %v1562 = vld [vmem:[%s31 + $0x58] sm:$0xff]
    %v1563 = vld [vmem:[%s31 + $0x60] sm:$0xff]
    %v1564 = vld [vmem:[%s31 + $0x68] sm:$0xff]
    %v1565 = vld [vmem:[%s31 + $0x70] sm:$0xff]
    %v1566 = vld [vmem:[%s31 + $0x78] sm:$0xff]
    %1567 = vmatprep.subr.mxu0 0.0
    %1568 = vmatpush1.msra.mxu0 %v1551
    %1569 = vmatprep.subr.mxu0 0.0
    %1570 = vmatpush1.msra.mxu0 %v1552
    %1571 = vmatprep.subr.mxu0 0.0
    %1572 = vmatpush1.msra.mxu0 %v1553
    %1573 = vmatprep.subr.mxu0 0.0
    %1574 = vmatpush1.msra.mxu0 %v1554
    %1575 = vmatprep.subr.mxu0 0.0
    %1576 = vmatpush1.msra.mxu0 %v1555
    %1577 = vmatprep.subr.mxu0 0.0
    %1578 = vmatpush1.msra.mxu0 %v1556
    %1579 = vmatprep.subr.mxu0 0.0
    %1580 = vmatpush1.msra.mxu0 %v1557
    %1581 = vmatprep.subr.mxu0 0.0
    %1582 = vmatpush1.msra.mxu0 %v1558
    %1583 = vmatprep.subr.mxu0 0.0
    %1584 = vmatpush1.msra.mxu0 %v1559
    %1585 = vmatprep.subr.mxu0 0.0
    %1586 = vmatpush1.msra.mxu0 %v1560
    %1587 = vmatprep.subr.mxu0 0.0
    %1588 = vmatpush1.msra.mxu0 %v1561
    %1589 = vmatprep.subr.mxu0 0.0
    %1590 = vmatpush1.msra.mxu0 %v1562
    %1591 = vmatprep.subr.mxu0 0.0
    %1592 = vmatpush1.msra.mxu0 %v1563
    %1593 = vmatprep.subr.mxu0 0.0
    %1594 = vmatpush1.msra.mxu0 %v1564
    %1595 = vmatprep.subr.mxu0 0.0
    %1596 = vmatpush1.msra.mxu0 %v1565
    %1597 = vmatprep.subr.mxu0 0.0
    %1598 = vmatpush1.msra.mxu0 %v1566
    %1599 = vmatprep.subr.mxu0 0.0
    %1600 = vmatpush1.msra.mxu0 0.0
    %1601 = vmatprep.subr.mxu0 0.0
    %1602 = vmatpush1.msra.mxu0 0.0
    %1603 = vmatprep.subr.mxu0 0.0
    %1604 = vmatpush1.msra.mxu0 0.0
    %1605 = vmatprep.subr.mxu0 0.0
    %1606 = vmatpush1.msra.mxu0 0.0
    %1607 = vmatprep.subr.mxu0 0.0
    %1608 = vmatpush1.msra.mxu0 0.0
    %1609 = vmatprep.subr.mxu0 0.0
    %1610 = vmatpush1.msra.mxu0 0.0
    %1611 = vmatprep.subr.mxu0 0.0
    %1612 = vmatpush1.msra.mxu0 0.0
    %1613 = vmatprep.subr.mxu0 0.0
    %1614 = vmatpush1.msra.mxu0 0.0
    %1615 = vmatprep.subr.mxu0 0.0
    %1616 = vmatpush1.msra.mxu0 0.0
    %1617 = vmatprep.subr.mxu0 0.0
    %1618 = vmatpush1.msra.mxu0 0.0
    %1619 = vmatprep.subr.mxu0 0.0
    %1620 = vmatpush1.msra.mxu0 0.0
    %1621 = vmatprep.subr.mxu0 0.0
    %1622 = vmatpush1.msra.mxu0 0.0
    %1623 = vmatprep.subr.mxu0 0.0
    %1624 = vmatpush1.msra.mxu0 0.0
    %1625 = vmatprep.subr.mxu0 0.0
    %1626 = vmatpush1.msra.mxu0 0.0
    %1627 = vmatprep.subr.mxu0 0.0
    %1628 = vmatpush1.msra.mxu0 0.0
    %1629 = vmatprep.subr.mxu0 0.0
    %1630 = vmatpush1.msra.mxu0 0.0
    %1631 = vmatprep.mubr.f32.mxu0 0.0
    %1632 = vmatmul.mubr.f32.gmra.mrb[0].mxu0 %v1549
    %v1633 = vpop.f32.mrb[0].mxu0
    %v1634 = vadd.f32 0.0, %v1633
    %v1635 = vpop.f32.mrb[0].mxu0
    %1636 = vmatprep.mubr.f32.mxu0 0.0
    %1637 = vmatmul.mubr.f32.gmra.mrb[0].mxu0 %v1550
    %v1638 = vpop.f32.mrb[0].mxu0
    %v1639 = vadd.f32 0.0, %v1638
    %v1640 = vpop.f32.mrb[0].mxu0
    %1641 = vdwg.mxu0
    %v1642 = vadd.f32 %v1359, %v1634
    %v1643 = vadd.f32 %v1360, %v1639
    %v1644 = vld [vmem:[%s33] sm:$0x1]
    %v1646 = vlaneseq
    %v1647 = vshrl.u32 %v1646, 7
    %v1648 = vsub.s32 0, %v1647
    %v1649 = vrot.slane %v1644, %v1648
    %v1651 = vadd.f32 %v1642, %v1649
    %v1652 = vadd.f32 %v1643, %v1649
    %v1653 = vld [vmem:[%s35] sm:$0x1]
    %v1654 = vld [vmem:[%s37] sm:$0x1]
    %v1655 = vsel %vm283, %v1651, 0.0
    %1656 = vadd.xlane.f32.xlu0 %v1655
    %v1657 = vpop.xlane.xlu0 %1656
    %v1658 = vsel %vm283, %v1652, 0.0
    %1659 = vadd.xlane.f32.xlu0 %v1658
    %v1660 = vpop.xlane.xlu0 %1659
    %v1661 = vmul.f32 %v1657, %v290
    %v1662 = vmul.f32 %v1660, %v290
    %v1663 = vsub.f32 %v1651, %v1661
    %v1664 = vsub.f32 %v1652, %v1662
    %v1665 = vmul.f32 %v1663, %v1663
    %v1666 = vmul.f32 %v1664, %v1664
    %v1667 = vsel %vm283, %v1665, 0.0
    %1668 = vadd.xlane.f32.xlu0 %v1667
    %v1669 = vpop.xlane.xlu0 %1668
    %v1670 = vsel %vm283, %v1666, 0.0
    %1671 = vadd.xlane.f32.xlu0 %v1670
    %v1672 = vpop.xlane.xlu0 %1671
    %v1673 = vmul.f32 %v1669, %v290
    %v1674 = vmul.f32 %v1672, %v290
    %v1675 = vadd.f32 %v1673, 1e-05
    %v1676 = vadd.f32 %v1674, 1e-05
    %v1677 = vrsqrt.pop %v1675
    %v1678 = vrsqrt.pop %v1676
    %v1679 = vmul.f32 %v1663, %v1677
    %v1680 = vmul.f32 %v1664, %v1678
    %v1682 = vlaneseq
    %v1683 = vshrl.u32 %v1682, 7
    %v1684 = vsub.s32 0, %v1683
    %v1685 = vrot.slane %v1653, %v1684
    %v1687 = vmul.f32 %v1679, %v1685
    %v1688 = vmul.f32 %v1680, %v1685
    %v1690 = vlaneseq
    %v1691 = vshrl.u32 %v1690, 7
    %v1692 = vsub.s32 0, %v1691
    %v1693 = vrot.slane %v1654, %v1692
    %v1695 = vadd.f32 %v1687, %v1693
    %v1696 = vadd.f32 %v1688, %v1693
    %v1697 = vld [vmem:[%s39] sm:$0xff]
    %v1698 = vld [vmem:[%s39 + $0x8] sm:$0xff]
    %v1699 = vld [vmem:[%s39 + $0x10] sm:$0xff]
    %v1700 = vld [vmem:[%s39 + $0x18] sm:$0xff]
    %v1701 = vld [vmem:[%s41] sm:$0x1]
    %v1703 = vlaneseq
    %v1704 = vshrl.u32 %v1703, 7
    %v1705 = vsub.s32 0, %v1704
    %v1706 = vrot.slane %v1701, %v1705
    %v1709 = vsel %vm283, %v1695, 0
    %v1712 = vsel %vm283, %v1696, 0
    %1714 = vmatprep.subr.mxu0 0.0
    %1715 = vmatpush1.msra.mxu0 %v1697
    %1716 = vmatprep.subr.mxu0 0.0
    %1717 = vmatpush1.msra.mxu0 %v1698
    %1718 = vmatprep.subr.mxu0 0.0
    %1719 = vmatpush1.msra.mxu0 %v1699
    %1720 = vmatprep.subr.mxu0 0.0
    %1721 = vmatpush1.msra.mxu0 %v1700
    %1722 = vmatprep.subr.mxu0 0.0
    %1723 = vmatpush1.msra.mxu0 0.0
    %1724 = vmatprep.subr.mxu0 0.0
    %1725 = vmatpush1.msra.mxu0 0.0
    %1726 = vmatprep.subr.mxu0 0.0
    %1727 = vmatpush1.msra.mxu0 0.0
    %1728 = vmatprep.subr.mxu0 0.0
    %1729 = vmatpush1.msra.mxu0 0.0
    %1730 = vmatprep.subr.mxu0 0.0
    %1731 = vmatpush1.msra.mxu0 0.0
    %1732 = vmatprep.subr.mxu0 0.0
    %1733 = vmatpush1.msra.mxu0 0.0
    %1734 = vmatprep.subr.mxu0 0.0
    %1735 = vmatpush1.msra.mxu0 0.0
    %1736 = vmatprep.subr.mxu0 0.0
    %1737 = vmatpush1.msra.mxu0 0.0
    %1738 = vmatprep.subr.mxu0 0.0
    %1739 = vmatpush1.msra.mxu0 0.0
    %1740 = vmatprep.subr.mxu0 0.0
    %1741 = vmatpush1.msra.mxu0 0.0
    %1742 = vmatprep.subr.mxu0 0.0
    %1743 = vmatpush1.msra.mxu0 0.0
    %1744 = vmatprep.subr.mxu0 0.0
    %1745 = vmatpush1.msra.mxu0 0.0
    %1746 = vmatprep.subr.mxu0 0.0
    %1747 = vmatpush1.msra.mxu0 0.0
    %1748 = vmatprep.subr.mxu0 0.0
    %1749 = vmatpush1.msra.mxu0 0.0
    %1750 = vmatprep.subr.mxu0 0.0
    %1751 = vmatpush1.msra.mxu0 0.0
    %1752 = vmatprep.subr.mxu0 0.0
    %1753 = vmatpush1.msra.mxu0 0.0
    %1754 = vmatprep.subr.mxu0 0.0
    %1755 = vmatpush1.msra.mxu0 0.0
    %1756 = vmatprep.subr.mxu0 0.0
    %1757 = vmatpush1.msra.mxu0 0.0
    %1758 = vmatprep.subr.mxu0 0.0
    %1759 = vmatpush1.msra.mxu0 0.0
    %1760 = vmatprep.subr.mxu0 0.0
    %1761 = vmatpush1.msra.mxu0 0.0
    %1762 = vmatprep.subr.mxu0 0.0
    %1763 = vmatpush1.msra.mxu0 0.0
    %1764 = vmatprep.subr.mxu0 0.0
    %1765 = vmatpush1.msra.mxu0 0.0
    %1766 = vmatprep.subr.mxu0 0.0
    %1767 = vmatpush1.msra.mxu0 0.0
    %1768 = vmatprep.subr.mxu0 0.0
    %1769 = vmatpush1.msra.mxu0 0.0
    %1770 = vmatprep.subr.mxu0 0.0
    %1771 = vmatpush1.msra.mxu0 0.0
    %1772 = vmatprep.subr.mxu0 0.0
    %1773 = vmatpush1.msra.mxu0 0.0
    %1774 = vmatprep.subr.mxu0 0.0
    %1775 = vmatpush1.msra.mxu0 0.0
    %1776 = vmatprep.subr.mxu0 0.0
    %1777 = vmatpush1.msra.mxu0 0.0
    %1778 = vmatprep.mubr.f32.mxu0 0.0
    %1779 = vmatmul.mubr.f32.gmra.mrb[0].mxu0 %v1709
    %v1780 = vpop.f32.mrb[0].mxu0
    %v1781 = vadd.f32 %v1706, %v1780
    %v1782 = vpop.f32.mrb[0].mxu0
    %1783 = vmatprep.mubr.f32.mxu0 0.0
    %1784 = vmatmul.mubr.f32.gmra.mrb[0].mxu0 %v1712
    %v1785 = vpop.f32.mrb[0].mxu0
    %v1786 = vadd.f32 %v1706, %v1785
    %v1787 = vpop.f32.mrb[0].mxu0
    %1788 = vdwg.mxu0
    %1791 = vrot.lane.b32.xlu0 %v1781, 96
    %v1792 = vpop.permute.xlu0 %1791
    %1793 = vrot.lane.b32.xlu0 %v1786, 96
    %v1794 = vpop.permute.xlu0 %1793
    %v1795 = vsel %vm425, %v1781, 0
    %v1797 = vsel %vm425, %v1786, 0
    %v1799 = vsel %vm425, %v1792, 0
    %v1801 = vsel %vm425, %v1794, 0
    %1803 = vmatprep.subr.mxu0 0.0
    %1804 = vmatpush1.xpose.msra.mxu0 %v1799
    %1805 = vmatprep.subr.mxu0 0.0
    %1806 = vmatpush1.xpose.msra.mxu0 %v1801
    %1807 = vmatprep.subr.mxu0 0.0
    %1808 = vmatpush1.xpose.msra.mxu0 0.0
    %1809 = vmatprep.subr.mxu0 0.0
    %1810 = vmatpush1.xpose.msra.mxu0 0.0
    %1811 = vmatprep.subr.mxu0 0.0
    %1812 = vmatpush1.xpose.msra.mxu0 0.0
    %1813 = vmatprep.subr.mxu0 0.0
    %1814 = vmatpush1.xpose.msra.mxu0 0.0
    %1815 = vmatprep.subr.mxu0 0.0
    %1816 = vmatpush1.xpose.msra.mxu0 0.0
    %1817 = vmatprep.subr.mxu0 0.0
    %1818 = vmatpush1.xpose.msra.mxu0 0.0
    %1819 = vmatprep.subr.mxu0 0.0
    %1820 = vmatpush1.xpose.msra.mxu0 0.0
    %1821 = vmatprep.subr.mxu0 0.0
    %1822 = vmatpush1.xpose.msra.mxu0 0.0
    %1823 = vmatprep.subr.mxu0 0.0
    %1824 = vmatpush1.xpose.msra.mxu0 0.0
    %1825 = vmatprep.subr.mxu0 0.0
    %1826 = vmatpush1.xpose.msra.mxu0 0.0
    %1827 = vmatprep.subr.mxu0 0.0
    %1828 = vmatpush1.xpose.msra.mxu0 0.0
    %1829 = vmatprep.subr.mxu0 0.0
    %1830 = vmatpush1.xpose.msra.mxu0 0.0
    %1831 = vmatprep.subr.mxu0 0.0
    %1832 = vmatpush1.xpose.msra.mxu0 0.0
    %1833 = vmatprep.subr.mxu0 0.0
    %1834 = vmatpush1.xpose.msra.mxu0 0.0
    %1835 = vmatprep.subr.mxu0 0.0
    %1836 = vmatpush1.xpose.msra.mxu0 0.0
    %1837 = vmatprep.subr.mxu0 0.0
    %1838 = vmatpush1.xpose.msra.mxu0 0.0
    %1839 = vmatprep.subr.mxu0 0.0
    %1840 = vmatpush1.xpose.msra.mxu0 0.0
    %1841 = vmatprep.subr.mxu0 0.0
    %1842 = vmatpush1.xpose.msra.mxu0 0.0
    %1843 = vmatprep.subr.mxu0 0.0
    %1844 = vmatpush1.xpose.msra.mxu0 0.0
    %1845 = vmatprep.subr.mxu0 0.0
    %1846 = vmatpush1.xpose.msra.mxu0 0.0
    %1847 = vmatprep.subr.mxu0 0.0
    %1848 = vmatpush1.xpose.msra.mxu0 0.0
    %1849 = vmatprep.subr.mxu0 0.0
    %1850 = vmatpush1.xpose.msra.mxu0 0.0
    %1851 = vmatprep.subr.mxu0 0.0
    %1852 = vmatpush1.xpose.msra.mxu0 0.0
    %1853 = vmatprep.subr.mxu0 0.0
    %1854 = vmatpush1.xpose.msra.mxu0 0.0
    %1855 = vmatprep.subr.mxu0 0.0
    %1856 = vmatpush1.xpose.msra.mxu0 0.0
    %1857 = vmatprep.subr.mxu0 0.0
    %1858 = vmatpush1.xpose.msra.mxu0 0.0
    %1859 = vmatprep.subr.mxu0 0.0
    %1860 = vmatpush1.xpose.msra.mxu0 0.0
    %1861 = vmatprep.subr.mxu0 0.0
    %1862 = vmatpush1.xpose.msra.mxu0 0.0
    %1863 = vmatprep.subr.mxu0 0.0
    %1864 = vmatpush1.xpose.msra.mxu0 0.0
    %1865 = vmatprep.subr.mxu0 0.0
    %1866 = vmatpush1.xpose.msra.mxu0 0.0
    %1867 = vmatprep.mubr.f32.mxu0 0.0
    %1868 = vmatmul.mubr.f32.gmra.mrb[0].mxu0 %v1795
    %v1869 = vpop.f32.mrb[0].mxu0
    %v1870 = vadd.f32 0.0, %v1869
    %v1871 = vpop.f32.mrb[0].mxu0
    %1872 = vmatprep.mubr.f32.mxu0 0.0
    %1873 = vmatmul.mubr.f32.gmra.mrb[0].mxu0 %v1797
    %v1874 = vpop.f32.mrb[0].mxu0
    %v1875 = vadd.f32 0.0, %v1874
    %v1876 = vpop.f32.mrb[0].mxu0
    %1877 = vdwg.mxu0
    %v1878 = vmul.f32 %v1870, 0.35355338
    %v1879 = vmul.f32 %v1875, 0.35355338
    %v1880 = vadd.f32 %v1878, %v279
    %v1881 = vadd.f32 %v1879, %v280
    %v1882 = vsel %vm194, %v1880, -inf
    %1883 = vmax.xlane.f32.xlu0 %v1882
    %v1884 = vpop.xlane.xlu0 %1883
    %v1885 = vsel %vm194, %v1881, -inf
    %1886 = vmax.xlane.f32.xlu0 %v1885
    %v1887 = vpop.xlane.xlu0 %1886
    %v1888 = vsub.f32 %v1880, %v1884
    %v1889 = vsub.f32 %v1881, %v1887
    %v1890 = vmul.f32 %v1888, 1.442695
    %v1891 = vpow.pop %v1890
    %v1892 = vmul.f32 %v1889, 1.442695
    %v1893 = vpow.pop %v1892
    %v1894 = vsel %vm194, %v1891, 0.0
    %1895 = vadd.xlane.f32.xlu0 %v1894
    %v1896 = vpop.xlane.xlu0 %1895
    %v1897 = vsel %vm194, %v1893, 0.0
    %1898 = vadd.xlane.f32.xlu0 %v1897
    %v1899 = vpop.xlane.xlu0 %1898
    %v1900 = vrcp.pop %v1896
    %v1901 = vrcp.pop %v1899
    %v1902 = vmul.f32 %v1891, %v1900
    %v1903 = vmul.f32 %v1893, %v1901
    %1904 = vrot.lane.b32.xlu0 %v1781, 64
    %v1905 = vpop.permute.xlu0 %1904
    %1906 = vrot.lane.b32.xlu0 %v1786, 64
    %v1907 = vpop.permute.xlu0 %1906
    %v1911 = vsel %vm194, %v1902, 0
    %v1914 = vsel %vm194, %v1903, 0
    %1916 = vmatprep.subr.mxu0 0.0
    %1917 = vmatpush1.msra.mxu0 %v1905
    %1918 = vmatprep.subr.mxu0 0.0
    %1919 = vmatpush1.msra.mxu0 %v1907
    %1920 = vmatprep.subr.mxu0 0.0
    %1921 = vmatpush1.msra.mxu0 0.0
    %1922 = vmatprep.subr.mxu0 0.0
    %1923 = vmatpush1.msra.mxu0 0.0
    %1924 = vmatprep.subr.mxu0 0.0
    %1925 = vmatpush1.msra.mxu0 0.0
    %1926 = vmatprep.subr.mxu0 0.0
    %1927 = vmatpush1.msra.mxu0 0.0
    %1928 = vmatprep.subr.mxu0 0.0
    %1929 = vmatpush1.msra.mxu0 0.0
    %1930 = vmatprep.subr.mxu0 0.0
    %1931 = vmatpush1.msra.mxu0 0.0
    %1932 = vmatprep.subr.mxu0 0.0
    %1933 = vmatpush1.msra.mxu0 0.0
    %1934 = vmatprep.subr.mxu0 0.0
    %1935 = vmatpush1.msra.mxu0 0.0
    %1936 = vmatprep.subr.mxu0 0.0
    %1937 = vmatpush1.msra.mxu0 0.0
    %1938 = vmatprep.subr.mxu0 0.0
    %1939 = vmatpush1.msra.mxu0 0.0
    %1940 = vmatprep.subr.mxu0 0.0
    %1941 = vmatpush1.msra.mxu0 0.0
    %1942 = vmatprep.subr.mxu0 0.0
    %1943 = vmatpush1.msra.mxu0 0.0
    %1944 = vmatprep.subr.mxu0 0.0
    %1945 = vmatpush1.msra.mxu0 0.0
    %1946 = vmatprep.subr.mxu0 0.0
    %1947 = vmatpush1.msra.mxu0 0.0
    %1948 = vmatprep.subr.mxu0 0.0
    %1949 = vmatpush1.msra.mxu0 0.0
    %1950 = vmatprep.subr.mxu0 0.0
    %1951 = vmatpush1.msra.mxu0 0.0
    %1952 = vmatprep.subr.mxu0 0.0
    %1953 = vmatpush1.msra.mxu0 0.0
    %1954 = vmatprep.subr.mxu0 0.0
    %1955 = vmatpush1.msra.mxu0 0.0
    %1956 = vmatprep.subr.mxu0 0.0
    %1957 = vmatpush1.msra.mxu0 0.0
    %1958 = vmatprep.subr.mxu0 0.0
    %1959 = vmatpush1.msra.mxu0 0.0
    %1960 = vmatprep.subr.mxu0 0.0
    %1961 = vmatpush1.msra.mxu0 0.0
    %1962 = vmatprep.subr.mxu0 0.0
    %1963 = vmatpush1.msra.mxu0 0.0
    %1964 = vmatprep.subr.mxu0 0.0
    %1965 = vmatpush1.msra.mxu0 0.0
    %1966 = vmatprep.subr.mxu0 0.0
    %1967 = vmatpush1.msra.mxu0 0.0
    %1968 = vmatprep.subr.mxu0 0.0
    %1969 = vmatpush1.msra.mxu0 0.0
    %1970 = vmatprep.subr.mxu0 0.0
    %1971 = vmatpush1.msra.mxu0 0.0
    %1972 = vmatprep.subr.mxu0 0.0
    %1973 = vmatpush1.msra.mxu0 0.0
    %1974 = vmatprep.subr.mxu0 0.0
    %1975 = vmatpush1.msra.mxu0 0.0
    %1976 = vmatprep.subr.mxu0 0.0
    %1977 = vmatpush1.msra.mxu0 0.0
    %1978 = vmatprep.subr.mxu0 0.0
    %1979 = vmatpush1.msra.mxu0 0.0
    %1980 = vmatprep.mubr.f32.mxu0 0.0
    %1981 = vmatmul.mubr.f32.gmra.mrb[0].mxu0 %v1911
    %v1982 = vpop.f32.mrb[0].mxu0
    %v1983 = vadd.f32 0.0, %v1982
    %v1984 = vpop.f32.mrb[0].mxu0
    %1985 = vmatprep.mubr.f32.mxu0 0.0
    %1986 = vmatmul.mubr.f32.gmra.mrb[0].mxu0 %v1914
    %v1987 = vpop.f32.mrb[0].mxu0
    %v1988 = vadd.f32 0.0, %v1987
    %v1989 = vpop.f32.mrb[0].mxu0
    %1990 = vdwg.mxu0
    %1991 = vrot.lane.b32.xlu0 %v1781, 120
    %v1992 = vpop.permute.xlu0 %1991
    %1993 = vrot.lane.b32.xlu0 %v1786, 120
    %v1994 = vpop.permute.xlu0 %1993
    %1995 = vrot.lane.b32.xlu0 %v1781, 88
    %v1996 = vpop.permute.xlu0 %1995
    %1997 = vrot.lane.b32.xlu0 %v1786, 88
    %v1998 = vpop.permute.xlu0 %1997
    %v1999 = vsel %vm425, %v1992, 0
    %v2001 = vsel %vm425, %v1994, 0
    %v2003 = vsel %vm425, %v1996, 0
    %v2005 = vsel %vm425, %v1998, 0
    %2007 = vmatprep.subr.mxu0 0.0
    %2008 = vmatpush1.xpose.msra.mxu0 %v2003
    %2009 = vmatprep.subr.mxu0 0.0
    %2010 = vmatpush1.xpose.msra.mxu0 %v2005
    %2011 = vmatprep.subr.mxu0 0.0
    %2012 = vmatpush1.xpose.msra.mxu0 0.0
    %2013 = vmatprep.subr.mxu0 0.0
    %2014 = vmatpush1.xpose.msra.mxu0 0.0
    %2015 = vmatprep.subr.mxu0 0.0
    %2016 = vmatpush1.xpose.msra.mxu0 0.0
    %2017 = vmatprep.subr.mxu0 0.0
    %2018 = vmatpush1.xpose.msra.mxu0 0.0
    %2019 = vmatprep.subr.mxu0 0.0
    %2020 = vmatpush1.xpose.msra.mxu0 0.0
    %2021 = vmatprep.subr.mxu0 0.0
    %2022 = vmatpush1.xpose.msra.mxu0 0.0
    %2023 = vmatprep.subr.mxu0 0.0
    %2024 = vmatpush1.xpose.msra.mxu0 0.0
    %2025 = vmatprep.subr.mxu0 0.0
    %2026 = vmatpush1.xpose.msra.mxu0 0.0
    %2027 = vmatprep.subr.mxu0 0.0
    %2028 = vmatpush1.xpose.msra.mxu0 0.0
    %2029 = vmatprep.subr.mxu0 0.0
    %2030 = vmatpush1.xpose.msra.mxu0 0.0
    %2031 = vmatprep.subr.mxu0 0.0
    %2032 = vmatpush1.xpose.msra.mxu0 0.0
    %2033 = vmatprep.subr.mxu0 0.0
    %2034 = vmatpush1.xpose.msra.mxu0 0.0
    %2035 = vmatprep.subr.mxu0 0.0
    %2036 = vmatpush1.xpose.msra.mxu0 0.0
    %2037 = vmatprep.subr.mxu0 0.0
    %2038 = vmatpush1.xpose.msra.mxu0 0.0
    %2039 = vmatprep.subr.mxu0 0.0
    %2040 = vmatpush1.xpose.msra.mxu0 0.0
    %2041 = vmatprep.subr.mxu0 0.0
    %2042 = vmatpush1.xpose.msra.mxu0 0.0
    %2043 = vmatprep.subr.mxu0 0.0
    %2044 = vmatpush1.xpose.msra.mxu0 0.0
    %2045 = vmatprep.subr.mxu0 0.0
    %2046 = vmatpush1.xpose.msra.mxu0 0.0
    %2047 = vmatprep.subr.mxu0 0.0
    %2048 = vmatpush1.xpose.msra.mxu0 0.0
    %2049 = vmatprep.subr.mxu0 0.0
    %2050 = vmatpush1.xpose.msra.mxu0 0.0
    %2051 = vmatprep.subr.mxu0 0.0
    %2052 = vmatpush1.xpose.msra.mxu0 0.0
    %2053 = vmatprep.subr.mxu0 0.0
    %2054 = vmatpush1.xpose.msra.mxu0 0.0
    %2055 = vmatprep.subr.mxu0 0.0
    %2056 = vmatpush1.xpose.msra.mxu0 0.0
    %2057 = vmatprep.subr.mxu0 0.0
    %2058 = vmatpush1.xpose.msra.mxu0 0.0
    %2059 = vmatprep.subr.mxu0 0.0
    %2060 = vmatpush1.xpose.msra.mxu0 0.0
    %2061 = vmatprep.subr.mxu0 0.0
    %2062 = vmatpush1.xpose.msra.mxu0 0.0
    %2063 = vmatprep.subr.mxu0 0.0
    %2064 = vmatpush1.xpose.msra.mxu0 0.0
    %2065 = vmatprep.subr.mxu0 0.0
    %2066 = vmatpush1.xpose.msra.mxu0 0.0
    %2067 = vmatprep.subr.mxu0 0.0
    %2068 = vmatpush1.xpose.msra.mxu0 0.0
    %2069 = vmatprep.subr.mxu0 0.0
    %2070 = vmatpush1.xpose.msra.mxu0 0.0
    %2071 = vmatprep.mubr.f32.mxu0 0.0
    %2072 = vmatmul.mubr.f32.gmra.mrb[0].mxu0 %v1999
    %v2073 = vpop.f32.mrb[0].mxu0
    %v2074 = vadd.f32 0.0, %v2073
    %v2075 = vpop.f32.mrb[0].mxu0
    %2076 = vmatprep.mubr.f32.mxu0 0.0
    %2077 = vmatmul.mubr.f32.gmra.mrb[0].mxu0 %v2001
    %v2078 = vpop.f32.mrb[0].mxu0
    %v2079 = vadd.f32 0.0, %v2078
    %v2080 = vpop.f32.mrb[0].mxu0
    %2081 = vdwg.mxu0
    %v2082 = vmul.f32 %v2074, 0.35355338
    %v2083 = vmul.f32 %v2079, 0.35355338
    %v2084 = vadd.f32 %v2082, %v279
    %v2085 = vadd.f32 %v2083, %v280
    %v2086 = vsel %vm194, %v2084, -inf
    %2087 = vmax.xlane.f32.xlu0 %v2086
    %v2088 = vpop.xlane.xlu0 %2087
    %v2089 = vsel %vm194, %v2085, -inf
    %2090 = vmax.xlane.f32.xlu0 %v2089
    %v2091 = vpop.xlane.xlu0 %2090
    %v2092 = vsub.f32 %v2084, %v2088
    %v2093 = vsub.f32 %v2085, %v2091
    %v2094 = vmul.f32 %v2092, 1.442695
    %v2095 = vpow.pop %v2094
    %v2096 = vmul.f32 %v2093, 1.442695
    %v2097 = vpow.pop %v2096
    %v2098 = vsel %vm194, %v2095, 0.0
    %2099 = vadd.xlane.f32.xlu0 %v2098
    %v2100 = vpop.xlane.xlu0 %2099
    %v2101 = vsel %vm194, %v2097, 0.0
    %2102 = vadd.xlane.f32.xlu0 %v2101
    %v2103 = vpop.xlane.xlu0 %2102
    %v2104 = vrcp.pop %v2100
    %v2105 = vrcp.pop %v2103
    %v2106 = vmul.f32 %v2095, %v2104
    %v2107 = vmul.f32 %v2097, %v2105
    %2108 = vrot.lane.b32.xlu0 %v1781, 56
    %v2109 = vpop.permute.xlu0 %2108
    %2110 = vrot.lane.b32.xlu0 %v1786, 56
    %v2111 = vpop.permute.xlu0 %2110
    %v2115 = vsel %vm194, %v2106, 0
    %v2118 = vsel %vm194, %v2107, 0
    %2120 = vmatprep.subr.mxu0 0.0
    %2121 = vmatpush1.msra.mxu0 %v2109
    %2122 = vmatprep.subr.mxu0 0.0
    %2123 = vmatpush1.msra.mxu0 %v2111
    %2124 = vmatprep.subr.mxu0 0.0
    %2125 = vmatpush1.msra.mxu0 0.0
    %2126 = vmatprep.subr.mxu0 0.0
    %2127 = vmatpush1.msra.mxu0 0.0
    %2128 = vmatprep.subr.mxu0 0.0
    %2129 = vmatpush1.msra.mxu0 0.0
    %2130 = vmatprep.subr.mxu0 0.0
    %2131 = vmatpush1.msra.mxu0 0.0
    %2132 = vmatprep.subr.mxu0 0.0
    %2133 = vmatpush1.msra.mxu0 0.0
    %2134 = vmatprep.subr.mxu0 0.0
    %2135 = vmatpush1.msra.mxu0 0.0
    %2136 = vmatprep.subr.mxu0 0.0
    %2137 = vmatpush1.msra.mxu0 0.0
    %2138 = vmatprep.subr.mxu0 0.0
    %2139 = vmatpush1.msra.mxu0 0.0
    %2140 = vmatprep.subr.mxu0 0.0
    %2141 = vmatpush1.msra.mxu0 0.0
    %2142 = vmatprep.subr.mxu0 0.0
    %2143 = vmatpush1.msra.mxu0 0.0
    %2144 = vmatprep.subr.mxu0 0.0
    %2145 = vmatpush1.msra.mxu0 0.0
    %2146 = vmatprep.subr.mxu0 0.0
    %2147 = vmatpush1.msra.mxu0 0.0
    %2148 = vmatprep.subr.mxu0 0.0
    %2149 = vmatpush1.msra.mxu0 0.0
    %2150 = vmatprep.subr.mxu0 0.0
    %2151 = vmatpush1.msra.mxu0 0.0
    %2152 = vmatprep.subr.mxu0 0.0
    %2153 = vmatpush1.msra.mxu0 0.0
    %2154 = vmatprep.subr.mxu0 0.0
    %2155 = vmatpush1.msra.mxu0 0.0
    %2156 = vmatprep.subr.mxu0 0.0
    %2157 = vmatpush1.msra.mxu0 0.0
    %2158 = vmatprep.subr.mxu0 0.0
    %2159 = vmatpush1.msra.mxu0 0.0
    %2160 = vmatprep.subr.mxu0 0.0
    %2161 = vmatpush1.msra.mxu0 0.0
    %2162 = vmatprep.subr.mxu0 0.0
    %2163 = vmatpush1.msra.mxu0 0.0
    %2164 = vmatprep.subr.mxu0 0.0
    %2165 = vmatpush1.msra.mxu0 0.0
    %2166 = vmatprep.subr.mxu0 0.0
    %2167 = vmatpush1.msra.mxu0 0.0
    %2168 = vmatprep.subr.mxu0 0.0
    %2169 = vmatpush1.msra.mxu0 0.0
    %2170 = vmatprep.subr.mxu0 0.0
    %2171 = vmatpush1.msra.mxu0 0.0
    %2172 = vmatprep.subr.mxu0 0.0
    %2173 = vmatpush1.msra.mxu0 0.0
    %2174 = vmatprep.subr.mxu0 0.0
    %2175 = vmatpush1.msra.mxu0 0.0
    %2176 = vmatprep.subr.mxu0 0.0
    %2177 = vmatpush1.msra.mxu0 0.0
    %2178 = vmatprep.subr.mxu0 0.0
    %2179 = vmatpush1.msra.mxu0 0.0
    %2180 = vmatprep.subr.mxu0 0.0
    %2181 = vmatpush1.msra.mxu0 0.0
    %2182 = vmatprep.subr.mxu0 0.0
    %2183 = vmatpush1.msra.mxu0 0.0
    %2184 = vmatprep.mubr.f32.mxu0 0.0
    %2185 = vmatmul.mubr.f32.gmra.mrb[0].mxu0 %v2115
    %v2186 = vpop.f32.mrb[0].mxu0
    %v2187 = vadd.f32 0.0, %v2186
    %v2188 = vpop.f32.mrb[0].mxu0
    %2189 = vmatprep.mubr.f32.mxu0 0.0
    %2190 = vmatmul.mubr.f32.gmra.mrb[0].mxu0 %v2118
    %v2191 = vpop.f32.mrb[0].mxu0
    %v2192 = vadd.f32 0.0, %v2191
    %v2193 = vpop.f32.mrb[0].mxu0
    %2194 = vdwg.mxu0
    %2195 = vrot.lane.b32.xlu0 %v1781, 112
    %v2196 = vpop.permute.xlu0 %2195
    %2197 = vrot.lane.b32.xlu0 %v1786, 112
    %v2198 = vpop.permute.xlu0 %2197
    %2199 = vrot.lane.b32.xlu0 %v1781, 80
    %v2200 = vpop.permute.xlu0 %2199
    %2201 = vrot.lane.b32.xlu0 %v1786, 80
    %v2202 = vpop.permute.xlu0 %2201
    %v2203 = vsel %vm425, %v2196, 0
    %v2205 = vsel %vm425, %v2198, 0
    %v2207 = vsel %vm425, %v2200, 0
    %v2209 = vsel %vm425, %v2202, 0
    %2211 = vmatprep.subr.mxu0 0.0
    %2212 = vmatpush1.xpose.msra.mxu0 %v2207
    %2213 = vmatprep.subr.mxu0 0.0
    %2214 = vmatpush1.xpose.msra.mxu0 %v2209
    %2215 = vmatprep.subr.mxu0 0.0
    %2216 = vmatpush1.xpose.msra.mxu0 0.0
    %2217 = vmatprep.subr.mxu0 0.0
    %2218 = vmatpush1.xpose.msra.mxu0 0.0
    %2219 = vmatprep.subr.mxu0 0.0
    %2220 = vmatpush1.xpose.msra.mxu0 0.0
    %2221 = vmatprep.subr.mxu0 0.0
    %2222 = vmatpush1.xpose.msra.mxu0 0.0
    %2223 = vmatprep.subr.mxu0 0.0
    %2224 = vmatpush1.xpose.msra.mxu0 0.0
    %2225 = vmatprep.subr.mxu0 0.0
    %2226 = vmatpush1.xpose.msra.mxu0 0.0
    %2227 = vmatprep.subr.mxu0 0.0
    %2228 = vmatpush1.xpose.msra.mxu0 0.0
    %2229 = vmatprep.subr.mxu0 0.0
    %2230 = vmatpush1.xpose.msra.mxu0 0.0
    %2231 = vmatprep.subr.mxu0 0.0
    %2232 = vmatpush1.xpose.msra.mxu0 0.0
    %2233 = vmatprep.subr.mxu0 0.0
    %2234 = vmatpush1.xpose.msra.mxu0 0.0
    %2235 = vmatprep.subr.mxu0 0.0
    %2236 = vmatpush1.xpose.msra.mxu0 0.0
    %2237 = vmatprep.subr.mxu0 0.0
    %2238 = vmatpush1.xpose.msra.mxu0 0.0
    %2239 = vmatprep.subr.mxu0 0.0
    %2240 = vmatpush1.xpose.msra.mxu0 0.0
    %2241 = vmatprep.subr.mxu0 0.0
    %2242 = vmatpush1.xpose.msra.mxu0 0.0
    %2243 = vmatprep.subr.mxu0 0.0
    %2244 = vmatpush1.xpose.msra.mxu0 0.0
    %2245 = vmatprep.subr.mxu0 0.0
    %2246 = vmatpush1.xpose.msra.mxu0 0.0
    %2247 = vmatprep.subr.mxu0 0.0
    %2248 = vmatpush1.xpose.msra.mxu0 0.0
    %2249 = vmatprep.subr.mxu0 0.0
    %2250 = vmatpush1.xpose.msra.mxu0 0.0
    %2251 = vmatprep.subr.mxu0 0.0
    %2252 = vmatpush1.xpose.msra.mxu0 0.0
    %2253 = vmatprep.subr.mxu0 0.0
    %2254 = vmatpush1.xpose.msra.mxu0 0.0
    %2255 = vmatprep.subr.mxu0 0.0
    %2256 = vmatpush1.xpose.msra.mxu0 0.0
    %2257 = vmatprep.subr.mxu0 0.0
    %2258 = vmatpush1.xpose.msra.mxu0 0.0
    %2259 = vmatprep.subr.mxu0 0.0
    %2260 = vmatpush1.xpose.msra.mxu0 0.0
    %2261 = vmatprep.subr.mxu0 0.0
    %2262 = vmatpush1.xpose.msra.mxu0 0.0
    %2263 = vmatprep.subr.mxu0 0.0
    %2264 = vmatpush1.xpose.msra.mxu0 0.0
    %2265 = vmatprep.subr.mxu0 0.0
    %2266 = vmatpush1.xpose.msra.mxu0 0.0
    %2267 = vmatprep.subr.mxu0 0.0
    %2268 = vmatpush1.xpose.msra.mxu0 0.0
    %2269 = vmatprep.subr.mxu0 0.0
    %2270 = vmatpush1.xpose.msra.mxu0 0.0
    %2271 = vmatprep.subr.mxu0 0.0
    %2272 = vmatpush1.xpose.msra.mxu0 0.0
    %2273 = vmatprep.subr.mxu0 0.0
    %2274 = vmatpush1.xpose.msra.mxu0 0.0
    %2275 = vmatprep.mubr.f32.mxu0 0.0
    %2276 = vmatmul.mubr.f32.gmra.mrb[0].mxu0 %v2203
    %v2277 = vpop.f32.mrb[0].mxu0
    %v2278 = vadd.f32 0.0, %v2277
    %v2279 = vpop.f32.mrb[0].mxu0
    %2280 = vmatprep.mubr.f32.mxu0 0.0
    %2281 = vmatmul.mubr.f32.gmra.mrb[0].mxu0 %v2205
    %v2282 = vpop.f32.mrb[0].mxu0
    %v2283 = vadd.f32 0.0, %v2282
    %v2284 = vpop.f32.mrb[0].mxu0
    %2285 = vdwg.mxu0
    %v2286 = vmul.f32 %v2278, 0.35355338
    %v2287 = vmul.f32 %v2283, 0.35355338
    %v2288 = vadd.f32 %v2286, %v279
    %v2289 = vadd.f32 %v2287, %v280
    %v2290 = vsel %vm194, %v2288, -inf
    %2291 = vmax.xlane.f32.xlu0 %v2290
    %v2292 = vpop.xlane.xlu0 %2291
    %v2293 = vsel %vm194, %v2289, -inf
    %2294 = vmax.xlane.f32.xlu0 %v2293
    %v2295 = vpop.xlane.xlu0 %2294
    %v2296 = vsub.f32 %v2288, %v2292
    %v2297 = vsub.f32 %v2289, %v2295
    %v2298 = vmul.f32 %v2296, 1.442695
    %v2299 = vpow.pop %v2298
    %v2300 = vmul.f32 %v2297, 1.442695
    %v2301 = vpow.pop %v2300
    %v2302 = vsel %vm194, %v2299, 0.0
    %2303 = vadd.xlane.f32.xlu0 %v2302
    %v2304 = vpop.xlane.xlu0 %2303
    %v2305 = vsel %vm194, %v2301, 0.0
    %2306 = vadd.xlane.f32.xlu0 %v2305
    %v2307 = vpop.xlane.xlu0 %2306
    %v2308 = vrcp.pop %v2304
    %v2309 = vrcp.pop %v2307
    %v2310 = vmul.f32 %v2299, %v2308
    %v2311 = vmul.f32 %v2301, %v2309
    %2312 = vrot.lane.b32.xlu0 %v1781, 48
    %v2313 = vpop.permute.xlu0 %2312
    %2314 = vrot.lane.b32.xlu0 %v1786, 48
    %v2315 = vpop.permute.xlu0 %2314
    %v2319 = vsel %vm194, %v2310, 0
    %v2322 = vsel %vm194, %v2311, 0
    %2324 = vmatprep.subr.mxu0 0.0
    %2325 = vmatpush1.msra.mxu0 %v2313
    %2326 = vmatprep.subr.mxu0 0.0
    %2327 = vmatpush1.msra.mxu0 %v2315
    %2328 = vmatprep.subr.mxu0 0.0
    %2329 = vmatpush1.msra.mxu0 0.0
    %2330 = vmatprep.subr.mxu0 0.0
    %2331 = vmatpush1.msra.mxu0 0.0
    %2332 = vmatprep.subr.mxu0 0.0
    %2333 = vmatpush1.msra.mxu0 0.0
    %2334 = vmatprep.subr.mxu0 0.0
    %2335 = vmatpush1.msra.mxu0 0.0
    %2336 = vmatprep.subr.mxu0 0.0
    %2337 = vmatpush1.msra.mxu0 0.0
    %2338 = vmatprep.subr.mxu0 0.0
    %2339 = vmatpush1.msra.mxu0 0.0
    %2340 = vmatprep.subr.mxu0 0.0
    %2341 = vmatpush1.msra.mxu0 0.0
    %2342 = vmatprep.subr.mxu0 0.0
    %2343 = vmatpush1.msra.mxu0 0.0
    %2344 = vmatprep.subr.mxu0 0.0
    %2345 = vmatpush1.msra.mxu0 0.0
    %2346 = vmatprep.subr.mxu0 0.0
    %2347 = vmatpush1.msra.mxu0 0.0
    %2348 = vmatprep.subr.mxu0 0.0
    %2349 = vmatpush1.msra.mxu0 0.0
    %2350 = vmatprep.subr.mxu0 0.0
    %2351 = vmatpush1.msra.mxu0 0.0
    %2352 = vmatprep.subr.mxu0 0.0
    %2353 = vmatpush1.msra.mxu0 0.0
    %2354 = vmatprep.subr.mxu0 0.0
    %2355 = vmatpush1.msra.mxu0 0.0
    %2356 = vmatprep.subr.mxu0 0.0
    %2357 = vmatpush1.msra.mxu0 0.0
    %2358 = vmatprep.subr.mxu0 0.0
    %2359 = vmatpush1.msra.mxu0 0.0
    %2360 = vmatprep.subr.mxu0 0.0
    %2361 = vmatpush1.msra.mxu0 0.0
    %2362 = vmatprep.subr.mxu0 0.0
    %2363 = vmatpush1.msra.mxu0 0.0
    %2364 = vmatprep.subr.mxu0 0.0
    %2365 = vmatpush1.msra.mxu0 0.0
    %2366 = vmatprep.subr.mxu0 0.0
    %2367 = vmatpush1.msra.mxu0 0.0
    %2368 = vmatprep.subr.mxu0 0.0
    %2369 = vmatpush1.msra.mxu0 0.0
    %2370 = vmatprep.subr.mxu0 0.0
    %2371 = vmatpush1.msra.mxu0 0.0
    %2372 = vmatprep.subr.mxu0 0.0
    %2373 = vmatpush1.msra.mxu0 0.0
    %2374 = vmatprep.subr.mxu0 0.0
    %2375 = vmatpush1.msra.mxu0 0.0
    %2376 = vmatprep.subr.mxu0 0.0
    %2377 = vmatpush1.msra.mxu0 0.0
    %2378 = vmatprep.subr.mxu0 0.0
    %2379 = vmatpush1.msra.mxu0 0.0
    %2380 = vmatprep.subr.mxu0 0.0
    %2381 = vmatpush1.msra.mxu0 0.0
    %2382 = vmatprep.subr.mxu0 0.0
    %2383 = vmatpush1.msra.mxu0 0.0
    %2384 = vmatprep.subr.mxu0 0.0
    %2385 = vmatpush1.msra.mxu0 0.0
    %2386 = vmatprep.subr.mxu0 0.0
    %2387 = vmatpush1.msra.mxu0 0.0
    %2388 = vmatprep.mubr.f32.mxu0 0.0
    %2389 = vmatmul.mubr.f32.gmra.mrb[0].mxu0 %v2319
    %v2390 = vpop.f32.mrb[0].mxu0
    %v2391 = vadd.f32 0.0, %v2390
    %v2392 = vpop.f32.mrb[0].mxu0
    %2393 = vmatprep.mubr.f32.mxu0 0.0
    %2394 = vmatmul.mubr.f32.gmra.mrb[0].mxu0 %v2322
    %v2395 = vpop.f32.mrb[0].mxu0
    %v2396 = vadd.f32 0.0, %v2395
    %v2397 = vpop.f32.mrb[0].mxu0
    %2398 = vdwg.mxu0
    %2399 = vrot.lane.b32.xlu0 %v1781, 104
    %v2400 = vpop.permute.xlu0 %2399
    %2401 = vrot.lane.b32.xlu0 %v1786, 104
    %v2402 = vpop.permute.xlu0 %2401
    %2403 = vrot.lane.b32.xlu0 %v1781, 72
    %v2404 = vpop.permute.xlu0 %2403
    %2405 = vrot.lane.b32.xlu0 %v1786, 72
    %v2406 = vpop.permute.xlu0 %2405
    %v2407 = vsel %vm425, %v2400, 0
    %v2409 = vsel %vm425, %v2402, 0
    %v2411 = vsel %vm425, %v2404, 0
    %v2413 = vsel %vm425, %v2406, 0
    %2415 = vmatprep.subr.mxu0 0.0
    %2416 = vmatpush1.xpose.msra.mxu0 %v2411
    %2417 = vmatprep.subr.mxu0 0.0
    %2418 = vmatpush1.xpose.msra.mxu0 %v2413
    %2419 = vmatprep.subr.mxu0 0.0
    %2420 = vmatpush1.xpose.msra.mxu0 0.0
    %2421 = vmatprep.subr.mxu0 0.0
    %2422 = vmatpush1.xpose.msra.mxu0 0.0
    %2423 = vmatprep.subr.mxu0 0.0
    %2424 = vmatpush1.xpose.msra.mxu0 0.0
    %2425 = vmatprep.subr.mxu0 0.0
    %2426 = vmatpush1.xpose.msra.mxu0 0.0
    %2427 = vmatprep.subr.mxu0 0.0
    %2428 = vmatpush1.xpose.msra.mxu0 0.0
    %2429 = vmatprep.subr.mxu0 0.0
    %2430 = vmatpush1.xpose.msra.mxu0 0.0
    %2431 = vmatprep.subr.mxu0 0.0
    %2432 = vmatpush1.xpose.msra.mxu0 0.0
    %2433 = vmatprep.subr.mxu0 0.0
    %2434 = vmatpush1.xpose.msra.mxu0 0.0
    %2435 = vmatprep.subr.mxu0 0.0
    %2436 = vmatpush1.xpose.msra.mxu0 0.0
    %2437 = vmatprep.subr.mxu0 0.0
    %2438 = vmatpush1.xpose.msra.mxu0 0.0
    %2439 = vmatprep.subr.mxu0 0.0
    %2440 = vmatpush1.xpose.msra.mxu0 0.0
    %2441 = vmatprep.subr.mxu0 0.0
    %2442 = vmatpush1.xpose.msra.mxu0 0.0
    %2443 = vmatprep.subr.mxu0 0.0
    %2444 = vmatpush1.xpose.msra.mxu0 0.0
    %2445 = vmatprep.subr.mxu0 0.0
    %2446 = vmatpush1.xpose.msra.mxu0 0.0
    %2447 = vmatprep.subr.mxu0 0.0
    %2448 = vmatpush1.xpose.msra.mxu0 0.0
    %2449 = vmatprep.subr.mxu0 0.0
    %2450 = vmatpush1.xpose.msra.mxu0 0.0
    %2451 = vmatprep.subr.mxu0 0.0
    %2452 = vmatpush1.xpose.msra.mxu0 0.0
    %2453 = vmatprep.subr.mxu0 0.0
    %2454 = vmatpush1.xpose.msra.mxu0 0.0
    %2455 = vmatprep.subr.mxu0 0.0
    %2456 = vmatpush1.xpose.msra.mxu0 0.0
    %2457 = vmatprep.subr.mxu0 0.0
    %2458 = vmatpush1.xpose.msra.mxu0 0.0
    %2459 = vmatprep.subr.mxu0 0.0
    %2460 = vmatpush1.xpose.msra.mxu0 0.0
    %2461 = vmatprep.subr.mxu0 0.0
    %2462 = vmatpush1.xpose.msra.mxu0 0.0
    %2463 = vmatprep.subr.mxu0 0.0
    %2464 = vmatpush1.xpose.msra.mxu0 0.0
    %2465 = vmatprep.subr.mxu0 0.0
    %2466 = vmatpush1.xpose.msra.mxu0 0.0
    %2467 = vmatprep.subr.mxu0 0.0
    %2468 = vmatpush1.xpose.msra.mxu0 0.0
    %2469 = vmatprep.subr.mxu0 0.0
    %2470 = vmatpush1.xpose.msra.mxu0 0.0
    %2471 = vmatprep.subr.mxu0 0.0
    %2472 = vmatpush1.xpose.msra.mxu0 0.0
    %2473 = vmatprep.subr.mxu0 0.0
    %2474 = vmatpush1.xpose.msra.mxu0 0.0
    %2475 = vmatprep.subr.mxu0 0.0
    %2476 = vmatpush1.xpose.msra.mxu0 0.0
    %2477 = vmatprep.subr.mxu0 0.0
    %2478 = vmatpush1.xpose.msra.mxu0 0.0
    %2479 = vmatprep.mubr.f32.mxu0 0.0
    %2480 = vmatmul.mubr.f32.gmra.mrb[0].mxu0 %v2407
    %v2481 = vpop.f32.mrb[0].mxu0
    %v2482 = vadd.f32 0.0, %v2481
    %v2483 = vpop.f32.mrb[0].mxu0
    %2484 = vmatprep.mubr.f32.mxu0 0.0
    %2485 = vmatmul.mubr.f32.gmra.mrb[0].mxu0 %v2409
    %v2486 = vpop.f32.mrb[0].mxu0
    %v2487 = vadd.f32 0.0, %v2486
    %v2488 = vpop.f32.mrb[0].mxu0
    %2489 = vdwg.mxu0
    %v2490 = vmul.f32 %v2482, 0.35355338
    %v2491 = vmul.f32 %v2487, 0.35355338
    %v2492 = vadd.f32 %v2490, %v279
    %v2493 = vadd.f32 %v2491, %v280
    %v2494 = vsel %vm194, %v2492, -inf
    %2495 = vmax.xlane.f32.xlu0 %v2494
    %v2496 = vpop.xlane.xlu0 %2495
    %v2497 = vsel %vm194, %v2493, -inf
    %2498 = vmax.xlane.f32.xlu0 %v2497
    %v2499 = vpop.xlane.xlu0 %2498
    %v2500 = vsub.f32 %v2492, %v2496
    %v2501 = vsub.f32 %v2493, %v2499
    %v2502 = vmul.f32 %v2500, 1.442695
    %v2503 = vpow.pop %v2502
    %v2504 = vmul.f32 %v2501, 1.442695
    %v2505 = vpow.pop %v2504
    %v2506 = vsel %vm194, %v2503, 0.0
    %2507 = vadd.xlane.f32.xlu0 %v2506
    %v2508 = vpop.xlane.xlu0 %2507
    %v2509 = vsel %vm194, %v2505, 0.0
    %2510 = vadd.xlane.f32.xlu0 %v2509
    %v2511 = vpop.xlane.xlu0 %2510
    %v2512 = vrcp.pop %v2508
    %v2513 = vrcp.pop %v2511
    %v2514 = vmul.f32 %v2503, %v2512
    %v2515 = vmul.f32 %v2505, %v2513
    %2516 = vrot.lane.b32.xlu0 %v1781, 40
    %v2517 = vpop.permute.xlu0 %2516
    %2518 = vrot.lane.b32.xlu0 %v1786, 40
    %v2519 = vpop.permute.xlu0 %2518
    %v2523 = vsel %vm194, %v2514, 0
    %v2526 = vsel %vm194, %v2515, 0
    %2528 = vmatprep.subr.mxu0 0.0
    %2529 = vmatpush1.msra.mxu0 %v2517
    %2530 = vmatprep.subr.mxu0 0.0
    %2531 = vmatpush1.msra.mxu0 %v2519
    %2532 = vmatprep.subr.mxu0 0.0
    %2533 = vmatpush1.msra.mxu0 0.0
    %2534 = vmatprep.subr.mxu0 0.0
    %2535 = vmatpush1.msra.mxu0 0.0
    %2536 = vmatprep.subr.mxu0 0.0
    %2537 = vmatpush1.msra.mxu0 0.0
    %2538 = vmatprep.subr.mxu0 0.0
    %2539 = vmatpush1.msra.mxu0 0.0
    %2540 = vmatprep.subr.mxu0 0.0
    %2541 = vmatpush1.msra.mxu0 0.0
    %2542 = vmatprep.subr.mxu0 0.0
    %2543 = vmatpush1.msra.mxu0 0.0
    %2544 = vmatprep.subr.mxu0 0.0
    %2545 = vmatpush1.msra.mxu0 0.0
    %2546 = vmatprep.subr.mxu0 0.0
    %2547 = vmatpush1.msra.mxu0 0.0
    %2548 = vmatprep.subr.mxu0 0.0
    %2549 = vmatpush1.msra.mxu0 0.0
    %2550 = vmatprep.subr.mxu0 0.0
    %2551 = vmatpush1.msra.mxu0 0.0
    %2552 = vmatprep.subr.mxu0 0.0
    %2553 = vmatpush1.msra.mxu0 0.0
    %2554 = vmatprep.subr.mxu0 0.0
    %2555 = vmatpush1.msra.mxu0 0.0
    %2556 = vmatprep.subr.mxu0 0.0
    %2557 = vmatpush1.msra.mxu0 0.0
    %2558 = vmatprep.subr.mxu0 0.0
    %2559 = vmatpush1.msra.mxu0 0.0
    %2560 = vmatprep.subr.mxu0 0.0
    %2561 = vmatpush1.msra.mxu0 0.0
    %2562 = vmatprep.subr.mxu0 0.0
    %2563 = vmatpush1.msra.mxu0 0.0
    %2564 = vmatprep.subr.mxu0 0.0
    %2565 = vmatpush1.msra.mxu0 0.0
    %2566 = vmatprep.subr.mxu0 0.0
    %2567 = vmatpush1.msra.mxu0 0.0
    %2568 = vmatprep.subr.mxu0 0.0
    %2569 = vmatpush1.msra.mxu0 0.0
    %2570 = vmatprep.subr.mxu0 0.0
    %2571 = vmatpush1.msra.mxu0 0.0
    %2572 = vmatprep.subr.mxu0 0.0
    %2573 = vmatpush1.msra.mxu0 0.0
    %2574 = vmatprep.subr.mxu0 0.0
    %2575 = vmatpush1.msra.mxu0 0.0
    %2576 = vmatprep.subr.mxu0 0.0
    %2577 = vmatpush1.msra.mxu0 0.0
    %2578 = vmatprep.subr.mxu0 0.0
    %2579 = vmatpush1.msra.mxu0 0.0
    %2580 = vmatprep.subr.mxu0 0.0
    %2581 = vmatpush1.msra.mxu0 0.0
    %2582 = vmatprep.subr.mxu0 0.0
    %2583 = vmatpush1.msra.mxu0 0.0
    %2584 = vmatprep.subr.mxu0 0.0
    %2585 = vmatpush1.msra.mxu0 0.0
    %2586 = vmatprep.subr.mxu0 0.0
    %2587 = vmatpush1.msra.mxu0 0.0
    %2588 = vmatprep.subr.mxu0 0.0
    %2589 = vmatpush1.msra.mxu0 0.0
    %2590 = vmatprep.subr.mxu0 0.0
    %2591 = vmatpush1.msra.mxu0 0.0
    %2592 = vmatprep.mubr.f32.mxu0 0.0
    %2593 = vmatmul.mubr.f32.gmra.mrb[0].mxu0 %v2523
    %v2594 = vpop.f32.mrb[0].mxu0
    %v2595 = vadd.f32 0.0, %v2594
    %v2596 = vpop.f32.mrb[0].mxu0
    %2597 = vmatprep.mubr.f32.mxu0 0.0
    %2598 = vmatmul.mubr.f32.gmra.mrb[0].mxu0 %v2526
    %v2599 = vpop.f32.mrb[0].mxu0
    %v2600 = vadd.f32 0.0, %v2599
    %v2601 = vpop.f32.mrb[0].mxu0
    %2602 = vdwg.mxu0
    %2605 = vrot.lane.b32.xlu0 %v2187, 8
    %v2606 = vpop.permute.xlu0 %2605
    %2607 = vrot.lane.b32.xlu0 %v2192, 8
    %v2608 = vpop.permute.xlu0 %2607
    %2613 = vrot.lane.b32.xlu0 %v2391, 16
    %v2614 = vpop.permute.xlu0 %2613
    %2615 = vrot.lane.b32.xlu0 %v2396, 16
    %v2616 = vpop.permute.xlu0 %2615
    %2621 = vrot.lane.b32.xlu0 %v2595, 24
    %v2622 = vpop.permute.xlu0 %2621
    %2623 = vrot.lane.b32.xlu0 %v2600, 24
    %v2624 = vpop.permute.xlu0 %2623
    %v2627 = vsel %vm425, %v1983, %v2606
    %v2628 = vsel %vm425, %v1988, %v2608
    %v2629 = vsel %vm194, %v2627, %v2614
    %v2630 = vsel %vm194, %v2628, %v2616
    %v2631 = vsel %vm1262, %v2629, %v2622
    %v2632 = vsel %vm1262, %v2630, %v2624
    %v2633 = vld [vmem:[%s43] sm:$0xff]
    %v2634 = vld [vmem:[%s43 + $0x8] sm:$0xff]
    %v2635 = vld [vmem:[%s43 + $0x10] sm:$0xff]
    %v2636 = vld [vmem:[%s43 + $0x18] sm:$0xff]
    %v2638 = vsel %vm283, %v2631, 0
    %v2641 = vsel %vm283, %v2632, 0
    %2643 = vmatprep.subr.mxu0 0.0
    %2644 = vmatpush1.msra.mxu0 %v2633
    %2645 = vmatprep.subr.mxu0 0.0
    %2646 = vmatpush1.msra.mxu0 %v2634
    %2647 = vmatprep.subr.mxu0 0.0
    %2648 = vmatpush1.msra.mxu0 %v2635
    %2649 = vmatprep.subr.mxu0 0.0
    %2650 = vmatpush1.msra.mxu0 %v2636
    %2651 = vmatprep.subr.mxu0 0.0
    %2652 = vmatpush1.msra.mxu0 0.0
    %2653 = vmatprep.subr.mxu0 0.0
    %2654 = vmatpush1.msra.mxu0 0.0
    %2655 = vmatprep.subr.mxu0 0.0
    %2656 = vmatpush1.msra.mxu0 0.0
    %2657 = vmatprep.subr.mxu0 0.0
    %2658 = vmatpush1.msra.mxu0 0.0
    %2659 = vmatprep.subr.mxu0 0.0
    %2660 = vmatpush1.msra.mxu0 0.0
    %2661 = vmatprep.subr.mxu0 0.0
    %2662 = vmatpush1.msra.mxu0 0.0
    %2663 = vmatprep.subr.mxu0 0.0
    %2664 = vmatpush1.msra.mxu0 0.0
    %2665 = vmatprep.subr.mxu0 0.0
    %2666 = vmatpush1.msra.mxu0 0.0
    %2667 = vmatprep.subr.mxu0 0.0
    %2668 = vmatpush1.msra.mxu0 0.0
    %2669 = vmatprep.subr.mxu0 0.0
    %2670 = vmatpush1.msra.mxu0 0.0
    %2671 = vmatprep.subr.mxu0 0.0
    %2672 = vmatpush1.msra.mxu0 0.0
    %2673 = vmatprep.subr.mxu0 0.0
    %2674 = vmatpush1.msra.mxu0 0.0
    %2675 = vmatprep.subr.mxu0 0.0
    %2676 = vmatpush1.msra.mxu0 0.0
    %2677 = vmatprep.subr.mxu0 0.0
    %2678 = vmatpush1.msra.mxu0 0.0
    %2679 = vmatprep.subr.mxu0 0.0
    %2680 = vmatpush1.msra.mxu0 0.0
    %2681 = vmatprep.subr.mxu0 0.0
    %2682 = vmatpush1.msra.mxu0 0.0
    %2683 = vmatprep.subr.mxu0 0.0
    %2684 = vmatpush1.msra.mxu0 0.0
    %2685 = vmatprep.subr.mxu0 0.0
    %2686 = vmatpush1.msra.mxu0 0.0
    %2687 = vmatprep.subr.mxu0 0.0
    %2688 = vmatpush1.msra.mxu0 0.0
    %2689 = vmatprep.subr.mxu0 0.0
    %2690 = vmatpush1.msra.mxu0 0.0
    %2691 = vmatprep.subr.mxu0 0.0
    %2692 = vmatpush1.msra.mxu0 0.0
    %2693 = vmatprep.subr.mxu0 0.0
    %2694 = vmatpush1.msra.mxu0 0.0
    %2695 = vmatprep.subr.mxu0 0.0
    %2696 = vmatpush1.msra.mxu0 0.0
    %2697 = vmatprep.subr.mxu0 0.0
    %2698 = vmatpush1.msra.mxu0 0.0
    %2699 = vmatprep.subr.mxu0 0.0
    %2700 = vmatpush1.msra.mxu0 0.0
    %2701 = vmatprep.subr.mxu0 0.0
    %2702 = vmatpush1.msra.mxu0 0.0
    %2703 = vmatprep.subr.mxu0 0.0
    %2704 = vmatpush1.msra.mxu0 0.0
    %2705 = vmatprep.subr.mxu0 0.0
    %2706 = vmatpush1.msra.mxu0 0.0
    %2707 = vmatprep.mubr.f32.mxu0 0.0
    %2708 = vmatmul.mubr.f32.gmra.mrb[0].mxu0 %v2638
    %v2709 = vpop.f32.mrb[0].mxu0
    %v2710 = vadd.f32 0.0, %v2709
    %v2711 = vpop.f32.mrb[0].mxu0
    %2712 = vmatprep.mubr.f32.mxu0 0.0
    %2713 = vmatmul.mubr.f32.gmra.mrb[0].mxu0 %v2641
    %v2714 = vpop.f32.mrb[0].mxu0
    %v2715 = vadd.f32 0.0, %v2714
    %v2716 = vpop.f32.mrb[0].mxu0
    %2717 = vdwg.mxu0
    %v2718 = vadd.f32 %v1651, %v2710
    %v2719 = vadd.f32 %v1652, %v2715
    %v2720 = vld [vmem:[%s45] sm:$0x1]
    %v2722 = vlaneseq
    %v2723 = vshrl.u32 %v2722, 7
    %v2724 = vsub.s32 0, %v2723
    %v2725 = vrot.slane %v2720, %v2724
    %v2727 = vadd.f32 %v2718, %v2725
    %v2728 = vadd.f32 %v2719, %v2725
    %v2729 = vld [vmem:[%s47] sm:$0x1]
    %v2730 = vld [vmem:[%s49] sm:$0x1]
    %v2731 = vsel %vm283, %v2727, 0.0
    %2732 = vadd.xlane.f32.xlu0 %v2731
    %v2733 = vpop.xlane.xlu0 %2732
    %v2734 = vsel %vm283, %v2728, 0.0
    %2735 = vadd.xlane.f32.xlu0 %v2734
    %v2736 = vpop.xlane.xlu0 %2735
    %v2737 = vmul.f32 %v2733, %v290
    %v2738 = vmul.f32 %v2736, %v290
    %v2739 = vsub.f32 %v2727, %v2737
    %v2740 = vsub.f32 %v2728, %v2738
    %v2741 = vmul.f32 %v2739, %v2739
    %v2742 = vmul.f32 %v2740, %v2740
    %v2743 = vsel %vm283, %v2741, 0.0
    %2744 = vadd.xlane.f32.xlu0 %v2743
    %v2745 = vpop.xlane.xlu0 %2744
    %v2746 = vsel %vm283, %v2742, 0.0
    %2747 = vadd.xlane.f32.xlu0 %v2746
    %v2748 = vpop.xlane.xlu0 %2747
    %v2749 = vmul.f32 %v2745, %v290
    %v2750 = vmul.f32 %v2748, %v290
    %v2751 = vadd.f32 %v2749, 1e-05
    %v2752 = vadd.f32 %v2750, 1e-05
    %v2753 = vrsqrt.pop %v2751
    %v2754 = vrsqrt.pop %v2752
    %v2755 = vmul.f32 %v2739, %v2753
    %v2756 = vmul.f32 %v2740, %v2754
    %v2758 = vlaneseq
    %v2759 = vshrl.u32 %v2758, 7
    %v2760 = vsub.s32 0, %v2759
    %v2761 = vrot.slane %v2729, %v2760
    %v2763 = vmul.f32 %v2755, %v2761
    %v2764 = vmul.f32 %v2756, %v2761
    %v2766 = vlaneseq
    %v2767 = vshrl.u32 %v2766, 7
    %v2768 = vsub.s32 0, %v2767
    %v2769 = vrot.slane %v2730, %v2768
    %v2771 = vadd.f32 %v2763, %v2769
    %v2772 = vadd.f32 %v2764, %v2769
    %v2773 = vld [vmem:[%s51] sm:$0xff]
    %v2774 = vld [vmem:[%s51 + $0x8] sm:$0xff]
    %v2775 = vld [vmem:[%s51 + $0x10] sm:$0xff]
    %v2776 = vld [vmem:[%s51 + $0x18] sm:$0xff]
    %v2777 = vld [vmem:[%s53] sm:$0x1]
    %v2779 = vlaneseq
    %v2780 = vshrl.u32 %v2779, 7
    %v2781 = vsub.s32 0, %v2780
    %v2782 = vrot.slane %v2777, %v2781
    %v2785 = vsel %vm283, %v2771, 0
    %v2788 = vsel %vm283, %v2772, 0
    %2790 = vmatprep.subr.mxu0 0.0
    %2791 = vmatpush1.msra.mxu0 %v2773
    %2792 = vmatprep.subr.mxu0 0.0
    %2793 = vmatpush1.msra.mxu0 %v2774
    %2794 = vmatprep.subr.mxu0 0.0
    %2795 = vmatpush1.msra.mxu0 %v2775
    %2796 = vmatprep.subr.mxu0 0.0
    %2797 = vmatpush1.msra.mxu0 %v2776
    %2798 = vmatprep.subr.mxu0 0.0
    %2799 = vmatpush1.msra.mxu0 0.0
    %2800 = vmatprep.subr.mxu0 0.0
    %2801 = vmatpush1.msra.mxu0 0.0
    %2802 = vmatprep.subr.mxu0 0.0
    %2803 = vmatpush1.msra.mxu0 0.0
    %2804 = vmatprep.subr.mxu0 0.0
    %2805 = vmatpush1.msra.mxu0 0.0
    %2806 = vmatprep.subr.mxu0 0.0
    %2807 = vmatpush1.msra.mxu0 0.0
    %2808 = vmatprep.subr.mxu0 0.0
    %2809 = vmatpush1.msra.mxu0 0.0
    %2810 = vmatprep.subr.mxu0 0.0
    %2811 = vmatpush1.msra.mxu0 0.0
    %2812 = vmatprep.subr.mxu0 0.0
    %2813 = vmatpush1.msra.mxu0 0.0
    %2814 = vmatprep.subr.mxu0 0.0
    %2815 = vmatpush1.msra.mxu0 0.0
    %2816 = vmatprep.subr.mxu0 0.0
    %2817 = vmatpush1.msra.mxu0 0.0
    %2818 = vmatprep.subr.mxu0 0.0
    %2819 = vmatpush1.msra.mxu0 0.0
    %2820 = vmatprep.subr.mxu0 0.0
    %2821 = vmatpush1.msra.mxu0 0.0
    %2822 = vmatprep.subr.mxu0 0.0
    %2823 = vmatpush1.msra.mxu0 0.0
    %2824 = vmatprep.subr.mxu0 0.0
    %2825 = vmatpush1.msra.mxu0 0.0
    %2826 = vmatprep.subr.mxu0 0.0
    %2827 = vmatpush1.msra.mxu0 0.0
    %2828 = vmatprep.subr.mxu0 0.0
    %2829 = vmatpush1.msra.mxu0 0.0
    %2830 = vmatprep.subr.mxu0 0.0
    %2831 = vmatpush1.msra.mxu0 0.0
    %2832 = vmatprep.subr.mxu0 0.0
    %2833 = vmatpush1.msra.mxu0 0.0
    %2834 = vmatprep.subr.mxu0 0.0
    %2835 = vmatpush1.msra.mxu0 0.0
    %2836 = vmatprep.subr.mxu0 0.0
    %2837 = vmatpush1.msra.mxu0 0.0
    %2838 = vmatprep.subr.mxu0 0.0
    %2839 = vmatpush1.msra.mxu0 0.0
    %2840 = vmatprep.subr.mxu0 0.0
    %2841 = vmatpush1.msra.mxu0 0.0
    %2842 = vmatprep.subr.mxu0 0.0
    %2843 = vmatpush1.msra.mxu0 0.0
    %2844 = vmatprep.subr.mxu0 0.0
    %2845 = vmatpush1.msra.mxu0 0.0
    %2846 = vmatprep.subr.mxu0 0.0
    %2847 = vmatpush1.msra.mxu0 0.0
    %2848 = vmatprep.subr.mxu0 0.0
    %2849 = vmatpush1.msra.mxu0 0.0
    %2850 = vmatprep.subr.mxu0 0.0
    %2851 = vmatpush1.msra.mxu0 0.0
    %2852 = vmatprep.subr.mxu0 0.0
    %2853 = vmatpush1.msra.mxu0 0.0
    %2854 = vmatprep.mubr.f32.mxu0 0.0
    %2855 = vmatmul.mubr.f32.gmra.mrb[0].mxu0 %v2785
    %v2856 = vpop.f32.mrb[0].mxu0
    %v2857 = vadd.f32 %v2782, %v2856
    %v2858 = vpop.f32.mrb[0].mxu0
    %2859 = vmatprep.mubr.f32.mxu0 0.0
    %2860 = vmatmul.mubr.f32.gmra.mrb[0].mxu0 %v2788
    %v2861 = vpop.f32.mrb[0].mxu0
    %v2862 = vadd.f32 %v2782, %v2861
    %v2863 = vpop.f32.mrb[0].mxu0
    %2864 = vdwg.mxu0
    %v2865 = vmul.f32 %v2857, 0.5
    %v2866 = vmul.f32 %v2862, 0.5
    %v2867 = vmul.f32 %v2857, 0.70710677
    %v2868 = vmul.f32 %v2862, 0.70710677
    %vm2869 = vcmp.ge.f32.partialorder %v2867, 0.0
    %vm2870 = vcmp.ge.f32.partialorder %v2868, 0.0
    %v2871 = vsel %vm2869, 1.0, -1.0
    %v2872 = vsel %vm2870, 1.0, -1.0
    %v2873 = vand.u32 2147483647, %v2867
    %v2874 = vand.u32 2147483647, %v2868
    %v2875 = vmul.f32 %v2873, 0.3275911
    %v2876 = vmul.f32 %v2874, 0.3275911
    %v2877 = vadd.f32 %v2875, 1.0
    %v2878 = vadd.f32 %v2876, 1.0
    %v2879 = vrcp.pop %v2877
    %v2880 = vmul.f32 1.0, %v2879
    %v2881 = vrcp.pop %v2878
    %v2882 = vmul.f32 1.0, %v2881
    %v2883 = vmul.f32 %v2880, 1.0614054
    %v2884 = vmul.f32 %v2882, 1.0614054
    %v2885 = vadd.f32 %v2883, -1.4531521
    %v2886 = vadd.f32 %v2884, -1.4531521
    %v2887 = vmul.f32 %v2885, %v2880
    %v2888 = vmul.f32 %v2886, %v2882
    %v2889 = vadd.f32 %v2887, 1.4214138
    %v2890 = vadd.f32 %v2888, 1.4214138
    %v2891 = vmul.f32 %v2889, %v2880
    %v2892 = vmul.f32 %v2890, %v2882
    %v2893 = vadd.f32 %v2891, -0.28449672
    %v2894 = vadd.f32 %v2892, -0.28449672
    %v2895 = vmul.f32 %v2893, %v2880
    %v2896 = vmul.f32 %v2894, %v2882
    %v2897 = vadd.f32 %v2895, 0.2548296
    %v2898 = vadd.f32 %v2896, 0.2548296
    %v2899 = vmul.f32 %v2897, %v2880
    %v2900 = vmul.f32 %v2898, %v2882
    %v2901 = vsub.f32 0.0, %v2873
    %v2902 = vsub.f32 0.0, %v2874
    %v2903 = vmul.f32 %v2901, %v2873
    %v2904 = vmul.f32 %v2902, %v2874
    %v2905 = vmul.f32 %v2903, 1.442695
    %v2906 = vpow.pop %v2905
    %v2907 = vmul.f32 %v2904, 1.442695
    %v2908 = vpow.pop %v2907
    %v2909 = vmul.f32 %v2899, %v2906
    %v2910 = vmul.f32 %v2900, %v2908
    %v2911 = vsub.f32 1.0, %v2909
    %v2912 = vsub.f32 1.0, %v2910
    %v2913 = vmul.f32 %v2871, %v2911
    %v2914 = vmul.f32 %v2872, %v2912
    %v2915 = vadd.f32 %v2913, 1.0
    %v2916 = vadd.f32 %v2914, 1.0
    %v2917 = vmul.f32 %v2865, %v2915
    %v2918 = vmul.f32 %v2866, %v2916
    %v2919 = vld [vmem:[%s55] sm:$0xff]
    %v2920 = vld [vmem:[%s55 + $0x8] sm:$0xff]
    %v2921 = vld [vmem:[%s55 + $0x10] sm:$0xff]
    %v2922 = vld [vmem:[%s55 + $0x18] sm:$0xff]
    %v2923 = vld [vmem:[%s55 + $0x20] sm:$0xff]
    %v2924 = vld [vmem:[%s55 + $0x28] sm:$0xff]
    %v2925 = vld [vmem:[%s55 + $0x30] sm:$0xff]
    %v2926 = vld [vmem:[%s55 + $0x38] sm:$0xff]
    %v2927 = vld [vmem:[%s55 + $0x40] sm:$0xff]
    %v2928 = vld [vmem:[%s55 + $0x48] sm:$0xff]
    %v2929 = vld [vmem:[%s55 + $0x50] sm:$0xff]
    %v2930 = vld [vmem:[%s55 + $0x58] sm:$0xff]
    %v2931 = vld [vmem:[%s55 + $0x60] sm:$0xff]
    %v2932 = vld [vmem:[%s55 + $0x68] sm:$0xff]
    %v2933 = vld [vmem:[%s55 + $0x70] sm:$0xff]
    %v2934 = vld [vmem:[%s55 + $0x78] sm:$0xff]
    %2935 = vmatprep.subr.mxu0 0.0
    %2936 = vmatpush1.msra.mxu0 %v2919
    %2937 = vmatprep.subr.mxu0 0.0
    %2938 = vmatpush1.msra.mxu0 %v2920
    %2939 = vmatprep.subr.mxu0 0.0
    %2940 = vmatpush1.msra.mxu0 %v2921
    %2941 = vmatprep.subr.mxu0 0.0
    %2942 = vmatpush1.msra.mxu0 %v2922
    %2943 = vmatprep.subr.mxu0 0.0
    %2944 = vmatpush1.msra.mxu0 %v2923
    %2945 = vmatprep.subr.mxu0 0.0
    %2946 = vmatpush1.msra.mxu0 %v2924
    %2947 = vmatprep.subr.mxu0 0.0
    %2948 = vmatpush1.msra.mxu0 %v2925
    %2949 = vmatprep.subr.mxu0 0.0
    %2950 = vmatpush1.msra.mxu0 %v2926
    %2951 = vmatprep.subr.mxu0 0.0
    %2952 = vmatpush1.msra.mxu0 %v2927
    %2953 = vmatprep.subr.mxu0 0.0
    %2954 = vmatpush1.msra.mxu0 %v2928
    %2955 = vmatprep.subr.mxu0 0.0
    %2956 = vmatpush1.msra.mxu0 %v2929
    %2957 = vmatprep.subr.mxu0 0.0
    %2958 = vmatpush1.msra.mxu0 %v2930
    %2959 = vmatprep.subr.mxu0 0.0
    %2960 = vmatpush1.msra.mxu0 %v2931
    %2961 = vmatprep.subr.mxu0 0.0
    %2962 = vmatpush1.msra.mxu0 %v2932
    %2963 = vmatprep.subr.mxu0 0.0
    %2964 = vmatpush1.msra.mxu0 %v2933
    %2965 = vmatprep.subr.mxu0 0.0
    %2966 = vmatpush1.msra.mxu0 %v2934
    %2967 = vmatprep.subr.mxu0 0.0
    %2968 = vmatpush1.msra.mxu0 0.0
    %2969 = vmatprep.subr.mxu0 0.0
    %2970 = vmatpush1.msra.mxu0 0.0
    %2971 = vmatprep.subr.mxu0 0.0
    %2972 = vmatpush1.msra.mxu0 0.0
    %2973 = vmatprep.subr.mxu0 0.0
    %2974 = vmatpush1.msra.mxu0 0.0
    %2975 = vmatprep.subr.mxu0 0.0
    %2976 = vmatpush1.msra.mxu0 0.0
    %2977 = vmatprep.subr.mxu0 0.0
    %2978 = vmatpush1.msra.mxu0 0.0
    %2979 = vmatprep.subr.mxu0 0.0
    %2980 = vmatpush1.msra.mxu0 0.0
    %2981 = vmatprep.subr.mxu0 0.0
    %2982 = vmatpush1.msra.mxu0 0.0
    %2983 = vmatprep.subr.mxu0 0.0
    %2984 = vmatpush1.msra.mxu0 0.0
    %2985 = vmatprep.subr.mxu0 0.0
    %2986 = vmatpush1.msra.mxu0 0.0
    %2987 = vmatprep.subr.mxu0 0.0
    %2988 = vmatpush1.msra.mxu0 0.0
    %2989 = vmatprep.subr.mxu0 0.0
    %2990 = vmatpush1.msra.mxu0 0.0
    %2991 = vmatprep.subr.mxu0 0.0
    %2992 = vmatpush1.msra.mxu0 0.0
    %2993 = vmatprep.subr.mxu0 0.0
    %2994 = vmatpush1.msra.mxu0 0.0
    %2995 = vmatprep.subr.mxu0 0.0
    %2996 = vmatpush1.msra.mxu0 0.0
    %2997 = vmatprep.subr.mxu0 0.0
    %2998 = vmatpush1.msra.mxu0 0.0
    %2999 = vmatprep.mubr.f32.mxu0 0.0
    %3000 = vmatmul.mubr.f32.gmra.mrb[0].mxu0 %v2917
    %v3001 = vpop.f32.mrb[0].mxu0
    %v3002 = vadd.f32 0.0, %v3001
    %v3003 = vpop.f32.mrb[0].mxu0
    %3004 = vmatprep.mubr.f32.mxu0 0.0
    %3005 = vmatmul.mubr.f32.gmra.mrb[0].mxu0 %v2918
    %v3006 = vpop.f32.mrb[0].mxu0
    %v3007 = vadd.f32 0.0, %v3006
    %v3008 = vpop.f32.mrb[0].mxu0
    %3009 = vdwg.mxu0
    %v3010 = vadd.f32 %v2727, %v3002
    %v3011 = vadd.f32 %v2728, %v3007
    %v3012 = vld [vmem:[%s57] sm:$0x1]
    %v3014 = vlaneseq
    %v3015 = vshrl.u32 %v3014, 7
    %v3016 = vsub.s32 0, %v3015
    %v3017 = vrot.slane %v3012, %v3016
    %v3019 = vadd.f32 %v3010, %v3017
    %v3020 = vadd.f32 %v3011, %v3017
    %v3021 = vld [vmem:[%s61] sm:$0xff]
    %v3022 = vld [vmem:[%s61 + $0x8] sm:$0xff]
    %v3023 = vld [vmem:[%s61 + $0x10] sm:$0xff]
    %v3024 = vld [vmem:[%s61 + $0x18] sm:$0xff]
    %v3025 = vld [vmem:[%s65] sm:$0x1]
    %v3027 = vlaneseq
    %v3028 = vshrl.u32 %v3027, 7
    %v3029 = vsub.s32 0, %v3028
    %v3030 = vrot.slane %v3025, %v3029
    %v3033 = vsel %vm283, %v3019, 0
    %v3036 = vsel %vm283, %v3020, 0
    %3038 = vmatprep.subr.mxu0 0.0
    %3039 = vmatpush1.msra.mxu0 %v3021
    %3040 = vmatprep.subr.mxu0 0.0
    %3041 = vmatpush1.msra.mxu0 %v3022
    %3042 = vmatprep.subr.mxu0 0.0
    %3043 = vmatpush1.msra.mxu0 %v3023
    %3044 = vmatprep.subr.mxu0 0.0
    %3045 = vmatpush1.msra.mxu0 %v3024
    %3046 = vmatprep.subr.mxu0 0.0
    %3047 = vmatpush1.msra.mxu0 0.0
    %3048 = vmatprep.subr.mxu0 0.0
    %3049 = vmatpush1.msra.mxu0 0.0
    %3050 = vmatprep.subr.mxu0 0.0
    %3051 = vmatpush1.msra.mxu0 0.0
    %3052 = vmatprep.subr.mxu0 0.0
    %3053 = vmatpush1.msra.mxu0 0.0
    %3054 = vmatprep.subr.mxu0 0.0
    %3055 = vmatpush1.msra.mxu0 0.0
    %3056 = vmatprep.subr.mxu0 0.0
    %3057 = vmatpush1.msra.mxu0 0.0
    %3058 = vmatprep.subr.mxu0 0.0
    %3059 = vmatpush1.msra.mxu0 0.0
    %3060 = vmatprep.subr.mxu0 0.0
    %3061 = vmatpush1.msra.mxu0 0.0
    %3062 = vmatprep.subr.mxu0 0.0
    %3063 = vmatpush1.msra.mxu0 0.0
    %3064 = vmatprep.subr.mxu0 0.0
    %3065 = vmatpush1.msra.mxu0 0.0
    %3066 = vmatprep.subr.mxu0 0.0
    %3067 = vmatpush1.msra.mxu0 0.0
    %3068 = vmatprep.subr.mxu0 0.0
    %3069 = vmatpush1.msra.mxu0 0.0
    %3070 = vmatprep.subr.mxu0 0.0
    %3071 = vmatpush1.msra.mxu0 0.0
    %3072 = vmatprep.subr.mxu0 0.0
    %3073 = vmatpush1.msra.mxu0 0.0
    %3074 = vmatprep.subr.mxu0 0.0
    %3075 = vmatpush1.msra.mxu0 0.0
    %3076 = vmatprep.subr.mxu0 0.0
    %3077 = vmatpush1.msra.mxu0 0.0
    %3078 = vmatprep.subr.mxu0 0.0
    %3079 = vmatpush1.msra.mxu0 0.0
    %3080 = vmatprep.subr.mxu0 0.0
    %3081 = vmatpush1.msra.mxu0 0.0
    %3082 = vmatprep.subr.mxu0 0.0
    %3083 = vmatpush1.msra.mxu0 0.0
    %3084 = vmatprep.subr.mxu0 0.0
    %3085 = vmatpush1.msra.mxu0 0.0
    %3086 = vmatprep.subr.mxu0 0.0
    %3087 = vmatpush1.msra.mxu0 0.0
    %3088 = vmatprep.subr.mxu0 0.0
    %3089 = vmatpush1.msra.mxu0 0.0
    %3090 = vmatprep.subr.mxu0 0.0
    %3091 = vmatpush1.msra.mxu0 0.0
    %3092 = vmatprep.subr.mxu0 0.0
    %3093 = vmatpush1.msra.mxu0 0.0
    %3094 = vmatprep.subr.mxu0 0.0
    %3095 = vmatpush1.msra.mxu0 0.0
    %3096 = vmatprep.subr.mxu0 0.0
    %3097 = vmatpush1.msra.mxu0 0.0
    %3098 = vmatprep.subr.mxu0 0.0
    %3099 = vmatpush1.msra.mxu0 0.0
    %3100 = vmatprep.subr.mxu0 0.0
    %3101 = vmatpush1.msra.mxu0 0.0
    %3102 = vmatprep.mubr.f32.mxu0 0.0
    %3103 = vmatmul.mubr.f32.gmra.mrb[0].mxu0 %v3033
    %v3104 = vpop.f32.mrb[0].mxu0
    %v3105 = vadd.f32 %v3030, %v3104
    %v3106 = vpop.f32.mrb[0].mxu0
    %3107 = vmatprep.mubr.f32.mxu0 0.0
    %3108 = vmatmul.mubr.f32.gmra.mrb[0].mxu0 %v3036
    %v3109 = vpop.f32.mrb[0].mxu0
    %v3110 = vadd.f32 %v3030, %v3109
    %v3111 = vpop.f32.mrb[0].mxu0
    %3112 = vdwg.mxu0
    %v3113 = vld [vmem:[#allocation5] sm:$0x3]
    %v3114 = vld [vmem:[%s63] sm:$0xff]
    %v3115 = vld [vmem:[%s63 + $0x8] sm:$0xff]
    %v3116 = vld [vmem:[%s63 + $0x10] sm:$0xff]
    %v3117 = vld [vmem:[%s63 + $0x18] sm:$0xff]
    %v3119 = vsel %vm283, %v3113, 0
    %3121 = vmatprep.subr.mxu0 0.0
    %3122 = vmatpush1.msra.mxu0 %v3114
    %3123 = vmatprep.subr.mxu0 0.0
    %3124 = vmatpush1.msra.mxu0 %v3115
    %3125 = vmatprep.subr.mxu0 0.0
    %3126 = vmatpush1.msra.mxu0 %v3116
    %3127 = vmatprep.subr.mxu0 0.0
    %3128 = vmatpush1.msra.mxu0 %v3117
    %3129 = vmatprep.subr.mxu0 0.0
    %3130 = vmatpush1.msra.mxu0 0.0
    %3131 = vmatprep.subr.mxu0 0.0
    %3132 = vmatpush1.msra.mxu0 0.0
    %3133 = vmatprep.subr.mxu0 0.0
    %3134 = vmatpush1.msra.mxu0 0.0
    %3135 = vmatprep.subr.mxu0 0.0
    %3136 = vmatpush1.msra.mxu0 0.0
    %3137 = vmatprep.subr.mxu0 0.0
    %3138 = vmatpush1.msra.mxu0 0.0
    %3139 = vmatprep.subr.mxu0 0.0
    %3140 = vmatpush1.msra.mxu0 0.0
    %3141 = vmatprep.subr.mxu0 0.0
    %3142 = vmatpush1.msra.mxu0 0.0
    %3143 = vmatprep.subr.mxu0 0.0
    %3144 = vmatpush1.msra.mxu0 0.0
    %3145 = vmatprep.subr.mxu0 0.0
    %3146 = vmatpush1.msra.mxu0 0.0
    %3147 = vmatprep.subr.mxu0 0.0
    %3148 = vmatpush1.msra.mxu0 0.0
    %3149 = vmatprep.subr.mxu0 0.0
    %3150 = vmatpush1.msra.mxu0 0.0
    %3151 = vmatprep.subr.mxu0 0.0
    %3152 = vmatpush1.msra.mxu0 0.0
    %3153 = vmatprep.subr.mxu0 0.0
    %3154 = vmatpush1.msra.mxu0 0.0
    %3155 = vmatprep.subr.mxu0 0.0
    %3156 = vmatpush1.msra.mxu0 0.0
    %3157 = vmatprep.subr.mxu0 0.0
    %3158 = vmatpush1.msra.mxu0 0.0
    %3159 = vmatprep.subr.mxu0 0.0
    %3160 = vmatpush1.msra.mxu0 0.0
    %3161 = vmatprep.subr.mxu0 0.0
    %3162 = vmatpush1.msra.mxu0 0.0
    %3163 = vmatprep.subr.mxu0 0.0
    %3164 = vmatpush1.msra.mxu0 0.0
    %3165 = vmatprep.subr.mxu0 0.0
    %3166 = vmatpush1.msra.mxu0 0.0
    %3167 = vmatprep.subr.mxu0 0.0
    %3168 = vmatpush1.msra.mxu0 0.0
    %3169 = vmatprep.subr.mxu0 0.0
    %3170 = vmatpush1.msra.mxu0 0.0
    %3171 = vmatprep.subr.mxu0 0.0
    %3172 = vmatpush1.msra.mxu0 0.0
    %3173 = vmatprep.subr.mxu0 0.0
    %3174 = vmatpush1.msra.mxu0 0.0
    %3175 = vmatprep.subr.mxu0 0.0
    %3176 = vmatpush1.msra.mxu0 0.0
    %3177 = vmatprep.subr.mxu0 0.0
    %3178 = vmatpush1.msra.mxu0 0.0
    %3179 = vmatprep.subr.mxu0 0.0
    %3180 = vmatpush1.msra.mxu0 0.0
    %3181 = vmatprep.subr.mxu0 0.0
    %3182 = vmatpush1.msra.mxu0 0.0
    %3183 = vmatprep.subr.mxu0 0.0
    %3184 = vmatpush1.msra.mxu0 0.0
    %3185 = vmatprep.mubr.f32.mxu0 0.0
    %3186 = vmatmul.mubr.f32.gmra.mrb[0].mxu0 %v3119
    %v3187 = vpop.f32.mrb[0].mxu0
    %v3188 = vadd.f32 0.0, %v3187
    %v3189 = vpop.f32.mrb[0].mxu0
    %3190 = vdwg.mxu0
    %v3192 = vrot.slane %v3188, 1
    %v3195 = vadd.f32 %v3105, %v3188
    %v3196 = vadd.f32 %v3110, %v3192
    %v3197 = vtanh.pop %v3195
    %v3198 = vtanh.pop %v3196
    %vm3199 = vcmp.gt.f32.partialorder %v3197, 0.0
    %vm3200 = vcmp.gt.f32.partialorder %v3198, 0.0
    %v3201 = vsel %vm3199, 1, 0
    %v3202 = vsel %vm3200, 1, 0
    %v3203 = vcvt.s32.f32 %v3201
    %v3204 = vcvt.s32.f32 %v3202
    %v3205 = vmul.f32 %v3197, %v3203
    %v3206 = vmul.f32 %v3198, %v3204
    %v3209 = vrot.slane %v3206, 7
    %vm3210 = vcmask 1041409
    %v3211 = vsel %vm3210, %v3209, %v3205
    %v3212 = vsel %vm283, %v3211, 0
    %3214 = vmatprep.subr.mxu0 0.0
    %3215 = vmatpush1.msra.mxu0 %v3114
    %3216 = vmatprep.subr.mxu0 0.0
    %3217 = vmatpush1.msra.mxu0 %v3115
    %3218 = vmatprep.subr.mxu0 0.0
    %3219 = vmatpush1.msra.mxu0 %v3116
    %3220 = vmatprep.subr.mxu0 0.0
    %3221 = vmatpush1.msra.mxu0 %v3117
    %3222 = vmatprep.subr.mxu0 0.0
    %3223 = vmatpush1.msra.mxu0 0.0
    %3224 = vmatprep.subr.mxu0 0.0
    %3225 = vmatpush1.msra.mxu0 0.0
    %3226 = vmatprep.subr.mxu0 0.0
    %3227 = vmatpush1.msra.mxu0 0.0
    %3228 = vmatprep.subr.mxu0 0.0
    %3229 = vmatpush1.msra.mxu0 0.0
    %3230 = vmatprep.subr.mxu0 0.0
    %3231 = vmatpush1.msra.mxu0 0.0
    %3232 = vmatprep.subr.mxu0 0.0
    %3233 = vmatpush1.msra.mxu0 0.0
    %3234 = vmatprep.subr.mxu0 0.0
    %3235 = vmatpush1.msra.mxu0 0.0
    %3236 = vmatprep.subr.mxu0 0.0
    %3237 = vmatpush1.msra.mxu0 0.0
    %3238 = vmatprep.subr.mxu0 0.0
    %3239 = vmatpush1.msra.mxu0 0.0
    %3240 = vmatprep.subr.mxu0 0.0
    %3241 = vmatpush1.msra.mxu0 0.0
    %3242 = vmatprep.subr.mxu0 0.0
    %3243 = vmatpush1.msra.mxu0 0.0
    %3244 = vmatprep.subr.mxu0 0.0
    %3245 = vmatpush1.msra.mxu0 0.0
    %3246 = vmatprep.subr.mxu0 0.0
    %3247 = vmatpush1.msra.mxu0 0.0
    %3248 = vmatprep.subr.mxu0 0.0
    %3249 = vmatpush1.msra.mxu0 0.0
    %3250 = vmatprep.subr.mxu0 0.0
    %3251 = vmatpush1.msra.mxu0 0.0
    %3252 = vmatprep.subr.mxu0 0.0
    %3253 = vmatpush1.msra.mxu0 0.0
    %3254 = vmatprep.subr.mxu0 0.0
    %3255 = vmatpush1.msra.mxu0 0.0
    %3256 = vmatprep.subr.mxu0 0.0
    %3257 = vmatpush1.msra.mxu0 0.0
    %3258 = vmatprep.subr.mxu0 0.0
    %3259 = vmatpush1.msra.mxu0 0.0
    %3260 = vmatprep.subr.mxu0 0.0
    %3261 = vmatpush1.msra.mxu0 0.0
    %3262 = vmatprep.subr.mxu0 0.0
    %3263 = vmatpush1.msra.mxu0 0.0
    %3264 = vmatprep.subr.mxu0 0.0
    %3265 = vmatpush1.msra.mxu0 0.0
    %3266 = vmatprep.subr.mxu0 0.0
    %3267 = vmatpush1.msra.mxu0 0.0
    %3268 = vmatprep.subr.mxu0 0.0
    %3269 = vmatpush1.msra.mxu0 0.0
    %3270 = vmatprep.subr.mxu0 0.0
    %3271 = vmatpush1.msra.mxu0 0.0
    %3272 = vmatprep.subr.mxu0 0.0
    %3273 = vmatpush1.msra.mxu0 0.0
    %3274 = vmatprep.subr.mxu0 0.0
    %3275 = vmatpush1.msra.mxu0 0.0
    %3276 = vmatprep.subr.mxu0 0.0
    %3277 = vmatpush1.msra.mxu0 0.0
    %3278 = vmatprep.mubr.f32.mxu0 0.0
    %3279 = vmatmul.mubr.f32.gmra.mrb[0].mxu0 %v3212
    %v3280 = vpop.f32.mrb[0].mxu0
    %v3281 = vadd.f32 0.0, %v3280
    %v3282 = vpop.f32.mrb[0].mxu0
    %3283 = vdwg.mxu0
    %v3285 = vrot.slane %v3281, 7
    %v3288 = vadd.f32 %v3105, %v3285
    %v3289 = vadd.f32 %v3110, %v3281
    %v3290 = vtanh.pop %v3288
    %v3291 = vtanh.pop %v3289
    %vm3292 = vcmp.gt.f32.partialorder %v3290, 0.0
    %vm3293 = vcmp.gt.f32.partialorder %v3291, 0.0
    %v3294 = vsel %vm3292, 1, 0
    %v3295 = vsel %vm3293, 1, 0
    %v3296 = vcvt.s32.f32 %v3294
    %v3297 = vcvt.s32.f32 %v3295
    %v3298 = vmul.f32 %v3290, %v3296
    %v3299 = vmul.f32 %v3291, %v3297
    %v3302 = vrot.slane %v3298, 1
    %v3303 = vsel %vm3210, %v3299, %v3302
    %v3304 = vsel %vm283, %v3303, 0
    %3306 = vmatprep.subr.mxu0 0.0
    %3307 = vmatpush1.msra.mxu0 %v3114
    %3308 = vmatprep.subr.mxu0 0.0
    %3309 = vmatpush1.msra.mxu0 %v3115
    %3310 = vmatprep.subr.mxu0 0.0
    %3311 = vmatpush1.msra.mxu0 %v3116
    %3312 = vmatprep.subr.mxu0 0.0
    %3313 = vmatpush1.msra.mxu0 %v3117
    %3314 = vmatprep.subr.mxu0 0.0
    %3315 = vmatpush1.msra.mxu0 0.0
    %3316 = vmatprep.subr.mxu0 0.0
    %3317 = vmatpush1.msra.mxu0 0.0
    %3318 = vmatprep.subr.mxu0 0.0
    %3319 = vmatpush1.msra.mxu0 0.0
    %3320 = vmatprep.subr.mxu0 0.0
    %3321 = vmatpush1.msra.mxu0 0.0
    %3322 = vmatprep.subr.mxu0 0.0
    %3323 = vmatpush1.msra.mxu0 0.0
    %3324 = vmatprep.subr.mxu0 0.0
    %3325 = vmatpush1.msra.mxu0 0.0
    %3326 = vmatprep.subr.mxu0 0.0
    %3327 = vmatpush1.msra.mxu0 0.0
    %3328 = vmatprep.subr.mxu0 0.0
    %3329 = vmatpush1.msra.mxu0 0.0
    %3330 = vmatprep.subr.mxu0 0.0
    %3331 = vmatpush1.msra.mxu0 0.0
    %3332 = vmatprep.subr.mxu0 0.0
    %3333 = vmatpush1.msra.mxu0 0.0
    %3334 = vmatprep.subr.mxu0 0.0
    %3335 = vmatpush1.msra.mxu0 0.0
    %3336 = vmatprep.subr.mxu0 0.0
    %3337 = vmatpush1.msra.mxu0 0.0
    %3338 = vmatprep.subr.mxu0 0.0
    %3339 = vmatpush1.msra.mxu0 0.0
    %3340 = vmatprep.subr.mxu0 0.0
    %3341 = vmatpush1.msra.mxu0 0.0
    %3342 = vmatprep.subr.mxu0 0.0
    %3343 = vmatpush1.msra.mxu0 0.0
    %3344 = vmatprep.subr.mxu0 0.0
    %3345 = vmatpush1.msra.mxu0 0.0
    %3346 = vmatprep.subr.mxu0 0.0
    %3347 = vmatpush1.msra.mxu0 0.0
    %3348 = vmatprep.subr.mxu0 0.0
    %3349 = vmatpush1.msra.mxu0 0.0
    %3350 = vmatprep.subr.mxu0 0.0
    %3351 = vmatpush1.msra.mxu0 0.0
    %3352 = vmatprep.subr.mxu0 0.0
    %3353 = vmatpush1.msra.mxu0 0.0
    %3354 = vmatprep.subr.mxu0 0.0
    %3355 = vmatpush1.msra.mxu0 0.0
    %3356 = vmatprep.subr.mxu0 0.0
    %3357 = vmatpush1.msra.mxu0 0.0
    %3358 = vmatprep.subr.mxu0 0.0
    %3359 = vmatpush1.msra.mxu0 0.0
    %3360 = vmatprep.subr.mxu0 0.0
    %3361 = vmatpush1.msra.mxu0 0.0
    %3362 = vmatprep.subr.mxu0 0.0
    %3363 = vmatpush1.msra.mxu0 0.0
    %3364 = vmatprep.subr.mxu0 0.0
    %3365 = vmatpush1.msra.mxu0 0.0
    %3366 = vmatprep.subr.mxu0 0.0
    %3367 = vmatpush1.msra.mxu0 0.0
    %3368 = vmatprep.subr.mxu0 0.0
    %3369 = vmatpush1.msra.mxu0 0.0
    %3370 = vmatprep.mubr.f32.mxu0 0.0
    %3371 = vmatmul.mubr.f32.gmra.mrb[0].mxu0 %v3304
    %v3372 = vpop.f32.mrb[0].mxu0
    %v3373 = vadd.f32 0.0, %v3372
    %v3374 = vpop.f32.mrb[0].mxu0
    %3375 = vdwg.mxu0
    %v3377 = vrot.slane %v3373, 6
    %v3378 = vrot.slane %v3373, 7
    %v3381 = vadd.f32 %v3105, %v3377
    %v3382 = vadd.f32 %v3110, %v3378
    %v3383 = vtanh.pop %v3381
    %v3384 = vtanh.pop %v3382
    %vm3385 = vcmp.gt.f32.partialorder %v3383, 0.0
    %vm3386 = vcmp.gt.f32.partialorder %v3384, 0.0
    %v3387 = vsel %vm3385, 1, 0
    %v3388 = vsel %vm3386, 1, 0
    %v3389 = vcvt.s32.f32 %v3387
    %v3390 = vcvt.s32.f32 %v3388
    %v3391 = vmul.f32 %v3383, %v3389
    %v3392 = vmul.f32 %v3384, %v3390
    %v3395 = vrot.slane %v3391, 2
    %v3396 = vrot.slane %v3392, 1
    %v3397 = vsel %vm3210, %v3396, %v3395
    %v3398 = vsel %vm283, %v3397, 0
    %3400 = vmatprep.subr.mxu0 0.0
    %3401 = vmatpush1.msra.mxu0 %v3114
    %3402 = vmatprep.subr.mxu0 0.0
    %3403 = vmatpush1.msra.mxu0 %v3115
    %3404 = vmatprep.subr.mxu0 0.0
    %3405 = vmatpush1.msra.mxu0 %v3116
    %3406 = vmatprep.subr.mxu0 0.0
    %3407 = vmatpush1.msra.mxu0 %v3117
    %3408 = vmatprep.subr.mxu0 0.0
    %3409 = vmatpush1.msra.mxu0 0.0
    %3410 = vmatprep.subr.mxu0 0.0
    %3411 = vmatpush1.msra.mxu0 0.0
    %3412 = vmatprep.subr.mxu0 0.0
    %3413 = vmatpush1.msra.mxu0 0.0
    %3414 = vmatprep.subr.mxu0 0.0
    %3415 = vmatpush1.msra.mxu0 0.0
    %3416 = vmatprep.subr.mxu0 0.0
    %3417 = vmatpush1.msra.mxu0 0.0
    %3418 = vmatprep.subr.mxu0 0.0
    %3419 = vmatpush1.msra.mxu0 0.0
    %3420 = vmatprep.subr.mxu0 0.0
    %3421 = vmatpush1.msra.mxu0 0.0
    %3422 = vmatprep.subr.mxu0 0.0
    %3423 = vmatpush1.msra.mxu0 0.0
    %3424 = vmatprep.subr.mxu0 0.0
    %3425 = vmatpush1.msra.mxu0 0.0
    %3426 = vmatprep.subr.mxu0 0.0
    %3427 = vmatpush1.msra.mxu0 0.0
    %3428 = vmatprep.subr.mxu0 0.0
    %3429 = vmatpush1.msra.mxu0 0.0
    %3430 = vmatprep.subr.mxu0 0.0
    %3431 = vmatpush1.msra.mxu0 0.0
    %3432 = vmatprep.subr.mxu0 0.0
    %3433 = vmatpush1.msra.mxu0 0.0
    %3434 = vmatprep.subr.mxu0 0.0
    %3435 = vmatpush1.msra.mxu0 0.0
    %3436 = vmatprep.subr.mxu0 0.0
    %3437 = vmatpush1.msra.mxu0 0.0
    %3438 = vmatprep.subr.mxu0 0.0
    %3439 = vmatpush1.msra.mxu0 0.0
    %3440 = vmatprep.subr.mxu0 0.0
    %3441 = vmatpush1.msra.mxu0 0.0
    %3442 = vmatprep.subr.mxu0 0.0
    %3443 = vmatpush1.msra.mxu0 0.0
    %3444 = vmatprep.subr.mxu0 0.0
    %3445 = vmatpush1.msra.mxu0 0.0
    %3446 = vmatprep.subr.mxu0 0.0
    %3447 = vmatpush1.msra.mxu0 0.0
    %3448 = vmatprep.subr.mxu0 0.0
    %3449 = vmatpush1.msra.mxu0 0.0
    %3450 = vmatprep.subr.mxu0 0.0
    %3451 = vmatpush1.msra.mxu0 0.0
    %3452 = vmatprep.subr.mxu0 0.0
    %3453 = vmatpush1.msra.mxu0 0.0
    %3454 = vmatprep.subr.mxu0 0.0
    %3455 = vmatpush1.msra.mxu0 0.0
    %3456 = vmatprep.subr.mxu0 0.0
    %3457 = vmatpush1.msra.mxu0 0.0
    %3458 = vmatprep.subr.mxu0 0.0
    %3459 = vmatpush1.msra.mxu0 0.0
    %3460 = vmatprep.subr.mxu0 0.0
    %3461 = vmatpush1.msra.mxu0 0.0
    %3462 = vmatprep.subr.mxu0 0.0
    %3463 = vmatpush1.msra.mxu0 0.0
    %3464 = vmatprep.mubr.f32.mxu0 0.0
    %3465 = vmatmul.mubr.f32.gmra.mrb[0].mxu0 %v3398
    %v3466 = vpop.f32.mrb[0].mxu0
    %v3467 = vadd.f32 0.0, %v3466
    %v3468 = vpop.f32.mrb[0].mxu0
    %3469 = vdwg.mxu0
    %v3471 = vrot.slane %v3467, 5
    %v3472 = vrot.slane %v3467, 6
    %v3475 = vadd.f32 %v3105, %v3471
    %v3476 = vadd.f32 %v3110, %v3472
    %v3477 = vtanh.pop %v3475
    %v3478 = vtanh.pop %v3476
    %vm3479 = vcmp.gt.f32.partialorder %v3477, 0.0
    %vm3480 = vcmp.gt.f32.partialorder %v3478, 0.0
    %v3481 = vsel %vm3479, 1, 0
    %v3482 = vsel %vm3480, 1, 0
    %v3483 = vcvt.s32.f32 %v3481
    %v3484 = vcvt.s32.f32 %v3482
    %v3485 = vmul.f32 %v3477, %v3483
    %v3486 = vmul.f32 %v3478, %v3484
    %v3489 = vrot.slane %v3485, 3
    %v3490 = vrot.slane %v3486, 2
    %v3491 = vsel %vm3210, %v3490, %v3489
    %v3492 = vsel %vm283, %v3491, 0
    %3494 = vmatprep.subr.mxu0 0.0
    %3495 = vmatpush1.msra.mxu0 %v3114
    %3496 = vmatprep.subr.mxu0 0.0
    %3497 = vmatpush1.msra.mxu0 %v3115
    %3498 = vmatprep.subr.mxu0 0.0
    %3499 = vmatpush1.msra.mxu0 %v3116
    %3500 = vmatprep.subr.mxu0 0.0
    %3501 = vmatpush1.msra.mxu0 %v3117
    %3502 = vmatprep.subr.mxu0 0.0
    %3503 = vmatpush1.msra.mxu0 0.0
    %3504 = vmatprep.subr.mxu0 0.0
    %3505 = vmatpush1.msra.mxu0 0.0
    %3506 = vmatprep.subr.mxu0 0.0
    %3507 = vmatpush1.msra.mxu0 0.0
    %3508 = vmatprep.subr.mxu0 0.0
    %3509 = vmatpush1.msra.mxu0 0.0
    %3510 = vmatprep.subr.mxu0 0.0
    %3511 = vmatpush1.msra.mxu0 0.0
    %3512 = vmatprep.subr.mxu0 0.0
    %3513 = vmatpush1.msra.mxu0 0.0
    %3514 = vmatprep.subr.mxu0 0.0
    %3515 = vmatpush1.msra.mxu0 0.0
    %3516 = vmatprep.subr.mxu0 0.0
    %3517 = vmatpush1.msra.mxu0 0.0
    %3518 = vmatprep.subr.mxu0 0.0
    %3519 = vmatpush1.msra.mxu0 0.0
    %3520 = vmatprep.subr.mxu0 0.0
    %3521 = vmatpush1.msra.mxu0 0.0
    %3522 = vmatprep.subr.mxu0 0.0
    %3523 = vmatpush1.msra.mxu0 0.0
    %3524 = vmatprep.subr.mxu0 0.0
    %3525 = vmatpush1.msra.mxu0 0.0
    %3526 = vmatprep.subr.mxu0 0.0
    %3527 = vmatpush1.msra.mxu0 0.0
    %3528 = vmatprep.subr.mxu0 0.0
    %3529 = vmatpush1.msra.mxu0 0.0
    %3530 = vmatprep.subr.mxu0 0.0
    %3531 = vmatpush1.msra.mxu0 0.0
    %3532 = vmatprep.subr.mxu0 0.0
    %3533 = vmatpush1.msra.mxu0 0.0
    %3534 = vmatprep.subr.mxu0 0.0
    %3535 = vmatpush1.msra.mxu0 0.0
    %3536 = vmatprep.subr.mxu0 0.0
    %3537 = vmatpush1.msra.mxu0 0.0
    %3538 = vmatprep.subr.mxu0 0.0
    %3539 = vmatpush1.msra.mxu0 0.0
    %3540 = vmatprep.subr.mxu0 0.0
    %3541 = vmatpush1.msra.mxu0 0.0
    %3542 = vmatprep.subr.mxu0 0.0
    %3543 = vmatpush1.msra.mxu0 0.0
    %3544 = vmatprep.subr.mxu0 0.0
    %3545 = vmatpush1.msra.mxu0 0.0
    %3546 = vmatprep.subr.mxu0 0.0
    %3547 = vmatpush1.msra.mxu0 0.0
    %3548 = vmatprep.subr.mxu0 0.0
    %3549 = vmatpush1.msra.mxu0 0.0
    %3550 = vmatprep.subr.mxu0 0.0
    %3551 = vmatpush1.msra.mxu0 0.0
    %3552 = vmatprep.subr.mxu0 0.0
    %3553 = vmatpush1.msra.mxu0 0.0
    %3554 = vmatprep.subr.mxu0 0.0
    %3555 = vmatpush1.msra.mxu0 0.0
    %3556 = vmatprep.subr.mxu0 0.0
    %3557 = vmatpush1.msra.mxu0 0.0
    %3558 = vmatprep.mubr.f32.mxu0 0.0
    %3559 = vmatmul.mubr.f32.gmra.mrb[0].mxu0 %v3492
    %v3560 = vpop.f32.mrb[0].mxu0
    %v3561 = vadd.f32 0.0, %v3560
    %v3562 = vpop.f32.mrb[0].mxu0
    %3563 = vdwg.mxu0
    %v3565 = vrot.slane %v3561, 4
    %v3566 = vrot.slane %v3561, 5
    %v3569 = vadd.f32 %v3105, %v3565
    %v3570 = vadd.f32 %v3110, %v3566
    %v3571 = vtanh.pop %v3569
    %v3572 = vtanh.pop %v3570
    %vm3573 = vcmp.gt.f32.partialorder %v3571, 0.0
    %vm3574 = vcmp.gt.f32.partialorder %v3572, 0.0
    %v3575 = vsel %vm3573, 1, 0
    %v3576 = vsel %vm3574, 1, 0
    %v3577 = vcvt.s32.f32 %v3575
    %v3578 = vcvt.s32.f32 %v3576
    %v3579 = vmul.f32 %v3571, %v3577
    %v3580 = vmul.f32 %v3572, %v3578
    %v3583 = vrot.slane %v3579, 4
    %v3584 = vrot.slane %v3580, 3
    %v3585 = vsel %vm3210, %v3584, %v3583
    %v3586 = vsel %vm283, %v3585, 0
    %3588 = vmatprep.subr.mxu0 0.0
    %3589 = vmatpush1.msra.mxu0 %v3114
    %3590 = vmatprep.subr.mxu0 0.0
    %3591 = vmatpush1.msra.mxu0 %v3115
    %3592 = vmatprep.subr.mxu0 0.0
    %3593 = vmatpush1.msra.mxu0 %v3116
    %3594 = vmatprep.subr.mxu0 0.0
    %3595 = vmatpush1.msra.mxu0 %v3117
    %3596 = vmatprep.subr.mxu0 0.0
    %3597 = vmatpush1.msra.mxu0 0.0
    %3598 = vmatprep.subr.mxu0 0.0
    %3599 = vmatpush1.msra.mxu0 0.0
    %3600 = vmatprep.subr.mxu0 0.0
    %3601 = vmatpush1.msra.mxu0 0.0
    %3602 = vmatprep.subr.mxu0 0.0
    %3603 = vmatpush1.msra.mxu0 0.0
    %3604 = vmatprep.subr.mxu0 0.0
    %3605 = vmatpush1.msra.mxu0 0.0
    %3606 = vmatprep.subr.mxu0 0.0
    %3607 = vmatpush1.msra.mxu0 0.0
    %3608 = vmatprep.subr.mxu0 0.0
    %3609 = vmatpush1.msra.mxu0 0.0
    %3610 = vmatprep.subr.mxu0 0.0
    %3611 = vmatpush1.msra.mxu0 0.0
    %3612 = vmatprep.subr.mxu0 0.0
    %3613 = vmatpush1.msra.mxu0 0.0
    %3614 = vmatprep.subr.mxu0 0.0
    %3615 = vmatpush1.msra.mxu0 0.0
    %3616 = vmatprep.subr.mxu0 0.0
    %3617 = vmatpush1.msra.mxu0 0.0
    %3618 = vmatprep.subr.mxu0 0.0
    %3619 = vmatpush1.msra.mxu0 0.0
    %3620 = vmatprep.subr.mxu0 0.0
    %3621 = vmatpush1.msra.mxu0 0.0
    %3622 = vmatprep.subr.mxu0 0.0
    %3623 = vmatpush1.msra.mxu0 0.0
    %3624 = vmatprep.subr.mxu0 0.0
    %3625 = vmatpush1.msra.mxu0 0.0
    %3626 = vmatprep.subr.mxu0 0.0
    %3627 = vmatpush1.msra.mxu0 0.0
    %3628 = vmatprep.subr.mxu0 0.0
    %3629 = vmatpush1.msra.mxu0 0.0
    %3630 = vmatprep.subr.mxu0 0.0
    %3631 = vmatpush1.msra.mxu0 0.0
    %3632 = vmatprep.subr.mxu0 0.0
    %3633 = vmatpush1.msra.mxu0 0.0
    %3634 = vmatprep.subr.mxu0 0.0
    %3635 = vmatpush1.msra.mxu0 0.0
    %3636 = vmatprep.subr.mxu0 0.0
    %3637 = vmatpush1.msra.mxu0 0.0
    %3638 = vmatprep.subr.mxu0 0.0
    %3639 = vmatpush1.msra.mxu0 0.0
    %3640 = vmatprep.subr.mxu0 0.0
    %3641 = vmatpush1.msra.mxu0 0.0
    %3642 = vmatprep.subr.mxu0 0.0
    %3643 = vmatpush1.msra.mxu0 0.0
    %3644 = vmatprep.subr.mxu0 0.0
    %3645 = vmatpush1.msra.mxu0 0.0
    %3646 = vmatprep.subr.mxu0 0.0
    %3647 = vmatpush1.msra.mxu0 0.0
    %3648 = vmatprep.subr.mxu0 0.0
    %3649 = vmatpush1.msra.mxu0 0.0
    %3650 = vmatprep.subr.mxu0 0.0
    %3651 = vmatpush1.msra.mxu0 0.0
    %3652 = vmatprep.mubr.f32.mxu0 0.0
    %3653 = vmatmul.mubr.f32.gmra.mrb[0].mxu0 %v3586
    %v3654 = vpop.f32.mrb[0].mxu0
    %v3655 = vadd.f32 0.0, %v3654
    %v3656 = vpop.f32.mrb[0].mxu0
    %3657 = vdwg.mxu0
    %v3659 = vrot.slane %v3655, 3
    %v3660 = vrot.slane %v3655, 4
    %v3663 = vadd.f32 %v3105, %v3659
    %v3664 = vadd.f32 %v3110, %v3660
    %v3665 = vtanh.pop %v3663
    %v3666 = vtanh.pop %v3664
    %vm3667 = vcmp.gt.f32.partialorder %v3665, 0.0
    %vm3668 = vcmp.gt.f32.partialorder %v3666, 0.0
    %v3669 = vsel %vm3667, 1, 0
    %v3670 = vsel %vm3668, 1, 0
    %v3671 = vcvt.s32.f32 %v3669
    %v3672 = vcvt.s32.f32 %v3670
    %v3673 = vmul.f32 %v3665, %v3671
    %v3674 = vmul.f32 %v3666, %v3672
    %v3677 = vrot.slane %v3673, 5
    %v3678 = vrot.slane %v3674, 4
    %v3679 = vsel %vm3210, %v3678, %v3677
    %v3680 = vsel %vm283, %v3679, 0
    %3682 = vmatprep.subr.mxu0 0.0
    %3683 = vmatpush1.msra.mxu0 %v3114
    %3684 = vmatprep.subr.mxu0 0.0
    %3685 = vmatpush1.msra.mxu0 %v3115
    %3686 = vmatprep.subr.mxu0 0.0
    %3687 = vmatpush1.msra.mxu0 %v3116
    %3688 = vmatprep.subr.mxu0 0.0
    %3689 = vmatpush1.msra.mxu0 %v3117
    %3690 = vmatprep.subr.mxu0 0.0
    %3691 = vmatpush1.msra.mxu0 0.0
    %3692 = vmatprep.subr.mxu0 0.0
    %3693 = vmatpush1.msra.mxu0 0.0
    %3694 = vmatprep.subr.mxu0 0.0
    %3695 = vmatpush1.msra.mxu0 0.0
    %3696 = vmatprep.subr.mxu0 0.0
    %3697 = vmatpush1.msra.mxu0 0.0
    %3698 = vmatprep.subr.mxu0 0.0
    %3699 = vmatpush1.msra.mxu0 0.0
    %3700 = vmatprep.subr.mxu0 0.0
    %3701 = vmatpush1.msra.mxu0 0.0
    %3702 = vmatprep.subr.mxu0 0.0
    %3703 = vmatpush1.msra.mxu0 0.0
    %3704 = vmatprep.subr.mxu0 0.0
    %3705 = vmatpush1.msra.mxu0 0.0
    %3706 = vmatprep.subr.mxu0 0.0
    %3707 = vmatpush1.msra.mxu0 0.0
    %3708 = vmatprep.subr.mxu0 0.0
    %3709 = vmatpush1.msra.mxu0 0.0
    %3710 = vmatprep.subr.mxu0 0.0
    %3711 = vmatpush1.msra.mxu0 0.0
    %3712 = vmatprep.subr.mxu0 0.0
    %3713 = vmatpush1.msra.mxu0 0.0
    %3714 = vmatprep.subr.mxu0 0.0
    %3715 = vmatpush1.msra.mxu0 0.0
    %3716 = vmatprep.subr.mxu0 0.0
    %3717 = vmatpush1.msra.mxu0 0.0
    %3718 = vmatprep.subr.mxu0 0.0
    %3719 = vmatpush1.msra.mxu0 0.0
    %3720 = vmatprep.subr.mxu0 0.0
    %3721 = vmatpush1.msra.mxu0 0.0
    %3722 = vmatprep.subr.mxu0 0.0
    %3723 = vmatpush1.msra.mxu0 0.0
    %3724 = vmatprep.subr.mxu0 0.0
    %3725 = vmatpush1.msra.mxu0 0.0
    %3726 = vmatprep.subr.mxu0 0.0
    %3727 = vmatpush1.msra.mxu0 0.0
    %3728 = vmatprep.subr.mxu0 0.0
    %3729 = vmatpush1.msra.mxu0 0.0
    %3730 = vmatprep.subr.mxu0 0.0
    %3731 = vmatpush1.msra.mxu0 0.0
    %3732 = vmatprep.subr.mxu0 0.0
    %3733 = vmatpush1.msra.mxu0 0.0
    %3734 = vmatprep.subr.mxu0 0.0
    %3735 = vmatpush1.msra.mxu0 0.0
    %3736 = vmatprep.subr.mxu0 0.0
    %3737 = vmatpush1.msra.mxu0 0.0
    %3738 = vmatprep.subr.mxu0 0.0
    %3739 = vmatpush1.msra.mxu0 0.0
    %3740 = vmatprep.subr.mxu0 0.0
    %3741 = vmatpush1.msra.mxu0 0.0
    %3742 = vmatprep.subr.mxu0 0.0
    %3743 = vmatpush1.msra.mxu0 0.0
    %3744 = vmatprep.subr.mxu0 0.0
    %3745 = vmatpush1.msra.mxu0 0.0
    %3746 = vmatprep.mubr.f32.mxu0 0.0
    %3747 = vmatmul.mubr.f32.gmra.mrb[0].mxu0 %v3680
    %v3748 = vpop.f32.mrb[0].mxu0
    %v3749 = vadd.f32 0.0, %v3748
    %v3750 = vpop.f32.mrb[0].mxu0
    %3751 = vdwg.mxu0
    %v3753 = vrot.slane %v3749, 2
    %v3754 = vrot.slane %v3749, 3
    %v3757 = vadd.f32 %v3105, %v3753
    %v3758 = vadd.f32 %v3110, %v3754
    %v3759 = vtanh.pop %v3757
    %v3760 = vtanh.pop %v3758
    %vm3761 = vcmp.gt.f32.partialorder %v3759, 0.0
    %vm3762 = vcmp.gt.f32.partialorder %v3760, 0.0
    %v3763 = vsel %vm3761, 1, 0
    %v3764 = vsel %vm3762, 1, 0
    %v3765 = vcvt.s32.f32 %v3763
    %v3766 = vcvt.s32.f32 %v3764
    %v3767 = vmul.f32 %v3759, %v3765
    %v3768 = vmul.f32 %v3760, %v3766
    %v3771 = vrot.slane %v3767, 6
    %v3772 = vrot.slane %v3768, 5
    %v3773 = vsel %vm3210, %v3772, %v3771
    %v3774 = vsel %vm283, %v3773, 0
    %3776 = vmatprep.subr.mxu0 0.0
    %3777 = vmatpush1.msra.mxu0 %v3114
    %3778 = vmatprep.subr.mxu0 0.0
    %3779 = vmatpush1.msra.mxu0 %v3115
    %3780 = vmatprep.subr.mxu0 0.0
    %3781 = vmatpush1.msra.mxu0 %v3116
    %3782 = vmatprep.subr.mxu0 0.0
    %3783 = vmatpush1.msra.mxu0 %v3117
    %3784 = vmatprep.subr.mxu0 0.0
    %3785 = vmatpush1.msra.mxu0 0.0
    %3786 = vmatprep.subr.mxu0 0.0
    %3787 = vmatpush1.msra.mxu0 0.0
    %3788 = vmatprep.subr.mxu0 0.0
    %3789 = vmatpush1.msra.mxu0 0.0
    %3790 = vmatprep.subr.mxu0 0.0
    %3791 = vmatpush1.msra.mxu0 0.0
    %3792 = vmatprep.subr.mxu0 0.0
    %3793 = vmatpush1.msra.mxu0 0.0
    %3794 = vmatprep.subr.mxu0 0.0
    %3795 = vmatpush1.msra.mxu0 0.0
    %3796 = vmatprep.subr.mxu0 0.0
    %3797 = vmatpush1.msra.mxu0 0.0
    %3798 = vmatprep.subr.mxu0 0.0
    %3799 = vmatpush1.msra.mxu0 0.0
    %3800 = vmatprep.subr.mxu0 0.0
    %3801 = vmatpush1.msra.mxu0 0.0
    %3802 = vmatprep.subr.mxu0 0.0
    %3803 = vmatpush1.msra.mxu0 0.0
    %3804 = vmatprep.subr.mxu0 0.0
    %3805 = vmatpush1.msra.mxu0 0.0
    %3806 = vmatprep.subr.mxu0 0.0
    %3807 = vmatpush1.msra.mxu0 0.0
    %3808 = vmatprep.subr.mxu0 0.0
    %3809 = vmatpush1.msra.mxu0 0.0
    %3810 = vmatprep.subr.mxu0 0.0
    %3811 = vmatpush1.msra.mxu0 0.0
    %3812 = vmatprep.subr.mxu0 0.0
    %3813 = vmatpush1.msra.mxu0 0.0
    %3814 = vmatprep.subr.mxu0 0.0
    %3815 = vmatpush1.msra.mxu0 0.0
    %3816 = vmatprep.subr.mxu0 0.0
    %3817 = vmatpush1.msra.mxu0 0.0
    %3818 = vmatprep.subr.mxu0 0.0
    %3819 = vmatpush1.msra.mxu0 0.0
    %3820 = vmatprep.subr.mxu0 0.0
    %3821 = vmatpush1.msra.mxu0 0.0
    %3822 = vmatprep.subr.mxu0 0.0
    %3823 = vmatpush1.msra.mxu0 0.0
    %3824 = vmatprep.subr.mxu0 0.0
    %3825 = vmatpush1.msra.mxu0 0.0
    %3826 = vmatprep.subr.mxu0 0.0
    %3827 = vmatpush1.msra.mxu0 0.0
    %3828 = vmatprep.subr.mxu0 0.0
    %3829 = vmatpush1.msra.mxu0 0.0
    %3830 = vmatprep.subr.mxu0 0.0
    %3831 = vmatpush1.msra.mxu0 0.0
    %3832 = vmatprep.subr.mxu0 0.0
    %3833 = vmatpush1.msra.mxu0 0.0
    %3834 = vmatprep.subr.mxu0 0.0
    %3835 = vmatpush1.msra.mxu0 0.0
    %3836 = vmatprep.subr.mxu0 0.0
    %3837 = vmatpush1.msra.mxu0 0.0
    %3838 = vmatprep.subr.mxu0 0.0
    %3839 = vmatpush1.msra.mxu0 0.0
    %3840 = vmatprep.mubr.f32.mxu0 0.0
    %3841 = vmatmul.mubr.f32.gmra.mrb[0].mxu0 %v3774
    %v3842 = vpop.f32.mrb[0].mxu0
    %v3843 = vadd.f32 0.0, %v3842
    %v3844 = vpop.f32.mrb[0].mxu0
    %3845 = vdwg.mxu0
    %v3847 = vrot.slane %v3843, 1
    %v3848 = vrot.slane %v3843, 2
    %v3851 = vadd.f32 %v3105, %v3847
    %v3852 = vadd.f32 %v3110, %v3848
    %v3853 = vtanh.pop %v3851
    %v3854 = vtanh.pop %v3852
    %vm3855 = vcmp.gt.f32.partialorder %v3853, 0.0
    %vm3856 = vcmp.gt.f32.partialorder %v3854, 0.0
    %v3857 = vsel %vm3855, 1, 0
    %v3858 = vsel %vm3856, 1, 0
    %v3859 = vcvt.s32.f32 %v3857
    %v3860 = vcvt.s32.f32 %v3858
    %v3861 = vmul.f32 %v3853, %v3859
    %v3862 = vmul.f32 %v3854, %v3860
    %v3863 = vld [vmem:[%s67] sm:$0xff]
    %v3864 = vld [vmem:[%s67 + $0x8] sm:$0xff]
    %v3865 = vld [vmem:[%s67 + $0x10] sm:$0xff]
    %v3866 = vld [vmem:[%s67 + $0x18] sm:$0xff]
    %v3867 = vld [vmem:[%s69] sm:$0x1]
    %v3869 = vlaneseq
    %v3870 = vshrl.u32 %v3869, 7
    %v3871 = vsub.s32 0, %v3870
    %v3872 = vrot.slane %v3867, %v3871
    %v3876 = vrot.slane %v3861, 7
    %v3877 = vrot.slane %v3862, 6
    %v3878 = vsel %vm3210, %v3877, %v3876
    %v3879 = vsel %vm283, %v3878, 0
    %3881 = vmatprep.subr.mxu0 0.0
    %3882 = vmatpush1.msra.mxu0 %v3863
    %3883 = vmatprep.subr.mxu0 0.0
    %3884 = vmatpush1.msra.mxu0 %v3864
    %3885 = vmatprep.subr.mxu0 0.0
    %3886 = vmatpush1.msra.mxu0 %v3865
    %3887 = vmatprep.subr.mxu0 0.0
    %3888 = vmatpush1.msra.mxu0 %v3866
    %3889 = vmatprep.subr.mxu0 0.0
    %3890 = vmatpush1.msra.mxu0 0.0
    %3891 = vmatprep.subr.mxu0 0.0
    %3892 = vmatpush1.msra.mxu0 0.0
    %3893 = vmatprep.subr.mxu0 0.0
    %3894 = vmatpush1.msra.mxu0 0.0
    %3895 = vmatprep.subr.mxu0 0.0
    %3896 = vmatpush1.msra.mxu0 0.0
    %3897 = vmatprep.subr.mxu0 0.0
    %3898 = vmatpush1.msra.mxu0 0.0
    %3899 = vmatprep.subr.mxu0 0.0
    %3900 = vmatpush1.msra.mxu0 0.0
    %3901 = vmatprep.subr.mxu0 0.0
    %3902 = vmatpush1.msra.mxu0 0.0
    %3903 = vmatprep.subr.mxu0 0.0
    %3904 = vmatpush1.msra.mxu0 0.0
    %3905 = vmatprep.subr.mxu0 0.0
    %3906 = vmatpush1.msra.mxu0 0.0
    %3907 = vmatprep.subr.mxu0 0.0
    %3908 = vmatpush1.msra.mxu0 0.0
    %3909 = vmatprep.subr.mxu0 0.0
    %3910 = vmatpush1.msra.mxu0 0.0
    %3911 = vmatprep.subr.mxu0 0.0
    %3912 = vmatpush1.msra.mxu0 0.0
    %3913 = vmatprep.subr.mxu0 0.0
    %3914 = vmatpush1.msra.mxu0 0.0
    %3915 = vmatprep.subr.mxu0 0.0
    %3916 = vmatpush1.msra.mxu0 0.0
    %3917 = vmatprep.subr.mxu0 0.0
    %3918 = vmatpush1.msra.mxu0 0.0
    %3919 = vmatprep.subr.mxu0 0.0
    %3920 = vmatpush1.msra.mxu0 0.0
    %3921 = vmatprep.subr.mxu0 0.0
    %3922 = vmatpush1.msra.mxu0 0.0
    %3923 = vmatprep.subr.mxu0 0.0
    %3924 = vmatpush1.msra.mxu0 0.0
    %3925 = vmatprep.subr.mxu0 0.0
    %3926 = vmatpush1.msra.mxu0 0.0
    %3927 = vmatprep.subr.mxu0 0.0
    %3928 = vmatpush1.msra.mxu0 0.0
    %3929 = vmatprep.subr.mxu0 0.0
    %3930 = vmatpush1.msra.mxu0 0.0
    %3931 = vmatprep.subr.mxu0 0.0
    %3932 = vmatpush1.msra.mxu0 0.0
    %3933 = vmatprep.subr.mxu0 0.0
    %3934 = vmatpush1.msra.mxu0 0.0
    %3935 = vmatprep.subr.mxu0 0.0
    %3936 = vmatpush1.msra.mxu0 0.0
    %3937 = vmatprep.subr.mxu0 0.0
    %3938 = vmatpush1.msra.mxu0 0.0
    %3939 = vmatprep.subr.mxu0 0.0
    %3940 = vmatpush1.msra.mxu0 0.0
    %3941 = vmatprep.subr.mxu0 0.0
    %3942 = vmatpush1.msra.mxu0 0.0
    %3943 = vmatprep.subr.mxu0 0.0
    %3944 = vmatpush1.msra.mxu0 0.0
    %3945 = vmatprep.mubr.f32.mxu0 0.0
    %3946 = vmatmul.mubr.f32.gmra.mrb[0].mxu0 %v3879
    %v3947 = vpop.f32.mrb[0].mxu0
    %v3948 = vadd.f32 %v3872, %v3947
    %v3949 = vpop.f32.mrb[0].mxu0
    %3950 = vdwg.mxu0
    %v3951 = vld [vmem:[%s71] sm:$0xff]
    %v3952 = vld [vmem:[%s71 + $0x8] sm:$0xff]
    %v3953 = vld [vmem:[%s71 + $0x10] sm:$0xff]
    %v3954 = vld [vmem:[%s71 + $0x18] sm:$0xff]
    %v3955 = vld [vmem:[#allocation2] sm:$0x1]
    %v3957 = vlaneseq
    %v3958 = vshrl.u32 %v3957, 7
    %v3959 = vsub.s32 0, %v3958
    %v3960 = vrot.slane %v3955, %v3959
    %v3963 = vsel %vm283, %v3948, 0
    %3965 = vmatprep.subr.mxu0 0.0
    %3966 = vmatpush1.msra.mxu0 %v3951
    %3967 = vmatprep.subr.mxu0 0.0
    %3968 = vmatpush1.msra.mxu0 %v3952
    %3969 = vmatprep.subr.mxu0 0.0
    %3970 = vmatpush1.msra.mxu0 %v3953
    %3971 = vmatprep.subr.mxu0 0.0
    %3972 = vmatpush1.msra.mxu0 %v3954
    %3973 = vmatprep.subr.mxu0 0.0
    %3974 = vmatpush1.msra.mxu0 0.0
    %3975 = vmatprep.subr.mxu0 0.0
    %3976 = vmatpush1.msra.mxu0 0.0
    %3977 = vmatprep.subr.mxu0 0.0
    %3978 = vmatpush1.msra.mxu0 0.0
    %3979 = vmatprep.subr.mxu0 0.0
    %3980 = vmatpush1.msra.mxu0 0.0
    %3981 = vmatprep.subr.mxu0 0.0
    %3982 = vmatpush1.msra.mxu0 0.0
    %3983 = vmatprep.subr.mxu0 0.0
    %3984 = vmatpush1.msra.mxu0 0.0
    %3985 = vmatprep.subr.mxu0 0.0
    %3986 = vmatpush1.msra.mxu0 0.0
    %3987 = vmatprep.subr.mxu0 0.0
    %3988 = vmatpush1.msra.mxu0 0.0
    %3989 = vmatprep.subr.mxu0 0.0
    %3990 = vmatpush1.msra.mxu0 0.0
    %3991 = vmatprep.subr.mxu0 0.0
    %3992 = vmatpush1.msra.mxu0 0.0
    %3993 = vmatprep.subr.mxu0 0.0
    %3994 = vmatpush1.msra.mxu0 0.0
    %3995 = vmatprep.subr.mxu0 0.0
    %3996 = vmatpush1.msra.mxu0 0.0
    %3997 = vmatprep.subr.mxu0 0.0
    %3998 = vmatpush1.msra.mxu0 0.0
    %3999 = vmatprep.subr.mxu0 0.0
    %4000 = vmatpush1.msra.mxu0 0.0
    %4001 = vmatprep.subr.mxu0 0.0
    %4002 = vmatpush1.msra.mxu0 0.0
    %4003 = vmatprep.subr.mxu0 0.0
    %4004 = vmatpush1.msra.mxu0 0.0
    %4005 = vmatprep.subr.mxu0 0.0
    %4006 = vmatpush1.msra.mxu0 0.0
    %4007 = vmatprep.subr.mxu0 0.0
    %4008 = vmatpush1.msra.mxu0 0.0
    %4009 = vmatprep.subr.mxu0 0.0
    %4010 = vmatpush1.msra.mxu0 0.0
    %4011 = vmatprep.subr.mxu0 0.0
    %4012 = vmatpush1.msra.mxu0 0.0
    %4013 = vmatprep.subr.mxu0 0.0
    %4014 = vmatpush1.msra.mxu0 0.0
    %4015 = vmatprep.subr.mxu0 0.0
    %4016 = vmatpush1.msra.mxu0 0.0
    %4017 = vmatprep.subr.mxu0 0.0
    %4018 = vmatpush1.msra.mxu0 0.0
    %4019 = vmatprep.subr.mxu0 0.0
    %4020 = vmatpush1.msra.mxu0 0.0
    %4021 = vmatprep.subr.mxu0 0.0
    %4022 = vmatpush1.msra.mxu0 0.0
    %4023 = vmatprep.subr.mxu0 0.0
    %4024 = vmatpush1.msra.mxu0 0.0
    %4025 = vmatprep.subr.mxu0 0.0
    %4026 = vmatpush1.msra.mxu0 0.0
    %4027 = vmatprep.subr.mxu0 0.0
    %4028 = vmatpush1.msra.mxu0 0.0
    %4029 = vmatprep.mubr.f32.mxu0 0.0
    %4030 = vmatmul.mubr.f32.gmra.mrb[0].mxu0 %v3963
    %v4031 = vpop.f32.mrb[0].mxu0
    %v4032 = vadd.f32 %v3960, %v4031
    %v4033 = vpop.f32.mrb[0].mxu0
    %4034 = vdwg.mxu0
    %vm4035 = vcmask 1024
    %4036 = vst.msk [vmem:[%s75] sm:$0x3] %vm4035, %v4032
    %v4037 = vsub.f32 0.0, %v4032
    %v4038 = vmul.f32 %v4037, 1.442695
    %v4039 = vpow.pop %v4038
    %v4040 = vadd.f32 %v4039, 1.0
    %v4041 = vrcp.pop %v4040
    %v4042 = vmul.f32 1.0, %v4041
    %4043 = vst.msk [vmem:[%s77] sm:$0x3] %vm4035, %v4042
    // Predicated region
    $region158: #{singlemodal_forward.1} parent=1 // pred_check
      _
    $region159: #{singlemodal_forward.1} parent=1 // pred_check_branch
      %4045 = sbr.rel (0) target = $region161
    $region160: #{singlemodal_forward.1} parent=1 // pred_region
      _
    $region161: #{singlemodal_forward.1} parent=1 // pred_fallthru
      _
    // Predicated region
    $region162: #{singlemodal_forward.1} parent=1 // pred_check
      _
    $region163: #{singlemodal_forward.1} parent=1 // pred_check_branch
      %4047 = sbr.rel (0) target = $region165
    $region164: #{singlemodal_forward.1} parent=1 // pred_region
      _
    $region165: #{singlemodal_forward.1} parent=1 // pred_fallthru
      _
    // Predicated region
    $region166: #{singlemodal_forward.1} parent=1 // pred_check
      _
    $region167: #{singlemodal_forward.1} parent=1 // pred_check_branch
      %4049 = sbr.rel (0) target = $region169
    $region168: #{singlemodal_forward.1} parent=1 // pred_region
      _
    $region169: #{singlemodal_forward.1} parent=1 // pred_fallthru
      _
    // Predicated region
    $region170: #{singlemodal_forward.1} parent=1 // pred_check
      _
    $region171: #{singlemodal_forward.1} parent=1 // pred_check_branch
      %4051 = sbr.rel (0) target = $region173
    $region172: #{singlemodal_forward.1} parent=1 // pred_region
      _
    $region173: #{singlemodal_forward.1} parent=1 // pred_fallthru
      _
    %4052 = vsyncpa [#allocation4], 1
    %4053 = vsyncpa [#allocation6], 1

</llo_original>
